<compile_context>
chip_gen: v5e
topology: v5e:2x2
jax: 0.10.0
libtpu: 0.0.40
codegen_flags: <defaults>
</compile_context>

<pallas_src>
import numpy as np
import jax
import jax.numpy as jnp
from jax.experimental import pallas as pl
from jax.experimental.pallas import tpu as pltpu

# ----------------------------- configuration --------------------------------
Q_SIZE      = 12
QD_SIZE     = 66
IN_DIM      = 4
GRU_DIM     = 32
HID_DIM     = 32
NLAYERS     = 1
OUT_DIM     = 32
PD_TEMP     = 1.0          # == 1.0 -> division folded away in-kernel
C_TEMP      = 1.0          # == 1.0 -> division folded away in-kernel
CONTACT_DIM = 73

D_STATE = IN_DIM + QD_SIZE * QD_SIZE   # 4360
D_KAL   = Q_SIZE * 4                   # 48
D_BIG   = D_STATE + D_KAL              # 4408 (fused [state | kalman_in] K dim)
J_DIM   = 2 * (QD_SIZE - 3) * 3        # 378


def _round_up(x, m):
    return -(-x // m) * m


# ----------------------------- slab layouts ----------------------------------
def _pack_layout(entries, align=128):
    offs, off = {}, 0
    for name, w in entries:
        off = _round_up(off, align)
        offs[name] = off
        off += w
    return offs, _round_up(off, align)


# (32, N) bf16 weight slab: every weight whose LHS is a 32-wide activation.
W32_ENTRIES = (
    ("w2", HID_DIM), ("w3", HID_DIM), ("whh", 3 * GRU_DIM), ("wg2k", OUT_DIM),
    ("heads", 7 * OUT_DIM),                       # fused hid_2out_* heads [k m p d c f j]
    ("wo2m", QD_SIZE * QD_SIZE),
    ("wo2k_a", Q_SIZE * Q_SIZE), ("wo2k_b", Q_SIZE * Q_SIZE),
    ("wo2j", J_DIM),
)
W32_OFF, W32_TOTAL = _pack_layout(W32_ENTRIES)
W32_W = dict(W32_ENTRIES)

# (64, N) bf16 weight slab: block-diagonal fused heads with a 64-wide LHS.
W64_ENTRIES = (
    ("wpd", 2 * QD_SIZE),      # [wo2p | wo2d] block-diag over [out_p | out_d]
    ("wcf1", 2 * OUT_DIM),     # [wo2c1 | wo2f1] (activation part) over [out_c | out_f]
    ("wcf2", 2 * OUT_DIM),     # [wo2c2 | wo2f2] block-diag over [c1 | f1]
    ("wcf3", 8),               # [wo2c3 | wo2f3] block-diag over [c2 | f2]
)
W64_OFF, W64_TOTAL = _pack_layout(W64_ENTRIES)
W64_W = dict(W64_ENTRIES)

# (1, N) f32 vector slab: all biases / LayerNorm params / limit vectors.
VEC_ENTRIES = (
    ("bias_big", HID_DIM + 3 * GRU_DIM),          # [layer1.b | gru.b_ih]
    ("b2", HID_DIM), ("b3", HID_DIM), ("lnh_g", HID_DIM), ("lnh_b", HID_DIM),
    ("bhh", 3 * GRU_DIM), ("lng_g", GRU_DIM), ("lng_b", GRU_DIM), ("bg2k", OUT_DIM),
    ("bheads", 7 * OUT_DIM), ("bo2k", Q_SIZE * Q_SIZE), ("bo2m", QD_SIZE * QD_SIZE),
    ("limpd", 2 * QD_SIZE), ("bpd", 2 * QD_SIZE),
    ("bcf1", 2 * OUT_DIM), ("bcf2", 2 * OUT_DIM),
    ("lno_g2", 2 * OUT_DIM), ("lno_b2", 2 * OUT_DIM),
    ("bcf3", 8), ("bo2j", J_DIM),
)
VEC_OFF, VEC_TOTAL = _pack_layout(VEC_ENTRIES)
VEC_W = dict(VEC_ENTRIES)

# Lane-packed small output, 128-aligned offsets (everything except m_base).
SMALL_ENTRIES = (
    ("kal", Q_SIZE * Q_SIZE), ("h", GRU_DIM), ("pd", 2 * QD_SIZE),
    ("cf", 8), ("j", J_DIM),
)
SMALL_OFF, SMALL_TOTAL = _pack_layout(SMALL_ENTRIES, align=128)
SMALL_W = dict(SMALL_ENTRIES)


# ------------------------------- kernel -------------------------------------
def osdnet_kernel(x_ref, h0_ref, cont_ref,
                  wx_ref, w32_ref, w64_ref, wck_ref, vec_ref,
                  small_o, m_o):
    f32 = jnp.float32

    def leaky(v):                       # nn.LeakyReLU(negative_slope=0.01)
        return jnp.where(v > 0, v, 0.01 * v)

    def vec(name):                      # (1, n) f32 slice of the packed vector slab
        o = VEC_OFF[name]
        return vec_ref[:, o:o + VEC_W[name]]

    def w32(name):                      # (32, n) bf16 slice
        o = W32_OFF[name]
        return w32_ref[:, o:o + W32_W[name]]

    def w64(name):                      # (64, n) bf16 slice
        o = W64_OFF[name]
        return w64_ref[:, o:o + W64_W[name]]

    def bdot(a, w):                     # bf16 MXU matmul, f32 accumulation
        return jnp.dot(a.astype(jnp.bfloat16), w, preferred_element_type=f32)

    # hoisted LayerNorm params (used repeatedly; JAX does not CSE broadcasts)
    lnh_g, lnh_b = vec("lnh_g"), vec("lnh_b")
    lno_g2, lno_b2 = vec("lno_g2"), vec("lno_b2")

    def layernorm(v, g, b):             # nn.LayerNorm(eps=1e-5), last dim
        mu = jnp.mean(v, axis=-1, keepdims=True)
        var = jnp.mean(jnp.square(v - mu), axis=-1, keepdims=True)
        return (v - mu) * jax.lax.rsqrt(var + 1e-5) * g + b

    # zero-fill so the 128-alignment padding lanes of the output are defined
    small_o[...] = jnp.zeros(small_o.shape, small_o.dtype)

    x, h0, cont = x_ref[...], h0_ref[...], cont_ref[...]

    # ---- fused K=4408 matmul: [state | kalman_in] @ [layer1.W | gru.W_ih] ----
    big = bdot(x, wx_ref[...]) + vec("bias_big")          # (BT, 128)
    h1_pre = big[:, 0:HID_DIM]                            # layer1(state) pre-LN
    gi = big[:, HID_DIM:HID_DIM + 3 * GRU_DIM]            # GRU input gates [r|z|n]

    # ---- trunk MLP (norm_hid shared across the three layers, as in torch) ----
    h1 = leaky(layernorm(h1_pre, lnh_g, lnh_b))
    h2 = leaky(layernorm(bdot(h1, w32("w2")) + vec("b2"), lnh_g, lnh_b))
    h3 = leaky(layernorm(bdot(h2, w32("w3")) + vec("b3"), lnh_g, lnh_b))

    # ---- OSD branch: single-step, single-layer GRU (batch_first, T == 1) ----
    gh = bdot(h0, w32("whh")) + vec("bhh")
    G = GRU_DIM
    r = jax.nn.sigmoid(gi[:, 0:G] + gh[:, 0:G])
    z = jax.nn.sigmoid(gi[:, G:2 * G] + gh[:, G:2 * G])
    n = jnp.tanh(gi[:, 2 * G:3 * G] + r * gh[:, 2 * G:3 * G])
    h_new = (1.0 - z) * n + z * h0

    gru_out = leaky(layernorm(h_new, vec("lng_g"), vec("lng_b")))
    gru_2k = leaky(bdot(gru_out, w32("wg2k")) + vec("bg2k"))

    # ---- all seven hidden_3 -> out_* projections fused into one (32,224) ----
    heads = leaky(bdot(h3, w32("heads")) + vec("bheads"))
    out_k  = heads[:, 0 * OUT_DIM:1 * OUT_DIM]
    out_m  = heads[:, 1 * OUT_DIM:2 * OUT_DIM]
    out_pd = heads[:, 2 * OUT_DIM:4 * OUT_DIM]            # [out_p | out_d]
    out_cf = heads[:, 4 * OUT_DIM:6 * OUT_DIM]            # [out_c | out_f]
    out_j  = heads[:, 6 * OUT_DIM:7 * OUT_DIM]

    # ---- kalman head: two matmuls (no concat scratch); dropout = eval identity ----
    kal = (bdot(gru_2k, w32("wo2k_a")) + bdot(out_k, w32("wo2k_b")) + vec("bo2k"))

    # ---- mass-matrix bias head (symmetrization in JAX glue) ----
    m_o[...] = bdot(out_m, w32("wo2m")) + vec("bo2m")

    # ---- PD-gain heads: one block-diag (64,132) matmul; pd_temp == 1.0 ----
    pd_vals = vec("limpd") * jax.nn.sigmoid(bdot(out_pd, w64("wpd")) + vec("bpd"))

    # ---- contact + force chain, block-diag fused (no concats, lane masks) ----
    lane64 = jax.lax.broadcasted_iota(jnp.int32, (1, 2 * OUT_DIM), 1)
    first_half = lane64 < OUT_DIM                         # contact half vs force half

    cf1 = bdot(out_cf, w64("wcf1")) + bdot(cont, wck_ref[...]) + vec("bcf1")
    cf1_act = jnp.where(first_half, jnp.tanh(cf1), leaky(cf1))     # [c1 | f1]

    cf2_pre = bdot(cf1_act, w64("wcf2")) + vec("bcf2")             # (BT, 64)
    mu_c = jnp.mean(cf2_pre[:, 0:OUT_DIM], axis=-1, keepdims=True)
    mu_f = jnp.mean(cf2_pre[:, OUT_DIM:], axis=-1, keepdims=True)
    mu = jnp.where(first_half, mu_c, mu_f)
    d_cf = cf2_pre - mu
    var_c = jnp.mean(jnp.square(d_cf[:, 0:OUT_DIM]), axis=-1, keepdims=True)
    var_f = jnp.mean(jnp.square(d_cf[:, OUT_DIM:]), axis=-1, keepdims=True)
    var = jnp.where(first_half, var_c, var_f)
    cf2_ln = d_cf * jax.lax.rsqrt(var + 1e-5) * lno_g2 + lno_b2    # per-half norm_out
    cf2 = jnp.where(first_half, jnp.tanh(cf2_ln), leaky(cf2_ln))   # [c2 | f2]

    cf3 = bdot(cf2, w64("wcf3")) + vec("bcf3")                     # (BT, 8)
    lane8 = jax.lax.broadcasted_iota(jnp.int32, (1, 8), 1)
    cf_out = jnp.where(lane8 < 2, jax.nn.sigmoid(cf3), cf3)        # c_temp == 1.0

    j_out = bdot(out_j, w32("wo2j")) + vec("bo2j")

    # ---- all small outputs at 128-aligned lane offsets ----
    def put(name, val):
        o = SMALL_OFF[name]
        small_o[:, o:o + SMALL_W[name]] = val

    put("kal", kal)
    put("h", h_new)
    put("pd", pd_vals)
    put("cf", cf_out)
    put("j", j_out)


# ------------------------------- wrapper -------------------------------------
def osdnet_forward(params, state_input, kalman_in, contact_input, h):
    B = state_input.shape[0]
    # Fuse kalman_in into the big matmul LHS; bf16 (the MXU path casts anyway).
    x_cat = jnp.concatenate(
        [state_input.reshape(B, D_STATE), kalman_in.reshape(B, D_KAL)],
        axis=-1).astype(jnp.bfloat16)
    cont2d = contact_input.reshape(B, CONTACT_DIM).astype(jnp.bfloat16)
    h2d = h.reshape(B, GRU_DIM).astype(jnp.float32)          # nlayers == 1

    wx, w32s, w64s, wck, vecs = params

    # Batch grid: weights are fetched once (constant index_map) and stay
    # VMEM-resident across grid steps; "parallel" lets v7x split across TCs.
    BT = 128 if B >= 128 else _round_up(B, 8)
    Bp = _round_up(B, BT)
    if Bp != B:
        pad = Bp - B
        x_cat = jnp.pad(x_cat, ((0, pad), (0, 0)))
        cont2d = jnp.pad(cont2d, ((0, pad), (0, 0)))
        h2d = jnp.pad(h2d, ((0, pad), (0, 0)))
    grid = (Bp // BT,)

    def batch_spec(d):
        return pl.BlockSpec((BT, d), lambda i: (i, 0))

    def resident_spec(arr):
        return pl.BlockSpec(arr.shape, lambda i: (0, 0))

    small, m_f = pl.pallas_call(
        osdnet_kernel,
        out_shape=(jax.ShapeDtypeStruct((Bp, SMALL_TOTAL), jnp.float32),
                   jax.ShapeDtypeStruct((Bp, QD_SIZE * QD_SIZE), jnp.float32)),
        grid=grid,
        in_specs=[batch_spec(D_BIG), batch_spec(GRU_DIM), batch_spec(CONTACT_DIM),
                  resident_spec(wx), resident_spec(w32s), resident_spec(w64s),
                  resident_spec(wck), resident_spec(vecs)],
        out_specs=(pl.BlockSpec((BT, SMALL_TOTAL), lambda i: (i, 0)),
                   pl.BlockSpec((BT, QD_SIZE * QD_SIZE), lambda i: (i, 0))),
        compiler_params=pltpu.CompilerParams(
            dimension_semantics=("parallel",),
            vmem_limit_bytes=32 * 1024 * 1024),
    )(x_cat, h2d, cont2d, wx, w32s, w64s, wck, vecs)

    def so(name):
        o = SMALL_OFF[name]
        return small[:B, o:o + SMALL_W[name]]

    # ---- JAX glue (jit-fused epilogue): reshapes / diag / symmetrize / eye concat ----
    kalman = so("kal").reshape(B, Q_SIZE, Q_SIZE)
    h_out  = so("h").reshape(NLAYERS, B, GRU_DIM)
    m      = m_f[:B].reshape(B, QD_SIZE, QD_SIZE)
    M_bias = m + jnp.transpose(m, (0, 2, 1))
    pd     = so("pd")
    p_gains = jax.vmap(jnp.diag)(pd[:, :QD_SIZE])
    d_gains = jax.vmap(jnp.diag)(pd[:, QD_SIZE:])
    cf      = so("cf")
    contacts = cf[:, 0:2]
    fext     = cf[:, 2:8].reshape(B, 2, 3)
    jac_int = so("j").reshape(B, 2, QD_SIZE - 3, 3)
    jac_ext = jnp.broadcast_to(jnp.eye(3, dtype=jnp.float32), (B, 2, 3, 3))
    jacs    = jnp.concatenate((jac_ext, jac_int), axis=2)
    return kalman, h_out, [p_gains, d_gains], M_bias, contacts, fext, jacs


# --------------------------- deterministic params ----------------------------
def make_params(seed=0):
    key = jax.random.PRNGKey(seed)
    ki = iter(jax.random.split(key, 100))

    def u(shape, bound):
        return np.array(jax.random.uniform(next(ki), shape, jnp.float32, -bound, bound))

    def lin(fi, fo):  # nn.Linear default-style init, weight stored (in, out)
        b = 1.0 / float(np.sqrt(fi))
        return u((fi, fo), b), u((1, fo), b)

    def rnd(shape, scale):
        return np.array(scale * jax.random.normal(next(ki), shape, jnp.float32))

    w1, b1 = lin(D_STATE, HID_DIM)
    w2, b2 = lin(HID_DIM, HID_DIM)
    w3, b3 = lin(HID_DIM, HID_DIM)
    lnh_g = np.ones((1, HID_DIM), np.float32)
    lnh_b = np.zeros((1, HID_DIM), np.float32)

    gb = 1.0 / float(np.sqrt(GRU_DIM))
    wih = u((D_BIG, 3 * GRU_DIM), gb)                 # gate order [r | z | n]
    whh = u((GRU_DIM, 3 * GRU_DIM), gb)
    bih = u((1, 3 * GRU_DIM), gb)
    bhh = u((1, 3 * GRU_DIM), gb)
    lng_g = np.ones((1, GRU_DIM), np.float32)
    lng_b = np.zeros((1, GRU_DIM), np.float32)

    wg2k, bg2k = lin(GRU_DIM, OUT_DIM)
    wh2k, bh2k = lin(HID_DIM, OUT_DIM)
    wo2k = rnd((2 * OUT_DIM, Q_SIZE * Q_SIZE), 1e-3)          # init_weights(0.001)
    bo2k = rnd((1, Q_SIZE * Q_SIZE), 1e-3) + 0.5 * np.eye(Q_SIZE, dtype=np.float32).reshape(1, -1)

    wh2m, bh2m = lin(HID_DIM, OUT_DIM)
    wo2m = rnd((OUT_DIM, QD_SIZE * QD_SIZE), 1e-5)            # init_weights(1e-5)
    bo2m = rnd((1, QD_SIZE * QD_SIZE), 1e-5)

    limp = np.concatenate([np.full((3,), 25.0, np.float32),
                           np.full((3,), 12.0, np.float32),
                           np.full((QD_SIZE - 6,), 1.6, np.float32)]).reshape(1, QD_SIZE)
    wh2p, bh2p = lin(HID_DIM, OUT_DIM)
    wo2p, bo2p = lin(OUT_DIM, QD_SIZE)

    limd = np.concatenate([np.full((3,), 1.5, np.float32),
                           np.full((3,), 0.1, np.float32),
                           np.full((QD_SIZE - 6,), 0.05, np.float32)]).reshape(1, QD_SIZE)
    wh2d, bh2d = lin(HID_DIM, OUT_DIM)
    wo2d, bo2d = lin(OUT_DIM, QD_SIZE)

    wh2c, bh2c = lin(HID_DIM, OUT_DIM)
    wo2c1, bo2c1 = lin(OUT_DIM + CONTACT_DIM, OUT_DIM)
    wo2c2, bo2c2 = lin(OUT_DIM, OUT_DIM)
    wo2c3, bo2c3 = lin(OUT_DIM, 2)
    lno_g = np.ones((1, OUT_DIM), np.float32)
    lno_b = np.zeros((1, OUT_DIM), np.float32)

    wh2f, bh2f = lin(HID_DIM, OUT_DIM)
    wo2f1, bo2f1 = lin(OUT_DIM + CONTACT_DIM, OUT_DIM)
    wo2f2, bo2f2 = lin(OUT_DIM, OUT_DIM)
    wo2f3, bo2f3 = lin(OUT_DIM, 6)
    bo2f3[0, 2] = 9.81                                        # out_2f3.bias[[2,5]] = 9.81
    bo2f3[0, 5] = 9.81

    wh2j, bh2j = lin(HID_DIM, OUT_DIM)
    wo2j = rnd((OUT_DIM, J_DIM), 1e-5)                        # init_weights(1e-5)
    bo2j = rnd((1, J_DIM), 1e-5)

    # ----------------------------- offline packing ------------------------------
    # 1) big fused LHS weight for [state | kalman_in] (K = 4408)
    wx = np.zeros((D_BIG, HID_DIM + 3 * GRU_DIM), np.float32)       # (4408, 128)
    wx[:D_STATE, :HID_DIM] = w1
    wx[:, HID_DIM:] = wih

    # 2) seven h3-fed heads fused to (32, 224), order [k m p d c f j]
    heads_w = np.concatenate([wh2k, wh2m, wh2p, wh2d, wh2c, wh2f, wh2j], axis=1)
    heads_b = np.concatenate([bh2k, bh2m, bh2p, bh2d, bh2c, bh2f, bh2j], axis=1)

    # 3) (32, N) slab: every weight whose LHS is a 32-wide activation
    w32 = np.zeros((HID_DIM, W32_TOTAL), np.float32)

    def put_w32(name, arr):
        o = W32_OFF[name]
        w32[:, o:o + arr.shape[1]] = arr

    put_w32("w2", w2); put_w32("w3", w3); put_w32("whh", whh); put_w32("wg2k", wg2k)
    put_w32("heads", heads_w); put_w32("wo2m", wo2m)
    put_w32("wo2k_a", wo2k[:OUT_DIM]); put_w32("wo2k_b", wo2k[OUT_DIM:])
    put_w32("wo2j", wo2j)

    # 4) (64, N) slab: block-diagonal fused heads with a 64-wide LHS
    wpd = np.zeros((2 * OUT_DIM, 2 * QD_SIZE), np.float32)
    wpd[:OUT_DIM, :QD_SIZE] = wo2p
    wpd[OUT_DIM:, QD_SIZE:] = wo2d
    wcf1 = np.zeros((2 * OUT_DIM, 2 * OUT_DIM), np.float32)
    wcf1[:OUT_DIM, :OUT_DIM] = wo2c1[:OUT_DIM]
    wcf1[OUT_DIM:, OUT_DIM:] = wo2f1[:OUT_DIM]
    wcf2 = np.zeros((2 * OUT_DIM, 2 * OUT_DIM), np.float32)
    wcf2[:OUT_DIM, :OUT_DIM] = wo2c2
    wcf2[OUT_DIM:, OUT_DIM:] = wo2f2
    wcf3 = np.zeros((2 * OUT_DIM, 8), np.float32)
    wcf3[:OUT_DIM, 0:2] = wo2c3
    wcf3[OUT_DIM:, 2:8] = wo2f3

    w64 = np.zeros((2 * OUT_DIM, W64_TOTAL), np.float32)

    def put_w64(name, arr):
        o = W64_OFF[name]
        w64[:, o:o + arr.shape[1]] = arr

    put_w64("wpd", wpd); put_w64("wcf1", wcf1); put_w64("wcf2", wcf2); put_w64("wcf3", wcf3)

    # 5) contact part of stage-1 weights: (73, 64) = [wo2c1_contact | wo2f1_contact]
    wck = np.concatenate([wo2c1[OUT_DIM:], wo2f1[OUT_DIM:]], axis=1)

    # 6) single (1, N) f32 slab for all biases / LayerNorm params / limit vectors
    vecs = np.zeros((1, VEC_TOTAL), np.float32)

    def put_v(name, arr):
        o = VEC_OFF[name]
        vecs[:, o:o + arr.shape[1]] = arr

    put_v("bias_big", np.concatenate([b1, bih], axis=1))
    put_v("b2", b2); put_v("b3", b3); put_v("lnh_g", lnh_g); put_v("lnh_b", lnh_b)
    put_v("bhh", bhh); put_v("lng_g", lng_g); put_v("lng_b", lng_b); put_v("bg2k", bg2k)
    put_v("bheads", heads_b); put_v("bo2k", bo2k); put_v("bo2m", bo2m)
    put_v("limpd", np.concatenate([limp, limd], axis=1))
    put_v("bpd", np.concatenate([bo2p, bo2d], axis=1))
    put_v("bcf1", np.concatenate([bo2c1, bo2f1], axis=1))
    put_v("bcf2", np.concatenate([bo2c2, bo2f2], axis=1))
    put_v("lno_g2", np.concatenate([lno_g, lno_g], axis=1))
    put_v("lno_b2", np.concatenate([lno_b, lno_b], axis=1))
    put_v("bcf3", np.concatenate([bo2c3, bo2f3], axis=1))
    put_v("bo2j", bo2j)

    return (jnp.asarray(wx, jnp.bfloat16),     # (4408, 128)
            jnp.asarray(w32, jnp.bfloat16),    # (32, W32_TOTAL)
            jnp.asarray(w64, jnp.bfloat16),    # (64, W64_TOTAL)
            jnp.asarray(wck, jnp.bfloat16),    # (73, 64)
            jnp.asarray(vecs, jnp.float32))    # (1, VEC_TOTAL)


# --------------------------------- main --------------------------------------
if __name__ == "__main__":
    B = 2
    key = jax.random.PRNGKey(0)
    k1, k2, k3 = jax.random.split(key, 3)
    state_input   = jax.random.normal(k1, (B, 1, D_STATE), jnp.float32)
    kalman_in     = jax.random.normal(k2, (B, 1, D_KAL), jnp.float32)
    contact_input = jax.random.normal(k3, (B, 1, CONTACT_DIM), jnp.float32)
    h0 = jnp.zeros((NLAYERS, B, GRU_DIM), jnp.float32)        # init_hidden

    params = make_params(seed=0)
    fwd = jax.jit(osdnet_forward)
    out = fwd(params, state_input, kalman_in, contact_input, h0)
    out = jax.tree_util.tree_map(lambda a: a.block_until_ready(), out)

    kalman, h_out, gains, M_bias, contacts, fext, jacs = out
    assert kalman.shape == (B, Q_SIZE, Q_SIZE)
    assert h_out.shape == (NLAYERS, B, GRU_DIM)
    assert gains[0].shape == (B, QD_SIZE, QD_SIZE) and gains[1].shape == (B, QD_SIZE, QD_SIZE)
    assert M_bias.shape == (B, QD_SIZE, QD_SIZE)
    assert contacts.shape == (B, 2)
    assert fext.shape == (B, 2, 3)
    assert jacs.shape == (B, 2, QD_SIZE, 3)
    assert all(bool(jnp.isfinite(x).all()) for x in
               (kalman, h_out, gains[0], gains[1], M_bias, contacts, fext, jacs))
    print("KERNEL_OK")
</pallas_src>

<mosaic_0001>
module attributes {stable_mosaic.version = 11 : i64} {
  func.func @osdnet_kernel(%arg0: i32, %arg1: memref<8x4408xbf16, #tpu.memory_space<vmem>>, %arg2: memref<8x32xf32, #tpu.memory_space<vmem>>, %arg3: memref<8x73xbf16, #tpu.memory_space<vmem>>, %arg4: memref<4408x128xbf16, #tpu.memory_space<vmem>>, %arg5: memref<32x6144xbf16, #tpu.memory_space<vmem>>, %arg6: memref<64x640xbf16, #tpu.memory_space<vmem>>, %arg7: memref<73x64xbf16, #tpu.memory_space<vmem>>, %arg8: memref<1x7680xf32, #tpu.memory_space<vmem>>, %arg9: memref<8x1152xf32, #tpu.memory_space<vmem>>, %arg10: memref<8x4356xf32, #tpu.memory_space<vmem>>) attributes {dimension_semantics = [#tpu.dimension_semantics<parallel>], iteration_bounds = array<i64: 1>, scalar_prefetch = 0 : i64, scratch_operands = 0 : i64, tpu.core_type = #tpu.core_type<tc>, window_params = [{transform_indices = @transform_0, window_bounds = array<i64: 8, 4408>}, {transform_indices = @transform_1, window_bounds = array<i64: 8, 32>}, {transform_indices = @transform_2, window_bounds = array<i64: 8, 73>}, {pipeline_mode = #tpu.pipeline_mode<synchronous>, transform_indices = @transform_3, window_bounds = array<i64: 4408, 128>}, {pipeline_mode = #tpu.pipeline_mode<synchronous>, transform_indices = @transform_4, window_bounds = array<i64: 32, 6144>}, {pipeline_mode = #tpu.pipeline_mode<synchronous>, transform_indices = @transform_5, window_bounds = array<i64: 64, 640>}, {pipeline_mode = #tpu.pipeline_mode<synchronous>, transform_indices = @transform_6, window_bounds = array<i64: 73, 64>}, {pipeline_mode = #tpu.pipeline_mode<synchronous>, transform_indices = @transform_7, window_bounds = array<i64: 1, 7680>}, {transform_indices = @transform_8, window_bounds = array<i64: 8, 1152>}, {transform_indices = @transform_9, window_bounds = array<i64: 8, 4356>}]} {
    %c0 = arith.constant 0 : index
    %c384 = arith.constant 384 : index
    %0 = vector.load %arg8[%c0, %c384] : memref<1x7680xf32, #tpu.memory_space<vmem>>, vector<1x32xf32>
    %c0_0 = arith.constant 0 : index
    %c512 = arith.constant 512 : index
    %1 = vector.load %arg8[%c0_0, %c512] : memref<1x7680xf32, #tpu.memory_space<vmem>>, vector<1x32xf32>
    %c0_1 = arith.constant 0 : index
    %c6912 = arith.constant 6912 : index
    %2 = vector.load %arg8[%c0_1, %c6912] : memref<1x7680xf32, #tpu.memory_space<vmem>>, vector<1x64xf32>
    %c0_2 = arith.constant 0 : index
    %c7040 = arith.constant 7040 : index
    %3 = vector.load %arg8[%c0_2, %c7040] : memref<1x7680xf32, #tpu.memory_space<vmem>>, vector<1x64xf32>
    %cst = arith.constant 0.000000e+00 : f32
    %4 = vector.broadcast %cst : f32 to vector<8x1152xf32>
    %c0_3 = arith.constant 0 : index
    %c0_4 = arith.constant 0 : index
    %5 = vector.load %arg9[%c0_3, %c0_4] : memref<8x1152xf32, #tpu.memory_space<vmem>>, vector<8x1152xf32>
    tpu.vector_store %arg9[%c0_3, %c0_4], %4 {strides = array<i32>} : memref<8x1152xf32, #tpu.memory_space<vmem>>, vector<8x1152xf32>,
    %c0_5 = arith.constant 0 : index
    %c0_6 = arith.constant 0 : index
    %6 = vector.load %arg1[%c0_5, %c0_6] : memref<8x4408xbf16, #tpu.memory_space<vmem>>, vector<8x4408xbf16>
    %c0_7 = arith.constant 0 : index
    %c0_8 = arith.constant 0 : index
    %7 = vector.load %arg2[%c0_7, %c0_8] : memref<8x32xf32, #tpu.memory_space<vmem>>, vector<8x32xf32>
    %c0_9 = arith.constant 0 : index
    %c0_10 = arith.constant 0 : index
    %8 = vector.load %arg3[%c0_9, %c0_10] : memref<8x73xbf16, #tpu.memory_space<vmem>>, vector<8x73xbf16>
    %c0_11 = arith.constant 0 : index
    %c0_12 = arith.constant 0 : index
    %9 = vector.load %arg4[%c0_11, %c0_12] : memref<4408x128xbf16, #tpu.memory_space<vmem>>, vector<4408x128xbf16>
    %cst_13 = arith.constant dense<0.000000e+00> : vector<8x128xf32>
    %10 = tpu.matmul %6, %9, %cst_13 {dimension_numbers = #tpu.dot_dimension_numbers<[1], [0], [0], [1], [0, 0, 1, 1], [], []>} : vector<8x4408xbf16>, vector<4408x128xbf16>, vector<8x128xf32> -> vector<8x128xf32>
    %c0_14 = arith.constant 0 : index
    %c0_15 = arith.constant 0 : index
    %11 = vector.load %arg8[%c0_14, %c0_15] : memref<1x7680xf32, #tpu.memory_space<vmem>>, vector<1x128xf32>
    %12 = vector.broadcast %11 : vector<1x128xf32> to vector<8x128xf32>
    %13 = arith.addf %10, %12 : vector<8x128xf32>
    %14 = vector.extract_strided_slice %13 {offsets = [0, 0], sizes = [8, 32], strides = [1, 1]} : vector<8x128xf32> to vector<8x32xf32>
    %15 = vector.extract_strided_slice %13 {offsets = [0, 32], sizes = [8, 96], strides = [1, 1]} : vector<8x128xf32> to vector<8x96xf32>
    %cst_16 = arith.constant dense<0.000000e+00> : vector<8xf32>
    %16 = vector.multi_reduction <add>, %14, %cst_16 [1] : vector<8x32xf32> to vector<8xf32>
    %17 = vector.shape_cast %16 : vector<8xf32> to vector<8x1xf32>
    %cst_17 = arith.constant 3.200000e+01 : f32
    %18 = vector.broadcast %cst_17 : f32 to vector<8x1xf32>
    %19 = arith.divf %17, %18 : vector<8x1xf32>
    %20 = vector.broadcast %19 : vector<8x1xf32> to vector<8x32xf32>
    %21 = arith.subf %14, %20 : vector<8x32xf32>
    %22 = arith.mulf %21, %21 : vector<8x32xf32>
    %cst_18 = arith.constant dense<0.000000e+00> : vector<8xf32>
    %23 = vector.multi_reduction <add>, %22, %cst_18 [1] : vector<8x32xf32> to vector<8xf32>
    %24 = vector.shape_cast %23 : vector<8xf32> to vector<8x1xf32>
    %cst_19 = arith.constant 3.200000e+01 : f32
    %25 = vector.broadcast %cst_19 : f32 to vector<8x1xf32>
    %26 = arith.divf %24, %25 : vector<8x1xf32>
    %27 = vector.broadcast %19 : vector<8x1xf32> to vector<8x32xf32>
    %28 = arith.subf %14, %27 : vector<8x32xf32>
    %cst_20 = arith.constant 9.99999974E-6 : f32
    %29 = vector.broadcast %cst_20 : f32 to vector<8x1xf32>
    %30 = arith.addf %26, %29 : vector<8x1xf32>
    %31 = math.rsqrt %30 : vector<8x1xf32>
    %32 = vector.broadcast %31 : vector<8x1xf32> to vector<8x32xf32>
    %33 = arith.mulf %28, %32 : vector<8x32xf32>
    %34 = vector.broadcast %0 : vector<1x32xf32> to vector<8x32xf32>
    %35 = arith.mulf %33, %34 : vector<8x32xf32>
    %36 = vector.broadcast %1 : vector<1x32xf32> to vector<8x32xf32>
    %37 = arith.addf %35, %36 : vector<8x32xf32>
    %cst_21 = arith.constant 0.000000e+00 : f32
    %38 = vector.broadcast %cst_21 : f32 to vector<8x32xf32>
    %39 = arith.cmpf ogt, %37, %38 : vector<8x32xf32>
    %cst_22 = arith.constant 0.00999999977 : f32
    %40 = vector.broadcast %cst_22 : f32 to vector<8x32xf32>
    %41 = arith.mulf %40, %37 : vector<8x32xf32>
    %42 = arith.select %39, %37, %41 : vector<8x32xi1>, vector<8x32xf32>
    %c0_23 = arith.constant 0 : index
    %c0_24 = arith.constant 0 : index
    %43 = vector.load %arg5[%c0_23, %c0_24] : memref<32x6144xbf16, #tpu.memory_space<vmem>>, vector<32x32xbf16>
    %44 = arith.truncf %42 : vector<8x32xf32> to vector<8x32xbf16>
    %cst_25 = arith.constant dense<0.000000e+00> : vector<8x32xf32>
    %45 = tpu.matmul %44, %43, %cst_25 {dimension_numbers = #tpu.dot_dimension_numbers<[1], [0], [0], [1], [0, 0, 1, 1], [], []>} : vector<8x32xbf16>, vector<32x32xbf16>, vector<8x32xf32> -> vector<8x32xf32>
    %c0_26 = arith.constant 0 : index
    %c128 = arith.constant 128 : index
    %46 = vector.load %arg8[%c0_26, %c128] : memref<1x7680xf32, #tpu.memory_space<vmem>>, vector<1x32xf32>
    %47 = vector.broadcast %46 : vector<1x32xf32> to vector<8x32xf32>
    %48 = arith.addf %45, %47 : vector<8x32xf32>
    %cst_27 = arith.constant dense<0.000000e+00> : vector<8xf32>
    %49 = vector.multi_reduction <add>, %48, %cst_27 [1] : vector<8x32xf32> to vector<8xf32>
    %50 = vector.shape_cast %49 : vector<8xf32> to vector<8x1xf32>
    %cst_28 = arith.constant 3.200000e+01 : f32
    %51 = vector.broadcast %cst_28 : f32 to vector<8x1xf32>
    %52 = arith.divf %50, %51 : vector<8x1xf32>
    %53 = vector.broadcast %52 : vector<8x1xf32> to vector<8x32xf32>
    %54 = arith.subf %48, %53 : vector<8x32xf32>
    %55 = arith.mulf %54, %54 : vector<8x32xf32>
    %cst_29 = arith.constant dense<0.000000e+00> : vector<8xf32>
    %56 = vector.multi_reduction <add>, %55, %cst_29 [1] : vector<8x32xf32> to vector<8xf32>
    %57 = vector.shape_cast %56 : vector<8xf32> to vector<8x1xf32>
    %cst_30 = arith.constant 3.200000e+01 : f32
    %58 = vector.broadcast %cst_30 : f32 to vector<8x1xf32>
    %59 = arith.divf %57, %58 : vector<8x1xf32>
    %60 = vector.broadcast %52 : vector<8x1xf32> to vector<8x32xf32>
    %61 = arith.subf %48, %60 : vector<8x32xf32>
    %cst_31 = arith.constant 9.99999974E-6 : f32
    %62 = vector.broadcast %cst_31 : f32 to vector<8x1xf32>
    %63 = arith.addf %59, %62 : vector<8x1xf32>
    %64 = math.rsqrt %63 : vector<8x1xf32>
    %65 = vector.broadcast %64 : vector<8x1xf32> to vector<8x32xf32>
    %66 = arith.mulf %61, %65 : vector<8x32xf32>
    %67 = vector.broadcast %0 : vector<1x32xf32> to vector<8x32xf32>
    %68 = arith.mulf %66, %67 : vector<8x32xf32>
    %69 = vector.broadcast %1 : vector<1x32xf32> to vector<8x32xf32>
    %70 = arith.addf %68, %69 : vector<8x32xf32>
    %cst_32 = arith.constant 0.000000e+00 : f32
    %71 = vector.broadcast %cst_32 : f32 to vector<8x32xf32>
    %72 = arith.cmpf ogt, %70, %71 : vector<8x32xf32>
    %cst_33 = arith.constant 0.00999999977 : f32
    %73 = vector.broadcast %cst_33 : f32 to vector<8x32xf32>
    %74 = arith.mulf %73, %70 : vector<8x32xf32>
    %75 = arith.select %72, %70, %74 : vector<8x32xi1>, vector<8x32xf32>
    %c0_34 = arith.constant 0 : index
    %c128_35 = arith.constant 128 : index
    %76 = vector.load %arg5[%c0_34, %c128_35] : memref<32x6144xbf16, #tpu.memory_space<vmem>>, vector<32x32xbf16>
    %77 = arith.truncf %75 : vector<8x32xf32> to vector<8x32xbf16>
    %cst_36 = arith.constant dense<0.000000e+00> : vector<8x32xf32>
    %78 = tpu.matmul %77, %76, %cst_36 {dimension_numbers = #tpu.dot_dimension_numbers<[1], [0], [0], [1], [0, 0, 1, 1], [], []>} : vector<8x32xbf16>, vector<32x32xbf16>, vector<8x32xf32> -> vector<8x32xf32>
    %c0_37 = arith.constant 0 : index
    %c256 = arith.constant 256 : index
    %79 = vector.load %arg8[%c0_37, %c256] : memref<1x7680xf32, #tpu.memory_space<vmem>>, vector<1x32xf32>
    %80 = vector.broadcast %79 : vector<1x32xf32> to vector<8x32xf32>
    %81 = arith.addf %78, %80 : vector<8x32xf32>
    %cst_38 = arith.constant dense<0.000000e+00> : vector<8xf32>
    %82 = vector.multi_reduction <add>, %81, %cst_38 [1] : vector<8x32xf32> to vector<8xf32>
    %83 = vector.shape_cast %82 : vector<8xf32> to vector<8x1xf32>
    %cst_39 = arith.constant 3.200000e+01 : f32
    %84 = vector.broadcast %cst_39 : f32 to vector<8x1xf32>
    %85 = arith.divf %83, %84 : vector<8x1xf32>
    %86 = vector.broadcast %85 : vector<8x1xf32> to vector<8x32xf32>
    %87 = arith.subf %81, %86 : vector<8x32xf32>
    %88 = arith.mulf %87, %87 : vector<8x32xf32>
    %cst_40 = arith.constant dense<0.000000e+00> : vector<8xf32>
    %89 = vector.multi_reduction <add>, %88, %cst_40 [1] : vector<8x32xf32> to vector<8xf32>
    %90 = vector.shape_cast %89 : vector<8xf32> to vector<8x1xf32>
    %cst_41 = arith.constant 3.200000e+01 : f32
    %91 = vector.broadcast %cst_41 : f32 to vector<8x1xf32>
    %92 = arith.divf %90, %91 : vector<8x1xf32>
    %93 = vector.broadcast %85 : vector<8x1xf32> to vector<8x32xf32>
    %94 = arith.subf %81, %93 : vector<8x32xf32>
    %cst_42 = arith.constant 9.99999974E-6 : f32
    %95 = vector.broadcast %cst_42 : f32 to vector<8x1xf32>
    %96 = arith.addf %92, %95 : vector<8x1xf32>
    %97 = math.rsqrt %96 : vector<8x1xf32>
    %98 = vector.broadcast %97 : vector<8x1xf32> to vector<8x32xf32>
    %99 = arith.mulf %94, %98 : vector<8x32xf32>
    %100 = vector.broadcast %0 : vector<1x32xf32> to vector<8x32xf32>
    %101 = arith.mulf %99, %100 : vector<8x32xf32>
    %102 = vector.broadcast %1 : vector<1x32xf32> to vector<8x32xf32>
    %103 = arith.addf %101, %102 : vector<8x32xf32>
    %cst_43 = arith.constant 0.000000e+00 : f32
    %104 = vector.broadcast %cst_43 : f32 to vector<8x32xf32>
    %105 = arith.cmpf ogt, %103, %104 : vector<8x32xf32>
    %cst_44 = arith.constant 0.00999999977 : f32
    %106 = vector.broadcast %cst_44 : f32 to vector<8x32xf32>
    %107 = arith.mulf %106, %103 : vector<8x32xf32>
    %108 = arith.select %105, %103, %107 : vector<8x32xi1>, vector<8x32xf32>
    %c0_45 = arith.constant 0 : index
    %c256_46 = arith.constant 256 : index
    %109 = vector.load %arg5[%c0_45, %c256_46] : memref<32x6144xbf16, #tpu.memory_space<vmem>>, vector<32x96xbf16>
    %110 = arith.truncf %7 : vector<8x32xf32> to vector<8x32xbf16>
    %cst_47 = arith.constant dense<0.000000e+00> : vector<8x96xf32>
    %111 = tpu.matmul %110, %109, %cst_47 {dimension_numbers = #tpu.dot_dimension_numbers<[1], [0], [0], [1], [0, 0, 1, 1], [], []>} : vector<8x32xbf16>, vector<32x96xbf16>, vector<8x96xf32> -> vector<8x96xf32>
    %c0_48 = arith.constant 0 : index
    %c640 = arith.constant 640 : index
    %112 = vector.load %arg8[%c0_48, %c640] : memref<1x7680xf32, #tpu.memory_space<vmem>>, vector<1x96xf32>
    %113 = vector.broadcast %112 : vector<1x96xf32> to vector<8x96xf32>
    %114 = arith.addf %111, %113 : vector<8x96xf32>
    %115 = vector.extract_strided_slice %15 {offsets = [0, 0], sizes = [8, 32], strides = [1, 1]} : vector<8x96xf32> to vector<8x32xf32>
    %116 = vector.extract_strided_slice %114 {offsets = [0, 0], sizes = [8, 32], strides = [1, 1]} : vector<8x96xf32> to vector<8x32xf32>
    %117 = arith.addf %115, %116 : vector<8x32xf32>
    %118 = arith.negf %117 : vector<8x32xf32>
    %119 = math.exp %118 : vector<8x32xf32>
    %cst_49 = arith.constant 1.000000e+00 : f32
    %120 = vector.broadcast %cst_49 : f32 to vector<8x32xf32>
    %121 = arith.addf %120, %119 : vector<8x32xf32>
    %122 = arith.divf %120, %121 : vector<8x32xf32>
    %123 = vector.extract_strided_slice %15 {offsets = [0, 32], sizes = [8, 32], strides = [1, 1]} : vector<8x96xf32> to vector<8x32xf32>
    %124 = vector.extract_strided_slice %114 {offsets = [0, 32], sizes = [8, 32], strides = [1, 1]} : vector<8x96xf32> to vector<8x32xf32>
    %125 = arith.addf %123, %124 : vector<8x32xf32>
    %126 = arith.negf %125 : vector<8x32xf32>
    %127 = math.exp %126 : vector<8x32xf32>
    %cst_50 = arith.constant 1.000000e+00 : f32
    %128 = vector.broadcast %cst_50 : f32 to vector<8x32xf32>
    %129 = arith.addf %128, %127 : vector<8x32xf32>
    %130 = arith.divf %128, %129 : vector<8x32xf32>
    %131 = vector.extract_strided_slice %15 {offsets = [0, 64], sizes = [8, 32], strides = [1, 1]} : vector<8x96xf32> to vector<8x32xf32>
    %132 = vector.extract_strided_slice %114 {offsets = [0, 64], sizes = [8, 32], strides = [1, 1]} : vector<8x96xf32> to vector<8x32xf32>
    %133 = arith.mulf %122, %132 : vector<8x32xf32>
    %134 = arith.addf %131, %133 : vector<8x32xf32>
    %135 = math.tanh %134 : vector<8x32xf32>
    %cst_51 = arith.constant 1.000000e+00 : f32
    %136 = vector.broadcast %cst_51 : f32 to vector<8x32xf32>
    %137 = arith.subf %136, %130 : vector<8x32xf32>
    %138 = arith.mulf %137, %135 : vector<8x32xf32>
    %139 = arith.mulf %130, %7 : vector<8x32xf32>
    %140 = arith.addf %138, %139 : vector<8x32xf32>
    %c0_52 = arith.constant 0 : index
    %c768 = arith.constant 768 : index
    %141 = vector.load %arg8[%c0_52, %c768] : memref<1x7680xf32, #tpu.memory_space<vmem>>, vector<1x32xf32>
    %c0_53 = arith.constant 0 : index
    %c896 = arith.constant 896 : index
    %142 = vector.load %arg8[%c0_53, %c896] : memref<1x7680xf32, #tpu.memory_space<vmem>>, vector<1x32xf32>
    %cst_54 = arith.constant dense<0.000000e+00> : vector<8xf32>
    %143 = vector.multi_reduction <add>, %140, %cst_54 [1] : vector<8x32xf32> to vector<8xf32>
    %144 = vector.shape_cast %143 : vector<8xf32> to vector<8x1xf32>
    %cst_55 = arith.constant 3.200000e+01 : f32
    %145 = vector.broadcast %cst_55 : f32 to vector<8x1xf32>
    %146 = arith.divf %144, %145 : vector<8x1xf32>
    %147 = vector.broadcast %146 : vector<8x1xf32> to vector<8x32xf32>
    %148 = arith.subf %140, %147 : vector<8x32xf32>
    %149 = arith.mulf %148, %148 : vector<8x32xf32>
    %cst_56 = arith.constant dense<0.000000e+00> : vector<8xf32>
    %150 = vector.multi_reduction <add>, %149, %cst_56 [1] : vector<8x32xf32> to vector<8xf32>
    %151 = vector.shape_cast %150 : vector<8xf32> to vector<8x1xf32>
    %cst_57 = arith.constant 3.200000e+01 : f32
    %152 = vector.broadcast %cst_57 : f32 to vector<8x1xf32>
    %153 = arith.divf %151, %152 : vector<8x1xf32>
    %154 = vector.broadcast %146 : vector<8x1xf32> to vector<8x32xf32>
    %155 = arith.subf %140, %154 : vector<8x32xf32>
    %cst_58 = arith.constant 9.99999974E-6 : f32
    %156 = vector.broadcast %cst_58 : f32 to vector<8x1xf32>
    %157 = arith.addf %153, %156 : vector<8x1xf32>
    %158 = math.rsqrt %157 : vector<8x1xf32>
    %159 = vector.broadcast %158 : vector<8x1xf32> to vector<8x32xf32>
    %160 = arith.mulf %155, %159 : vector<8x32xf32>
    %161 = vector.broadcast %141 : vector<1x32xf32> to vector<8x32xf32>
    %162 = arith.mulf %160, %161 : vector<8x32xf32>
    %163 = vector.broadcast %142 : vector<1x32xf32> to vector<8x32xf32>
    %164 = arith.addf %162, %163 : vector<8x32xf32>
    %cst_59 = arith.constant 0.000000e+00 : f32
    %165 = vector.broadcast %cst_59 : f32 to vector<8x32xf32>
    %166 = arith.cmpf ogt, %164, %165 : vector<8x32xf32>
    %cst_60 = arith.constant 0.00999999977 : f32
    %167 = vector.broadcast %cst_60 : f32 to vector<8x32xf32>
    %168 = arith.mulf %167, %164 : vector<8x32xf32>
    %169 = arith.select %166, %164, %168 : vector<8x32xi1>, vector<8x32xf32>
    %c0_61 = arith.constant 0 : index
    %c384_62 = arith.constant 384 : index
    %170 = vector.load %arg5[%c0_61, %c384_62] : memref<32x6144xbf16, #tpu.memory_space<vmem>>, vector<32x32xbf16>
    %171 = arith.truncf %169 : vector<8x32xf32> to vector<8x32xbf16>
    %cst_63 = arith.constant dense<0.000000e+00> : vector<8x32xf32>
    %172 = tpu.matmul %171, %170, %cst_63 {dimension_numbers = #tpu.dot_dimension_numbers<[1], [0], [0], [1], [0, 0, 1, 1], [], []>} : vector<8x32xbf16>, vector<32x32xbf16>, vector<8x32xf32> -> vector<8x32xf32>
    %c0_64 = arith.constant 0 : index
    %c1024 = arith.constant 1024 : index
    %173 = vector.load %arg8[%c0_64, %c1024] : memref<1x7680xf32, #tpu.memory_space<vmem>>, vector<1x32xf32>
    %174 = vector.broadcast %173 : vector<1x32xf32> to vector<8x32xf32>
    %175 = arith.addf %172, %174 : vector<8x32xf32>
    %cst_65 = arith.constant 0.000000e+00 : f32
    %176 = vector.broadcast %cst_65 : f32 to vector<8x32xf32>
    %177 = arith.cmpf ogt, %175, %176 : vector<8x32xf32>
    %cst_66 = arith.constant 0.00999999977 : f32
    %178 = vector.broadcast %cst_66 : f32 to vector<8x32xf32>
    %179 = arith.mulf %178, %175 : vector<8x32xf32>
    %180 = arith.select %177, %175, %179 : vector<8x32xi1>, vector<8x32xf32>
    %c0_67 = arith.constant 0 : index
    %c512_68 = arith.constant 512 : index
    %181 = vector.load %arg5[%c0_67, %c512_68] : memref<32x6144xbf16, #tpu.memory_space<vmem>>, vector<32x224xbf16>
    %182 = arith.truncf %108 : vector<8x32xf32> to vector<8x32xbf16>
    %cst_69 = arith.constant dense<0.000000e+00> : vector<8x224xf32>
    %183 = tpu.matmul %182, %181, %cst_69 {dimension_numbers = #tpu.dot_dimension_numbers<[1], [0], [0], [1], [0, 0, 1, 1], [], []>} : vector<8x32xbf16>, vector<32x224xbf16>, vector<8x224xf32> -> vector<8x224xf32>
    %c0_70 = arith.constant 0 : index
    %c1152 = arith.constant 1152 : index
    %184 = vector.load %arg8[%c0_70, %c1152] : memref<1x7680xf32, #tpu.memory_space<vmem>>, vector<1x224xf32>
    %185 = vector.broadcast %184 : vector<1x224xf32> to vector<8x224xf32>
    %186 = arith.addf %183, %185 : vector<8x224xf32>
    %cst_71 = arith.constant 0.000000e+00 : f32
    %187 = vector.broadcast %cst_71 : f32 to vector<8x224xf32>
    %188 = arith.cmpf ogt, %186, %187 : vector<8x224xf32>
    %cst_72 = arith.constant 0.00999999977 : f32
    %189 = vector.broadcast %cst_72 : f32 to vector<8x224xf32>
    %190 = arith.mulf %189, %186 : vector<8x224xf32>
    %191 = arith.select %188, %186, %190 : vector<8x224xi1>, vector<8x224xf32>
    %192 = vector.extract_strided_slice %191 {offsets = [0, 0], sizes = [8, 32], strides = [1, 1]} : vector<8x224xf32> to vector<8x32xf32>
    %193 = vector.extract_strided_slice %191 {offsets = [0, 32], sizes = [8, 32], strides = [1, 1]} : vector<8x224xf32> to vector<8x32xf32>
    %194 = vector.extract_strided_slice %191 {offsets = [0, 64], sizes = [8, 64], strides = [1, 1]} : vector<8x224xf32> to vector<8x64xf32>
    %195 = vector.extract_strided_slice %191 {offsets = [0, 128], sizes = [8, 64], strides = [1, 1]} : vector<8x224xf32> to vector<8x64xf32>
    %196 = vector.extract_strided_slice %191 {offsets = [0, 192], sizes = [8, 32], strides = [1, 1]} : vector<8x224xf32> to vector<8x32xf32>
    %c0_73 = arith.constant 0 : index
    %c5248 = arith.constant 5248 : index
    %197 = vector.load %arg5[%c0_73, %c5248] : memref<32x6144xbf16, #tpu.memory_space<vmem>>, vector<32x144xbf16>
    %198 = arith.truncf %180 : vector<8x32xf32> to vector<8x32xbf16>
    %cst_74 = arith.constant dense<0.000000e+00> : vector<8x144xf32>
    %199 = tpu.matmul %198, %197, %cst_74 {dimension_numbers = #tpu.dot_dimension_numbers<[1], [0], [0], [1], [0, 0, 1, 1], [], []>} : vector<8x32xbf16>, vector<32x144xbf16>, vector<8x144xf32> -> vector<8x144xf32>
    %c0_75 = arith.constant 0 : index
    %c5504 = arith.constant 5504 : index
    %200 = vector.load %arg5[%c0_75, %c5504] : memref<32x6144xbf16, #tpu.memory_space<vmem>>, vector<32x144xbf16>
    %201 = arith.truncf %192 : vector<8x32xf32> to vector<8x32xbf16>
    %cst_76 = arith.constant dense<0.000000e+00> : vector<8x144xf32>
    %202 = tpu.matmul %201, %200, %cst_76 {dimension_numbers = #tpu.dot_dimension_numbers<[1], [0], [0], [1], [0, 0, 1, 1], [], []>} : vector<8x32xbf16>, vector<32x144xbf16>, vector<8x144xf32> -> vector<8x144xf32>
    %203 = arith.addf %199, %202 : vector<8x144xf32>
    %c0_77 = arith.constant 0 : index
    %c1408 = arith.constant 1408 : index
    %204 = vector.load %arg8[%c0_77, %c1408] : memref<1x7680xf32, #tpu.memory_space<vmem>>, vector<1x144xf32>
    %205 = vector.broadcast %204 : vector<1x144xf32> to vector<8x144xf32>
    %206 = arith.addf %203, %205 : vector<8x144xf32>
    %c0_78 = arith.constant 0 : index
    %c768_79 = arith.constant 768 : index
    %207 = vector.load %arg5[%c0_78, %c768_79] : memref<32x6144xbf16, #tpu.memory_space<vmem>>, vector<32x4356xbf16>
    %208 = arith.truncf %193 : vector<8x32xf32> to vector<8x32xbf16>
    %cst_80 = arith.constant dense<0.000000e+00> : vector<8x4356xf32>
    %209 = tpu.matmul %208, %207, %cst_80 {dimension_numbers = #tpu.dot_dimension_numbers<[1], [0], [0], [1], [0, 0, 1, 1], [], []>} : vector<8x32xbf16>, vector<32x4356xbf16>, vector<8x4356xf32> -> vector<8x4356xf32>
    %c0_81 = arith.constant 0 : index
    %c1664 = arith.constant 1664 : index
    %210 = vector.load %arg8[%c0_81, %c1664] : memref<1x7680xf32, #tpu.memory_space<vmem>>, vector<1x4356xf32>
    %211 = vector.broadcast %210 : vector<1x4356xf32> to vector<8x4356xf32>
    %212 = arith.addf %209, %211 : vector<8x4356xf32>
    %c0_82 = arith.constant 0 : index
    %c0_83 = arith.constant 0 : index
    %213 = vector.load %arg10[%c0_82, %c0_83] : memref<8x4356xf32, #tpu.memory_space<vmem>>, vector<8x4356xf32>
    tpu.vector_store %arg10[%c0_82, %c0_83], %212 {strides = array<i32>} : memref<8x4356xf32, #tpu.memory_space<vmem>>, vector<8x4356xf32>,
    %c0_84 = arith.constant 0 : index
    %c6144 = arith.constant 6144 : index
    %214 = vector.load %arg8[%c0_84, %c6144] : memref<1x7680xf32, #tpu.memory_space<vmem>>, vector<1x132xf32>
    %c0_85 = arith.constant 0 : index
    %c0_86 = arith.constant 0 : index
    %215 = vector.load %arg6[%c0_85, %c0_86] : memref<64x640xbf16, #tpu.memory_space<vmem>>, vector<64x132xbf16>
    %216 = arith.truncf %194 : vector<8x64xf32> to vector<8x64xbf16>
    %cst_87 = arith.constant dense<0.000000e+00> : vector<8x132xf32>
    %217 = tpu.matmul %216, %215, %cst_87 {dimension_numbers = #tpu.dot_dimension_numbers<[1], [0], [0], [1], [0, 0, 1, 1], [], []>} : vector<8x64xbf16>, vector<64x132xbf16>, vector<8x132xf32> -> vector<8x132xf32>
    %c0_88 = arith.constant 0 : index
    %c6400 = arith.constant 6400 : index
    %218 = vector.load %arg8[%c0_88, %c6400] : memref<1x7680xf32, #tpu.memory_space<vmem>>, vector<1x132xf32>
    %219 = vector.broadcast %218 : vector<1x132xf32> to vector<8x132xf32>
    %220 = arith.addf %217, %219 : vector<8x132xf32>
    %221 = arith.negf %220 : vector<8x132xf32>
    %222 = math.exp %221 : vector<8x132xf32>
    %cst_89 = arith.constant 1.000000e+00 : f32
    %223 = vector.broadcast %cst_89 : f32 to vector<8x132xf32>
    %224 = arith.addf %223, %222 : vector<8x132xf32>
    %225 = arith.divf %223, %224 : vector<8x132xf32>
    %226 = vector.broadcast %214 : vector<1x132xf32> to vector<8x132xf32>
    %227 = arith.mulf %226, %225 : vector<8x132xf32>
    %228 = tpu.iota {dimensions = array<i32: 1>} : vector<1x64xi32>
    %c32_i32 = arith.constant 32 : i32
    %229 = vector.broadcast %c32_i32 : i32 to vector<1x64xi32>
    %230 = arith.cmpi slt, %228, %229 : vector<1x64xi32>
    %c0_90 = arith.constant 0 : index
    %c256_91 = arith.constant 256 : index
    %231 = vector.load %arg6[%c0_90, %c256_91] : memref<64x640xbf16, #tpu.memory_space<vmem>>, vector<64x64xbf16>
    %232 = arith.truncf %195 : vector<8x64xf32> to vector<8x64xbf16>
    %cst_92 = arith.constant dense<0.000000e+00> : vector<8x64xf32>
    %233 = tpu.matmul %232, %231, %cst_92 {dimension_numbers = #tpu.dot_dimension_numbers<[1], [0], [0], [1], [0, 0, 1, 1], [], []>} : vector<8x64xbf16>, vector<64x64xbf16>, vector<8x64xf32> -> vector<8x64xf32>
    %c0_93 = arith.constant 0 : index
    %c0_94 = arith.constant 0 : index
    %234 = vector.load %arg7[%c0_93, %c0_94] : memref<73x64xbf16, #tpu.memory_space<vmem>>, vector<73x64xbf16>
    %cst_95 = arith.constant dense<0.000000e+00> : vector<8x64xf32>
    %235 = tpu.matmul %8, %234, %cst_95 {dimension_numbers = #tpu.dot_dimension_numbers<[1], [0], [0], [1], [0, 0, 1, 1], [], []>} : vector<8x73xbf16>, vector<73x64xbf16>, vector<8x64xf32> -> vector<8x64xf32>
    %236 = arith.addf %233, %235 : vector<8x64xf32>
    %c0_96 = arith.constant 0 : index
    %c6656 = arith.constant 6656 : index
    %237 = vector.load %arg8[%c0_96, %c6656] : memref<1x7680xf32, #tpu.memory_space<vmem>>, vector<1x64xf32>
    %238 = vector.broadcast %237 : vector<1x64xf32> to vector<8x64xf32>
    %239 = arith.addf %236, %238 : vector<8x64xf32>
    %240 = math.tanh %239 : vector<8x64xf32>
    %cst_97 = arith.constant 0.000000e+00 : f32
    %241 = vector.broadcast %cst_97 : f32 to vector<8x64xf32>
    %242 = arith.cmpf ogt, %239, %241 : vector<8x64xf32>
    %cst_98 = arith.constant 0.00999999977 : f32
    %243 = vector.broadcast %cst_98 : f32 to vector<8x64xf32>
    %244 = arith.mulf %243, %239 : vector<8x64xf32>
    %245 = arith.select %242, %239, %244 : vector<8x64xi1>, vector<8x64xf32>
    %246 = vector.shape_cast %230 : vector<1x64xi1> to vector<1x64xi1>
    %247 = vector.broadcast %246 : vector<1x64xi1> to vector<8x64xi1>
    %248 = arith.select %247, %240, %245 : vector<8x64xi1>, vector<8x64xf32>
    %c0_99 = arith.constant 0 : index
    %c384_100 = arith.constant 384 : index
    %249 = vector.load %arg6[%c0_99, %c384_100] : memref<64x640xbf16, #tpu.memory_space<vmem>>, vector<64x64xbf16>
    %250 = arith.truncf %248 : vector<8x64xf32> to vector<8x64xbf16>
    %cst_101 = arith.constant dense<0.000000e+00> : vector<8x64xf32>
    %251 = tpu.matmul %250, %249, %cst_101 {dimension_numbers = #tpu.dot_dimension_numbers<[1], [0], [0], [1], [0, 0, 1, 1], [], []>} : vector<8x64xbf16>, vector<64x64xbf16>, vector<8x64xf32> -> vector<8x64xf32>
    %c0_102 = arith.constant 0 : index
    %c6784 = arith.constant 6784 : index
    %252 = vector.load %arg8[%c0_102, %c6784] : memref<1x7680xf32, #tpu.memory_space<vmem>>, vector<1x64xf32>
    %253 = vector.broadcast %252 : vector<1x64xf32> to vector<8x64xf32>
    %254 = arith.addf %251, %253 : vector<8x64xf32>
    %255 = vector.extract_strided_slice %254 {offsets = [0, 0], sizes = [8, 32], strides = [1, 1]} : vector<8x64xf32> to vector<8x32xf32>
    %cst_103 = arith.constant dense<0.000000e+00> : vector<8xf32>
    %256 = vector.multi_reduction <add>, %255, %cst_103 [1] : vector<8x32xf32> to vector<8xf32>
    %257 = vector.shape_cast %256 : vector<8xf32> to vector<8x1xf32>
    %cst_104 = arith.constant 3.200000e+01 : f32
    %258 = vector.broadcast %cst_104 : f32 to vector<8x1xf32>
    %259 = arith.divf %257, %258 : vector<8x1xf32>
    %260 = vector.extract_strided_slice %254 {offsets = [0, 32], sizes = [8, 32], strides = [1, 1]} : vector<8x64xf32> to vector<8x32xf32>
    %cst_105 = arith.constant dense<0.000000e+00> : vector<8xf32>
    %261 = vector.multi_reduction <add>, %260, %cst_105 [1] : vector<8x32xf32> to vector<8xf32>
    %262 = vector.shape_cast %261 : vector<8xf32> to vector<8x1xf32>
    %cst_106 = arith.constant 3.200000e+01 : f32
    %263 = vector.broadcast %cst_106 : f32 to vector<8x1xf32>
    %264 = arith.divf %262, %263 : vector<8x1xf32>
    %265 = vector.shape_cast %230 : vector<1x64xi1> to vector<1x64xi1>
    %266 = vector.broadcast %265 : vector<1x64xi1> to vector<8x64xi1>
    %267 = vector.shape_cast %259 : vector<8x1xf32> to vector<8x1xf32>
    %268 = vector.broadcast %267 : vector<8x1xf32> to vector<8x64xf32>
    %269 = vector.shape_cast %264 : vector<8x1xf32> to vector<8x1xf32>
    %270 = vector.broadcast %269 : vector<8x1xf32> to vector<8x64xf32>
    %271 = arith.select %266, %268, %270 : vector<8x64xi1>, vector<8x64xf32>
    %272 = arith.subf %254, %271 : vector<8x64xf32>
    %273 = vector.extract_strided_slice %272 {offsets = [0, 0], sizes = [8, 32], strides = [1, 1]} : vector<8x64xf32> to vector<8x32xf32>
    %274 = arith.mulf %273, %273 : vector<8x32xf32>
    %cst_107 = arith.constant dense<0.000000e+00> : vector<8xf32>
    %275 = vector.multi_reduction <add>, %274, %cst_107 [1] : vector<8x32xf32> to vector<8xf32>
    %276 = vector.shape_cast %275 : vector<8xf32> to vector<8x1xf32>
    %cst_108 = arith.constant 3.200000e+01 : f32
    %277 = vector.broadcast %cst_108 : f32 to vector<8x1xf32>
    %278 = arith.divf %276, %277 : vector<8x1xf32>
    %279 = vector.extract_strided_slice %272 {offsets = [0, 32], sizes = [8, 32], strides = [1, 1]} : vector<8x64xf32> to vector<8x32xf32>
    %280 = arith.mulf %279, %279 : vector<8x32xf32>
    %cst_109 = arith.constant dense<0.000000e+00> : vector<8xf32>
    %281 = vector.multi_reduction <add>, %280, %cst_109 [1] : vector<8x32xf32> to vector<8xf32>
    %282 = vector.shape_cast %281 : vector<8xf32> to vector<8x1xf32>
    %cst_110 = arith.constant 3.200000e+01 : f32
    %283 = vector.broadcast %cst_110 : f32 to vector<8x1xf32>
    %284 = arith.divf %282, %283 : vector<8x1xf32>
    %285 = vector.shape_cast %230 : vector<1x64xi1> to vector<1x64xi1>
    %286 = vector.broadcast %285 : vector<1x64xi1> to vector<8x64xi1>
    %287 = vector.shape_cast %278 : vector<8x1xf32> to vector<8x1xf32>
    %288 = vector.broadcast %287 : vector<8x1xf32> to vector<8x64xf32>
    %289 = vector.shape_cast %284 : vector<8x1xf32> to vector<8x1xf32>
    %290 = vector.broadcast %289 : vector<8x1xf32> to vector<8x64xf32>
    %291 = arith.select %286, %288, %290 : vector<8x64xi1>, vector<8x64xf32>
    %cst_111 = arith.constant 9.99999974E-6 : f32
    %292 = vector.broadcast %cst_111 : f32 to vector<8x64xf32>
    %293 = arith.addf %291, %292 : vector<8x64xf32>
    %294 = math.rsqrt %293 : vector<8x64xf32>
    %295 = arith.mulf %272, %294 : vector<8x64xf32>
    %296 = vector.broadcast %2 : vector<1x64xf32> to vector<8x64xf32>
    %297 = arith.mulf %295, %296 : vector<8x64xf32>
    %298 = vector.broadcast %3 : vector<1x64xf32> to vector<8x64xf32>
    %299 = arith.addf %297, %298 : vector<8x64xf32>
    %300 = math.tanh %299 : vector<8x64xf32>
    %cst_112 = arith.constant 0.000000e+00 : f32
    %301 = vector.broadcast %cst_112 : f32 to vector<8x64xf32>
    %302 = arith.cmpf ogt, %299, %301 : vector<8x64xf32>
    %cst_113 = arith.constant 0.00999999977 : f32
    %303 = vector.broadcast %cst_113 : f32 to vector<8x64xf32>
    %304 = arith.mulf %303, %299 : vector<8x64xf32>
    %305 = arith.select %302, %299, %304 : vector<8x64xi1>, vector<8x64xf32>
    %306 = vector.shape_cast %230 : vector<1x64xi1> to vector<1x64xi1>
    %307 = vector.broadcast %306 : vector<1x64xi1> to vector<8x64xi1>
    %308 = arith.select %307, %300, %305 : vector<8x64xi1>, vector<8x64xf32>
    %c0_114 = arith.constant 0 : index
    %c512_115 = arith.constant 512 : index
    %309 = vector.load %arg6[%c0_114, %c512_115] : memref<64x640xbf16, #tpu.memory_space<vmem>>, vector<64x8xbf16>
    %310 = arith.truncf %308 : vector<8x64xf32> to vector<8x64xbf16>
    %cst_116 = arith.constant dense<0.000000e+00> : vector<8x8xf32>
    %311 = tpu.matmul %310, %309, %cst_116 {dimension_numbers = #tpu.dot_dimension_numbers<[1], [0], [0], [1], [0, 0, 1, 1], [], []>} : vector<8x64xbf16>, vector<64x8xbf16>, vector<8x8xf32> -> vector<8x8xf32>
    %c0_117 = arith.constant 0 : index
    %c7168 = arith.constant 7168 : index
    %312 = vector.load %arg8[%c0_117, %c7168] : memref<1x7680xf32, #tpu.memory_space<vmem>>, vector<1x8xf32>
    %313 = vector.broadcast %312 : vector<1x8xf32> to vector<8x8xf32>
    %314 = arith.addf %311, %313 : vector<8x8xf32>
    %315 = tpu.iota {dimensions = array<i32: 1>} : vector<1x8xi32>
    %c2_i32 = arith.constant 2 : i32
    %316 = vector.broadcast %c2_i32 : i32 to vector<1x8xi32>
    %317 = arith.cmpi slt, %315, %316 : vector<1x8xi32>
    %318 = arith.negf %314 : vector<8x8xf32>
    %319 = math.exp %318 : vector<8x8xf32>
    %cst_118 = arith.constant 1.000000e+00 : f32
    %320 = vector.broadcast %cst_118 : f32 to vector<8x8xf32>
    %321 = arith.addf %320, %319 : vector<8x8xf32>
    %322 = arith.divf %320, %321 : vector<8x8xf32>
    %323 = vector.shape_cast %317 : vector<1x8xi1> to vector<1x8xi1>
    %324 = vector.broadcast %323 : vector<1x8xi1> to vector<8x8xi1>
    %325 = arith.select %324, %322, %314 : vector<8x8xi1>, vector<8x8xf32>
    %c0_119 = arith.constant 0 : index
    %c5760 = arith.constant 5760 : index
    %326 = vector.load %arg5[%c0_119, %c5760] : memref<32x6144xbf16, #tpu.memory_space<vmem>>, vector<32x378xbf16>
    %327 = arith.truncf %196 : vector<8x32xf32> to vector<8x32xbf16>
    %cst_120 = arith.constant dense<0.000000e+00> : vector<8x378xf32>
    %328 = tpu.matmul %327, %326, %cst_120 {dimension_numbers = #tpu.dot_dimension_numbers<[1], [0], [0], [1], [0, 0, 1, 1], [], []>} : vector<8x32xbf16>, vector<32x378xbf16>, vector<8x378xf32> -> vector<8x378xf32>
    %c0_121 = arith.constant 0 : index
    %c7296 = arith.constant 7296 : index
    %329 = vector.load %arg8[%c0_121, %c7296] : memref<1x7680xf32, #tpu.memory_space<vmem>>, vector<1x378xf32>
    %330 = vector.broadcast %329 : vector<1x378xf32> to vector<8x378xf32>
    %331 = arith.addf %328, %330 : vector<8x378xf32>
    %c0_122 = arith.constant 0 : index
    %c0_123 = arith.constant 0 : index
    %332 = vector.load %arg9[%c0_122, %c0_123] : memref<8x1152xf32, #tpu.memory_space<vmem>>, vector<8x144xf32>
    tpu.vector_store %arg9[%c0_122, %c0_123], %206 {strides = array<i32>} : memref<8x1152xf32, #tpu.memory_space<vmem>>, vector<8x144xf32>,
    %c0_124 = arith.constant 0 : index
    %c256_125 = arith.constant 256 : index
    %333 = vector.load %arg9[%c0_124, %c256_125] : memref<8x1152xf32, #tpu.memory_space<vmem>>, vector<8x32xf32>
    tpu.vector_store %arg9[%c0_124, %c256_125], %140 {strides = array<i32>} : memref<8x1152xf32, #tpu.memory_space<vmem>>, vector<8x32xf32>,
    %c0_126 = arith.constant 0 : index
    %c384_127 = arith.constant 384 : index
    %334 = vector.load %arg9[%c0_126, %c384_127] : memref<8x1152xf32, #tpu.memory_space<vmem>>, vector<8x132xf32>
    tpu.vector_store %arg9[%c0_126, %c384_127], %227 {strides = array<i32>} : memref<8x1152xf32, #tpu.memory_space<vmem>>, vector<8x132xf32>,
    %c0_128 = arith.constant 0 : index
    %c640_129 = arith.constant 640 : index
    %335 = vector.load %arg9[%c0_128, %c640_129] : memref<8x1152xf32, #tpu.memory_space<vmem>>, vector<8x8xf32>
    tpu.vector_store %arg9[%c0_128, %c640_129], %325 {strides = array<i32>} : memref<8x1152xf32, #tpu.memory_space<vmem>>, vector<8x8xf32>,
    %c0_130 = arith.constant 0 : index
    %c768_131 = arith.constant 768 : index
    %336 = vector.load %arg9[%c0_130, %c768_131] : memref<8x1152xf32, #tpu.memory_space<vmem>>, vector<8x378xf32>
    tpu.vector_store %arg9[%c0_130, %c768_131], %331 {strides = array<i32>} : memref<8x1152xf32, #tpu.memory_space<vmem>>, vector<8x378xf32>,
    return
  }
  func.func @transform_0(%arg0: i32) -> (i32, i32) {
    %c0_i32 = arith.constant 0 : i32
    %c0_i32_0 = arith.constant 0 : i32
    return %arg0, %c0_i32 : i32, i32
  }
  func.func @transform_1(%arg0: i32) -> (i32, i32) {
    %c0_i32 = arith.constant 0 : i32
    %c0_i32_0 = arith.constant 0 : i32
    return %arg0, %c0_i32 : i32, i32
  }
  func.func @transform_2(%arg0: i32) -> (i32, i32) {
    %c0_i32 = arith.constant 0 : i32
    %c0_i32_0 = arith.constant 0 : i32
    return %arg0, %c0_i32 : i32, i32
  }
  func.func @transform_3(%arg0: i32) -> (i32, i32) {
    %c0_i32 = arith.constant 0 : i32
    %c0_i32_0 = arith.constant 0 : i32
    %c0_i32_1 = arith.constant 0 : i32
    return %c0_i32, %c0_i32_0 : i32, i32
  }
  func.func @transform_4(%arg0: i32) -> (i32, i32) {
    %c0_i32 = arith.constant 0 : i32
    %c0_i32_0 = arith.constant 0 : i32
    %c0_i32_1 = arith.constant 0 : i32
    return %c0_i32, %c0_i32_0 : i32, i32
  }
  func.func @transform_5(%arg0: i32) -> (i32, i32) {
    %c0_i32 = arith.constant 0 : i32
    %c0_i32_0 = arith.constant 0 : i32
    %c0_i32_1 = arith.constant 0 : i32
    return %c0_i32, %c0_i32_0 : i32, i32
  }
  func.func @transform_6(%arg0: i32) -> (i32, i32) {
    %c0_i32 = arith.constant 0 : i32
    %c0_i32_0 = arith.constant 0 : i32
    %c0_i32_1 = arith.constant 0 : i32
    return %c0_i32, %c0_i32_0 : i32, i32
  }
  func.func @transform_7(%arg0: i32) -> (i32, i32) {
    %c0_i32 = arith.constant 0 : i32
    %c0_i32_0 = arith.constant 0 : i32
    %c0_i32_1 = arith.constant 0 : i32
    return %c0_i32, %c0_i32_0 : i32, i32
  }
  func.func @transform_8(%arg0: i32) -> (i32, i32) {
    %c0_i32 = arith.constant 0 : i32
    %c0_i32_0 = arith.constant 0 : i32
    return %arg0, %c0_i32 : i32, i32
  }
  func.func @transform_9(%arg0: i32) -> (i32, i32) {
    %c0_i32 = arith.constant 0 : i32
    %c0_i32_0 = arith.constant 0 : i32
    return %arg0, %c0_i32 : i32, i32
  }
}

</mosaic_0001>

<llo_original>
// kernel: osdnet_forward.1
$region0: #{osdnet_forward.1}
  #allocation0 [shape = 'u32[]', space=smem, size = 0x4, offset = 0x4, fixed_abs, tag = 'smem constant byte address 0x4 - core index']
  #allocation1 [shape = 'u32[72,128]{1,0:T(1,128)}', space=vmem, size = 0x9000, scoped, tag = 'internal scratch']
  %s0 = inlined_call_operand.vmem [shape: bf16[8,4408], index: 0, kind: input, shape index: {}]
  %s1 = inlined_call_operand.vmem [shape: f32[8,32], index: 1, kind: input, shape index: {}]
  %s2 = inlined_call_operand.vmem [shape: bf16[8,73], index: 2, kind: input, shape index: {}]
  %s3 = inlined_call_operand.hbm [shape: bf16[4408,128], index: 3, kind: input, shape index: {}]
  %s4 = inlined_call_operand.hbm [shape: bf16[32,6144], index: 4, kind: input, shape index: {}]
  %s5 = inlined_call_operand.hbm [shape: bf16[64,640], index: 5, kind: input, shape index: {}]
  %s6 = inlined_call_operand.vmem [shape: bf16[73,64], index: 6, kind: input, shape index: {}]
  %s7 = inlined_call_operand.hbm [shape: f32[1,7680], index: 7, kind: input, shape index: {}]
  %s8 = inlined_call_operand.vmem [shape: f32[8,1152], index: 8, kind: output, shape index: {0}]
  %s9 = inlined_call_operand.vmem [shape: f32[8,4356], index: 9, kind: output, shape index: {1}]
  %10 = xla_tuple %s8, %s9
  %s11 = sld [smem:[#allocation0]]
  $region66: #{osdnet_forward.1} parent=0
    _
  %s13 = ssub.s32 1, %s11
  %s14 = scalar_select 0, %s13, %s11
  $region1: #{osdnet_forward.1} parent=0
    #allocation2 [shape = 'u8[1128448]{0}', space=vmem, size = 0x113800, scoped, tag = 'input window, operand 3, single buffered']
    #allocation3 [shape = 's32[1]{0}', space=sflag, size = 0x4, scoped, tag = 'scoped memory for osdnet_forward.1']
    #allocation4 [shape = 'u8[393216]{0}', space=vmem, size = 0x60000, scoped, tag = 'input window, operand 4, single buffered']
    #allocation5 [shape = 's32[1]{0}', space=sflag, size = 0x4, scoped, tag = 'scoped memory for osdnet_forward.1']
    #allocation6 [shape = 'u8[81920]{0}', space=vmem, size = 0x14000, scoped, tag = 'input window, operand 5, single buffered']
    #allocation7 [shape = 'u8[30720]{0}', space=vmem, size = 0x7800, scoped, tag = 'input window, operand 7, single buffered']
    #allocation8 [shape = 's32[1]{0}', space=sflag, size = 0x4, scoped, tag = 'scoped memory for osdnet_forward.1']
    %15 = vsyncpa [#allocation3], 0
    %16 = vsyncpa [#allocation5], 0
    %17 = vsyncpa [#allocation8], 0
    // Predicated region
    $region2: #{osdnet_forward.1} parent=1 // pred_check
      _
    $region3: #{osdnet_forward.1} parent=1 // pred_check_branch
      %19 = sbr.rel (0) target = $region5
    $region4: #{osdnet_forward.1} parent=1 // pred_region
      _
    $region5: #{osdnet_forward.1} parent=1 // pred_fallthru
      _
    // Predicated region
    $region6: #{osdnet_forward.1} parent=1 // pred_check
      _
    $region7: #{osdnet_forward.1} parent=1 // pred_check_branch
      %21 = sbr.rel (0) target = $region9
    $region8: #{osdnet_forward.1} parent=1 // pred_region
      _
    $region9: #{osdnet_forward.1} parent=1 // pred_fallthru
      _
    // Predicated region
    $region10: #{osdnet_forward.1} parent=1 // pred_check
      _
    $region11: #{osdnet_forward.1} parent=1 // pred_check_branch
      %23 = sbr.rel (0) target = $region13
    $region12: #{osdnet_forward.1} parent=1 // pred_region
      _
    $region13: #{osdnet_forward.1} parent=1 // pred_fallthru
      _
    // Predicated region
    $region14: #{osdnet_forward.1} parent=1 // pred_check
      _
    $region15: #{osdnet_forward.1} parent=1 // pred_check_branch
      %25 = sbr.rel (0) target = $region17
    $region16: #{osdnet_forward.1} parent=1 // pred_region
      %27 = vsyncadd [#allocation3], 0
      %s28 = sshll.u32 %s3, 4
      %s29 = int_to_ptr.hbm [resolvable:$true] %s28
      %s30 = sshll.u32 [#allocation2], 4
      %s31 = int_to_ptr.vmem [resolvable:$true] %s30
      %36 = dma.hbm_to_vmem [thread:$0]  %s29, 35264, %s31, [#allocation3], 64, 64, 4
    $region17: #{osdnet_forward.1} parent=1 // pred_fallthru
      _
    // Predicated region
    $region18: #{osdnet_forward.1} parent=1 // pred_check
      _
    $region19: #{osdnet_forward.1} parent=1 // pred_check_branch
      %38 = sbr.rel (0) target = $region21
    $region20: #{osdnet_forward.1} parent=1 // pred_region
      %40 = vsyncadd [#allocation5], 0
      %s41 = sshll.u32 %s4, 4
      %s42 = int_to_ptr.hbm [resolvable:$true] %s41
      %s43 = sshll.u32 [#allocation4], 4
      %s44 = int_to_ptr.vmem [resolvable:$true] %s43
      %49 = dma.hbm_to_vmem [thread:$0]  %s42, 12288, %s44, [#allocation5], 3072, 3072, 192
    $region21: #{osdnet_forward.1} parent=1 // pred_fallthru
      _
    // Predicated region
    $region22: #{osdnet_forward.1} parent=1 // pred_check
      _
    $region23: #{osdnet_forward.1} parent=1 // pred_check_branch
      %51 = sbr.rel (0) target = $region25
    $region24: #{osdnet_forward.1} parent=1 // pred_region
      %53 = vsyncadd [#allocation5], 0
      %s54 = sshll.u32 %s5, 4
      %s55 = int_to_ptr.hbm [resolvable:$true] %s54
      %s56 = sshll.u32 [#allocation6], 4
      %s57 = int_to_ptr.vmem [resolvable:$true] %s56
      %62 = dma.hbm_to_vmem [thread:$0]  %s55, 2560, %s57, [#allocation5], 320, 320, 20
    $region25: #{osdnet_forward.1} parent=1 // pred_fallthru
      _
    // Predicated region
    $region26: #{osdnet_forward.1} parent=1 // pred_check
      _
    $region27: #{osdnet_forward.1} parent=1 // pred_check_branch
      %64 = sbr.rel (0) target = $region29
    $region28: #{osdnet_forward.1} parent=1 // pred_region
      _
    $region29: #{osdnet_forward.1} parent=1 // pred_fallthru
      _
    // Predicated region
    $region30: #{osdnet_forward.1} parent=1 // pred_check
      _
    $region31: #{osdnet_forward.1} parent=1 // pred_check_branch
      %66 = sbr.rel (0) target = $region33
    $region32: #{osdnet_forward.1} parent=1 // pred_region
      %68 = vsyncadd [#allocation8], 0
      %s70 = sshll.u32 %s7, 4
      %s71 = int_to_ptr.hbm [resolvable:$true] %s70
      %s72 = sshll.u32 [#allocation7], 4
      %s73 = int_to_ptr.vmem [resolvable:$true] %s72
      %75 = dma.hbm_to_vmem [thread:$0]  %s71, 960, %s73, [#allocation8]
    $region33: #{osdnet_forward.1} parent=1 // pred_fallthru
      _
    // Predicated region
    $region34: #{osdnet_forward.1} parent=1 // pred_check
      _
    $region35: #{osdnet_forward.1} parent=1 // pred_check_branch
      %77 = sbr.rel (0) target = $region37
    $region36: #{osdnet_forward.1} parent=1 // pred_region
      %79 = dma.done [#allocation3], 35264
    $region37: #{osdnet_forward.1} parent=1 // pred_fallthru
      _
    // Predicated region
    $region38: #{osdnet_forward.1} parent=1 // pred_check
      _
    $region39: #{osdnet_forward.1} parent=1 // pred_check_branch
      %81 = sbr.rel (0) target = $region41
    $region40: #{osdnet_forward.1} parent=1 // pred_region
      %83 = dma.done [#allocation5], 12288
    $region41: #{osdnet_forward.1} parent=1 // pred_fallthru
      _
    // Predicated region
    $region42: #{osdnet_forward.1} parent=1 // pred_check
      _
    $region43: #{osdnet_forward.1} parent=1 // pred_check_branch
      %85 = sbr.rel (0) target = $region45
    $region44: #{osdnet_forward.1} parent=1 // pred_region
      %87 = dma.done [#allocation5], 2560
    $region45: #{osdnet_forward.1} parent=1 // pred_fallthru
      _
    // Predicated region
    $region46: #{osdnet_forward.1} parent=1 // pred_check
      _
    $region47: #{osdnet_forward.1} parent=1 // pred_check_branch
      %89 = sbr.rel (0) target = $region49
    $region48: #{osdnet_forward.1} parent=1 // pred_region
      %91 = dma.done [#allocation8], 960
    $region49: #{osdnet_forward.1} parent=1 // pred_fallthru
      _
    %v93 = vld [vmem:[#allocation7 + $0x3] sm:$0x1]
    %v94 = vld [vmem:[#allocation7 + $0x4] sm:$0x1]
    %v95 = vld [vmem:[#allocation7 + $0x36] sm:$0x1]
    %v96 = vld [vmem:[#allocation7 + $0x37] sm:$0x1]
    %97 = vst [vmem:[%s8] sm:$0xff] 0.0
    %98 = vst [vmem:[%s8 + $0x8] sm:$0xff] 0.0
    %99 = vst [vmem:[%s8 + $0x10] sm:$0xff] 0.0
    %100 = vst [vmem:[%s8 + $0x18] sm:$0xff] 0.0
    %101 = vst [vmem:[%s8 + $0x20] sm:$0xff] 0.0
    %102 = vst [vmem:[%s8 + $0x28] sm:$0xff] 0.0
    %103 = vst [vmem:[%s8 + $0x30] sm:$0xff] 0.0
    %104 = vst [vmem:[%s8 + $0x38] sm:$0xff] 0.0
    %105 = vst [vmem:[%s8 + $0x40] sm:$0xff] 0.0
    %v106 = vld [vmem:[%s0] sm:$0xff]
    %v107 = vld [vmem:[%s0 + $0x8] sm:$0xff]
    %v108 = vld [vmem:[%s0 + $0x10] sm:$0xff]
    %v109 = vld [vmem:[%s0 + $0x18] sm:$0xff]
    %v110 = vld [vmem:[%s0 + $0x20] sm:$0xff]
    %v111 = vld [vmem:[%s0 + $0x28] sm:$0xff]
    %v112 = vld [vmem:[%s0 + $0x30] sm:$0xff]
    %v113 = vld [vmem:[%s0 + $0x38] sm:$0xff]
    %v114 = vld [vmem:[%s0 + $0x40] sm:$0xff]
    %v115 = vld [vmem:[%s0 + $0x48] sm:$0xff]
    %v116 = vld [vmem:[%s0 + $0x50] sm:$0xff]
    %v117 = vld [vmem:[%s0 + $0x58] sm:$0xff]
    %v118 = vld [vmem:[%s0 + $0x60] sm:$0xff]
    %v119 = vld [vmem:[%s0 + $0x68] sm:$0xff]
    %v120 = vld [vmem:[%s0 + $0x70] sm:$0xff]
    %v121 = vld [vmem:[%s0 + $0x78] sm:$0xff]
    %v122 = vld [vmem:[%s0 + $0x80] sm:$0xff]
    %v123 = vld [vmem:[%s0 + $0x88] sm:$0xf]
    %v124 = vld [vmem:[%s1] sm:$0xff]
    %v125 = vld [vmem:[%s2] sm:$0xf]
    %v126 = vld [vmem:[#allocation2] sm:$0xf]
    %v127 = vld [vmem:[#allocation2 + $0x4] sm:$0xf]
    %v128 = vld [vmem:[#allocation2 + $0x8] sm:$0xf]
    %v129 = vld [vmem:[#allocation2 + $0xc] sm:$0xf]
    %v130 = vld [vmem:[#allocation2 + $0x10] sm:$0xf]
    %v131 = vld [vmem:[#allocation2 + $0x14] sm:$0xf]
    %v132 = vld [vmem:[#allocation2 + $0x18] sm:$0xf]
    %v133 = vld [vmem:[#allocation2 + $0x1c] sm:$0xf]
    %v134 = vld [vmem:[#allocation2 + $0x20] sm:$0xf]
    %v135 = vld [vmem:[#allocation2 + $0x24] sm:$0xf]
    %v136 = vld [vmem:[#allocation2 + $0x28] sm:$0xf]
    %v137 = vld [vmem:[#allocation2 + $0x2c] sm:$0xf]
    %v138 = vld [vmem:[#allocation2 + $0x30] sm:$0xf]
    %v139 = vld [vmem:[#allocation2 + $0x34] sm:$0xf]
    %v140 = vld [vmem:[#allocation2 + $0x38] sm:$0xf]
    %v141 = vld [vmem:[#allocation2 + $0x3c] sm:$0xf]
    %v142 = vld [vmem:[#allocation2 + $0x40] sm:$0xf]
    %v143 = vld [vmem:[#allocation2 + $0x44] sm:$0xf]
    %v144 = vld [vmem:[#allocation2 + $0x48] sm:$0xf]
    %v145 = vld [vmem:[#allocation2 + $0x4c] sm:$0xf]
    %v146 = vld [vmem:[#allocation2 + $0x50] sm:$0xf]
    %v147 = vld [vmem:[#allocation2 + $0x54] sm:$0xf]
    %v148 = vld [vmem:[#allocation2 + $0x58] sm:$0xf]
    %v149 = vld [vmem:[#allocation2 + $0x5c] sm:$0xf]
    %v150 = vld [vmem:[#allocation2 + $0x60] sm:$0xf]
    %v151 = vld [vmem:[#allocation2 + $0x64] sm:$0xf]
    %v152 = vld [vmem:[#allocation2 + $0x68] sm:$0xf]
    %v153 = vld [vmem:[#allocation2 + $0x6c] sm:$0xf]
    %v154 = vld [vmem:[#allocation2 + $0x70] sm:$0xf]
    %v155 = vld [vmem:[#allocation2 + $0x74] sm:$0xf]
    %v156 = vld [vmem:[#allocation2 + $0x78] sm:$0xf]
    %v157 = vld [vmem:[#allocation2 + $0x7c] sm:$0xf]
    %v158 = vld [vmem:[#allocation2 + $0x80] sm:$0xf]
    %v159 = vld [vmem:[#allocation2 + $0x84] sm:$0xf]
    %v160 = vld [vmem:[#allocation2 + $0x88] sm:$0xf]
    %v161 = vld [vmem:[#allocation2 + $0x8c] sm:$0xf]
    %v162 = vld [vmem:[#allocation2 + $0x90] sm:$0xf]
    %v163 = vld [vmem:[#allocation2 + $0x94] sm:$0xf]
    %v164 = vld [vmem:[#allocation2 + $0x98] sm:$0xf]
    %v165 = vld [vmem:[#allocation2 + $0x9c] sm:$0xf]
    %v166 = vld [vmem:[#allocation2 + $0xa0] sm:$0xf]
    %v167 = vld [vmem:[#allocation2 + $0xa4] sm:$0xf]
    %v168 = vld [vmem:[#allocation2 + $0xa8] sm:$0xf]
    %v169 = vld [vmem:[#allocation2 + $0xac] sm:$0xf]
    %v170 = vld [vmem:[#allocation2 + $0xb0] sm:$0xf]
    %v171 = vld [vmem:[#allocation2 + $0xb4] sm:$0xf]
    %v172 = vld [vmem:[#allocation2 + $0xb8] sm:$0xf]
    %v173 = vld [vmem:[#allocation2 + $0xbc] sm:$0xf]
    %v174 = vld [vmem:[#allocation2 + $0xc0] sm:$0xf]
    %v175 = vld [vmem:[#allocation2 + $0xc4] sm:$0xf]
    %v176 = vld [vmem:[#allocation2 + $0xc8] sm:$0xf]
    %v177 = vld [vmem:[#allocation2 + $0xcc] sm:$0xf]
    %v178 = vld [vmem:[#allocation2 + $0xd0] sm:$0xf]
    %v179 = vld [vmem:[#allocation2 + $0xd4] sm:$0xf]
    %v180 = vld [vmem:[#allocation2 + $0xd8] sm:$0xf]
    %v181 = vld [vmem:[#allocation2 + $0xdc] sm:$0xf]
    %v182 = vld [vmem:[#allocation2 + $0xe0] sm:$0xf]
    %v183 = vld [vmem:[#allocation2 + $0xe4] sm:$0xf]
    %v184 = vld [vmem:[#allocation2 + $0xe8] sm:$0xf]
    %v185 = vld [vmem:[#allocation2 + $0xec] sm:$0xf]
    %v186 = vld [vmem:[#allocation2 + $0xf0] sm:$0xf]
    %v187 = vld [vmem:[#allocation2 + $0xf4] sm:$0xf]
    %v188 = vld [vmem:[#allocation2 + $0xf8] sm:$0xf]
    %v189 = vld [vmem:[#allocation2 + $0xfc] sm:$0xf]
    %v190 = vld [vmem:[#allocation2 + $0x100] sm:$0xf]
    %v191 = vld [vmem:[#allocation2 + $0x104] sm:$0xf]
    %v192 = vld [vmem:[#allocation2 + $0x108] sm:$0xf]
    %v193 = vld [vmem:[#allocation2 + $0x10c] sm:$0xf]
    %v194 = vld [vmem:[#allocation2 + $0x110] sm:$0xf]
    %v195 = vld [vmem:[#allocation2 + $0x114] sm:$0xf]
    %v196 = vld [vmem:[#allocation2 + $0x118] sm:$0xf]
    %v197 = vld [vmem:[#allocation2 + $0x11c] sm:$0xf]
    %v198 = vld [vmem:[#allocation2 + $0x120] sm:$0xf]
    %v199 = vld [vmem:[#allocation2 + $0x124] sm:$0xf]
    %v200 = vld [vmem:[#allocation2 + $0x128] sm:$0xf]
    %v201 = vld [vmem:[#allocation2 + $0x12c] sm:$0xf]
    %v202 = vld [vmem:[#allocation2 + $0x130] sm:$0xf]
    %v203 = vld [vmem:[#allocation2 + $0x134] sm:$0xf]
    %v204 = vld [vmem:[#allocation2 + $0x138] sm:$0xf]
    %v205 = vld [vmem:[#allocation2 + $0x13c] sm:$0xf]
    %v206 = vld [vmem:[#allocation2 + $0x140] sm:$0xf]
    %v207 = vld [vmem:[#allocation2 + $0x144] sm:$0xf]
    %v208 = vld [vmem:[#allocation2 + $0x148] sm:$0xf]
    %v209 = vld [vmem:[#allocation2 + $0x14c] sm:$0xf]
    %v210 = vld [vmem:[#allocation2 + $0x150] sm:$0xf]
    %v211 = vld [vmem:[#allocation2 + $0x154] sm:$0xf]
    %v212 = vld [vmem:[#allocation2 + $0x158] sm:$0xf]
    %v213 = vld [vmem:[#allocation2 + $0x15c] sm:$0xf]
    %v214 = vld [vmem:[#allocation2 + $0x160] sm:$0xf]
    %v215 = vld [vmem:[#allocation2 + $0x164] sm:$0xf]
    %v216 = vld [vmem:[#allocation2 + $0x168] sm:$0xf]
    %v217 = vld [vmem:[#allocation2 + $0x16c] sm:$0xf]
    %v218 = vld [vmem:[#allocation2 + $0x170] sm:$0xf]
    %v219 = vld [vmem:[#allocation2 + $0x174] sm:$0xf]
    %v220 = vld [vmem:[#allocation2 + $0x178] sm:$0xf]
    %v221 = vld [vmem:[#allocation2 + $0x17c] sm:$0xf]
    %v222 = vld [vmem:[#allocation2 + $0x180] sm:$0xf]
    %v223 = vld [vmem:[#allocation2 + $0x184] sm:$0xf]
    %v224 = vld [vmem:[#allocation2 + $0x188] sm:$0xf]
    %v225 = vld [vmem:[#allocation2 + $0x18c] sm:$0xf]
    %v226 = vld [vmem:[#allocation2 + $0x190] sm:$0xf]
    %v227 = vld [vmem:[#allocation2 + $0x194] sm:$0xf]
    %v228 = vld [vmem:[#allocation2 + $0x198] sm:$0xf]
    %v229 = vld [vmem:[#allocation2 + $0x19c] sm:$0xf]
    %v230 = vld [vmem:[#allocation2 + $0x1a0] sm:$0xf]
    %v231 = vld [vmem:[#allocation2 + $0x1a4] sm:$0xf]
    %v232 = vld [vmem:[#allocation2 + $0x1a8] sm:$0xf]
    %v233 = vld [vmem:[#allocation2 + $0x1ac] sm:$0xf]
    %v234 = vld [vmem:[#allocation2 + $0x1b0] sm:$0xf]
    %v235 = vld [vmem:[#allocation2 + $0x1b4] sm:$0xf]
    %v236 = vld [vmem:[#allocation2 + $0x1b8] sm:$0xf]
    %v237 = vld [vmem:[#allocation2 + $0x1bc] sm:$0xf]
    %v238 = vld [vmem:[#allocation2 + $0x1c0] sm:$0xf]
    %v239 = vld [vmem:[#allocation2 + $0x1c4] sm:$0xf]
    %v240 = vld [vmem:[#allocation2 + $0x1c8] sm:$0xf]
    %v241 = vld [vmem:[#allocation2 + $0x1cc] sm:$0xf]
    %v242 = vld [vmem:[#allocation2 + $0x1d0] sm:$0xf]
    %v243 = vld [vmem:[#allocation2 + $0x1d4] sm:$0xf]
    %v244 = vld [vmem:[#allocation2 + $0x1d8] sm:$0xf]
    %v245 = vld [vmem:[#allocation2 + $0x1dc] sm:$0xf]
    %v246 = vld [vmem:[#allocation2 + $0x1e0] sm:$0xf]
    %v247 = vld [vmem:[#allocation2 + $0x1e4] sm:$0xf]
    %v248 = vld [vmem:[#allocation2 + $0x1e8] sm:$0xf]
    %v249 = vld [vmem:[#allocation2 + $0x1ec] sm:$0xf]
    %v250 = vld [vmem:[#allocation2 + $0x1f0] sm:$0xf]
    %v251 = vld [vmem:[#allocation2 + $0x1f4] sm:$0xf]
    %v252 = vld [vmem:[#allocation2 + $0x1f8] sm:$0xf]
    %v253 = vld [vmem:[#allocation2 + $0x1fc] sm:$0xf]
    %v254 = vld [vmem:[#allocation2 + $0x200] sm:$0xf]
    %v255 = vld [vmem:[#allocation2 + $0x204] sm:$0xf]
    %v256 = vld [vmem:[#allocation2 + $0x208] sm:$0xf]
    %v257 = vld [vmem:[#allocation2 + $0x20c] sm:$0xf]
    %v258 = vld [vmem:[#allocation2 + $0x210] sm:$0xf]
    %v259 = vld [vmem:[#allocation2 + $0x214] sm:$0xf]
    %v260 = vld [vmem:[#allocation2 + $0x218] sm:$0xf]
    %v261 = vld [vmem:[#allocation2 + $0x21c] sm:$0xf]
    %v262 = vld [vmem:[#allocation2 + $0x220] sm:$0xf]
    %v263 = vld [vmem:[#allocation2 + $0x224] sm:$0xf]
    %v264 = vld [vmem:[#allocation2 + $0x228] sm:$0xf]
    %v265 = vld [vmem:[#allocation2 + $0x22c] sm:$0xf]
    %v266 = vld [vmem:[#allocation2 + $0x230] sm:$0xf]
    %v267 = vld [vmem:[#allocation2 + $0x234] sm:$0xf]
    %v268 = vld [vmem:[#allocation2 + $0x238] sm:$0xf]
    %v269 = vld [vmem:[#allocation2 + $0x23c] sm:$0xf]
    %v270 = vld [vmem:[#allocation2 + $0x240] sm:$0xf]
    %v271 = vld [vmem:[#allocation2 + $0x244] sm:$0xf]
    %v272 = vld [vmem:[#allocation2 + $0x248] sm:$0xf]
    %v273 = vld [vmem:[#allocation2 + $0x24c] sm:$0xf]
    %v274 = vld [vmem:[#allocation2 + $0x250] sm:$0xf]
    %v275 = vld [vmem:[#allocation2 + $0x254] sm:$0xf]
    %v276 = vld [vmem:[#allocation2 + $0x258] sm:$0xf]
    %v277 = vld [vmem:[#allocation2 + $0x25c] sm:$0xf]
    %v278 = vld [vmem:[#allocation2 + $0x260] sm:$0xf]
    %v279 = vld [vmem:[#allocation2 + $0x264] sm:$0xf]
    %v280 = vld [vmem:[#allocation2 + $0x268] sm:$0xf]
    %v281 = vld [vmem:[#allocation2 + $0x26c] sm:$0xf]
    %v282 = vld [vmem:[#allocation2 + $0x270] sm:$0xf]
    %v283 = vld [vmem:[#allocation2 + $0x274] sm:$0xf]
    %v284 = vld [vmem:[#allocation2 + $0x278] sm:$0xf]
    %v285 = vld [vmem:[#allocation2 + $0x27c] sm:$0xf]
    %v286 = vld [vmem:[#allocation2 + $0x280] sm:$0xf]
    %v287 = vld [vmem:[#allocation2 + $0x284] sm:$0xf]
    %v288 = vld [vmem:[#allocation2 + $0x288] sm:$0xf]
    %v289 = vld [vmem:[#allocation2 + $0x28c] sm:$0xf]
    %v290 = vld [vmem:[#allocation2 + $0x290] sm:$0xf]
    %v291 = vld [vmem:[#allocation2 + $0x294] sm:$0xf]
    %v292 = vld [vmem:[#allocation2 + $0x298] sm:$0xf]
    %v293 = vld [vmem:[#allocation2 + $0x29c] sm:$0xf]
    %v294 = vld [vmem:[#allocation2 + $0x2a0] sm:$0xf]
    %v295 = vld [vmem:[#allocation2 + $0x2a4] sm:$0xf]
    %v296 = vld [vmem:[#allocation2 + $0x2a8] sm:$0xf]
    %v297 = vld [vmem:[#allocation2 + $0x2ac] sm:$0xf]
    %v298 = vld [vmem:[#allocation2 + $0x2b0] sm:$0xf]
    %v299 = vld [vmem:[#allocation2 + $0x2b4] sm:$0xf]
    %v300 = vld [vmem:[#allocation2 + $0x2b8] sm:$0xf]
    %v301 = vld [vmem:[#allocation2 + $0x2bc] sm:$0xf]
    %v302 = vld [vmem:[#allocation2 + $0x2c0] sm:$0xf]
    %v303 = vld [vmem:[#allocation2 + $0x2c4] sm:$0xf]
    %v304 = vld [vmem:[#allocation2 + $0x2c8] sm:$0xf]
    %v305 = vld [vmem:[#allocation2 + $0x2cc] sm:$0xf]
    %v306 = vld [vmem:[#allocation2 + $0x2d0] sm:$0xf]
    %v307 = vld [vmem:[#allocation2 + $0x2d4] sm:$0xf]
    %v308 = vld [vmem:[#allocation2 + $0x2d8] sm:$0xf]
    %v309 = vld [vmem:[#allocation2 + $0x2dc] sm:$0xf]
    %v310 = vld [vmem:[#allocation2 + $0x2e0] sm:$0xf]
    %v311 = vld [vmem:[#allocation2 + $0x2e4] sm:$0xf]
    %v312 = vld [vmem:[#allocation2 + $0x2e8] sm:$0xf]
    %v313 = vld [vmem:[#allocation2 + $0x2ec] sm:$0xf]
    %v314 = vld [vmem:[#allocation2 + $0x2f0] sm:$0xf]
    %v315 = vld [vmem:[#allocation2 + $0x2f4] sm:$0xf]
    %v316 = vld [vmem:[#allocation2 + $0x2f8] sm:$0xf]
    %v317 = vld [vmem:[#allocation2 + $0x2fc] sm:$0xf]
    %v318 = vld [vmem:[#allocation2 + $0x300] sm:$0xf]
    %v319 = vld [vmem:[#allocation2 + $0x304] sm:$0xf]
    %v320 = vld [vmem:[#allocation2 + $0x308] sm:$0xf]
    %v321 = vld [vmem:[#allocation2 + $0x30c] sm:$0xf]
    %v322 = vld [vmem:[#allocation2 + $0x310] sm:$0xf]
    %v323 = vld [vmem:[#allocation2 + $0x314] sm:$0xf]
    %v324 = vld [vmem:[#allocation2 + $0x318] sm:$0xf]
    %v325 = vld [vmem:[#allocation2 + $0x31c] sm:$0xf]
    %v326 = vld [vmem:[#allocation2 + $0x320] sm:$0xf]
    %v327 = vld [vmem:[#allocation2 + $0x324] sm:$0xf]
    %v328 = vld [vmem:[#allocation2 + $0x328] sm:$0xf]
    %v329 = vld [vmem:[#allocation2 + $0x32c] sm:$0xf]
    %v330 = vld [vmem:[#allocation2 + $0x330] sm:$0xf]
    %v331 = vld [vmem:[#allocation2 + $0x334] sm:$0xf]
    %v332 = vld [vmem:[#allocation2 + $0x338] sm:$0xf]
    %v333 = vld [vmem:[#allocation2 + $0x33c] sm:$0xf]
    %v334 = vld [vmem:[#allocation2 + $0x340] sm:$0xf]
    %v335 = vld [vmem:[#allocation2 + $0x344] sm:$0xf]
    %v336 = vld [vmem:[#allocation2 + $0x348] sm:$0xf]
    %v337 = vld [vmem:[#allocation2 + $0x34c] sm:$0xf]
    %v338 = vld [vmem:[#allocation2 + $0x350] sm:$0xf]
    %v339 = vld [vmem:[#allocation2 + $0x354] sm:$0xf]
    %v340 = vld [vmem:[#allocation2 + $0x358] sm:$0xf]
    %v341 = vld [vmem:[#allocation2 + $0x35c] sm:$0xf]
    %v342 = vld [vmem:[#allocation2 + $0x360] sm:$0xf]
    %v343 = vld [vmem:[#allocation2 + $0x364] sm:$0xf]
    %v344 = vld [vmem:[#allocation2 + $0x368] sm:$0xf]
    %v345 = vld [vmem:[#allocation2 + $0x36c] sm:$0xf]
    %v346 = vld [vmem:[#allocation2 + $0x370] sm:$0xf]
    %v347 = vld [vmem:[#allocation2 + $0x374] sm:$0xf]
    %v348 = vld [vmem:[#allocation2 + $0x378] sm:$0xf]
    %v349 = vld [vmem:[#allocation2 + $0x37c] sm:$0xf]
    %v350 = vld [vmem:[#allocation2 + $0x380] sm:$0xf]
    %v351 = vld [vmem:[#allocation2 + $0x384] sm:$0xf]
    %v352 = vld [vmem:[#allocation2 + $0x388] sm:$0xf]
    %v353 = vld [vmem:[#allocation2 + $0x38c] sm:$0xf]
    %v354 = vld [vmem:[#allocation2 + $0x390] sm:$0xf]
    %v355 = vld [vmem:[#allocation2 + $0x394] sm:$0xf]
    %v356 = vld [vmem:[#allocation2 + $0x398] sm:$0xf]
    %v357 = vld [vmem:[#allocation2 + $0x39c] sm:$0xf]
    %v358 = vld [vmem:[#allocation2 + $0x3a0] sm:$0xf]
    %v359 = vld [vmem:[#allocation2 + $0x3a4] sm:$0xf]
    %v360 = vld [vmem:[#allocation2 + $0x3a8] sm:$0xf]
    %v361 = vld [vmem:[#allocation2 + $0x3ac] sm:$0xf]
    %v362 = vld [vmem:[#allocation2 + $0x3b0] sm:$0xf]
    %v363 = vld [vmem:[#allocation2 + $0x3b4] sm:$0xf]
    %v364 = vld [vmem:[#allocation2 + $0x3b8] sm:$0xf]
    %v365 = vld [vmem:[#allocation2 + $0x3bc] sm:$0xf]
    %v366 = vld [vmem:[#allocation2 + $0x3c0] sm:$0xf]
    %v367 = vld [vmem:[#allocation2 + $0x3c4] sm:$0xf]
    %v368 = vld [vmem:[#allocation2 + $0x3c8] sm:$0xf]
    %v369 = vld [vmem:[#allocation2 + $0x3cc] sm:$0xf]
    %v370 = vld [vmem:[#allocation2 + $0x3d0] sm:$0xf]
    %v371 = vld [vmem:[#allocation2 + $0x3d4] sm:$0xf]
    %v372 = vld [vmem:[#allocation2 + $0x3d8] sm:$0xf]
    %v373 = vld [vmem:[#allocation2 + $0x3dc] sm:$0xf]
    %v374 = vld [vmem:[#allocation2 + $0x3e0] sm:$0xf]
    %v375 = vld [vmem:[#allocation2 + $0x3e4] sm:$0xf]
    %v376 = vld [vmem:[#allocation2 + $0x3e8] sm:$0xf]
    %v377 = vld [vmem:[#allocation2 + $0x3ec] sm:$0xf]
    %v378 = vld [vmem:[#allocation2 + $0x3f0] sm:$0xf]
    %v379 = vld [vmem:[#allocation2 + $0x3f4] sm:$0xf]
    %v380 = vld [vmem:[#allocation2 + $0x3f8] sm:$0xf]
    %v381 = vld [vmem:[#allocation2 + $0x3fc] sm:$0xf]
    %v382 = vld [vmem:[#allocation2 + $0x400] sm:$0xf]
    %v383 = vld [vmem:[#allocation2 + $0x404] sm:$0xf]
    %v384 = vld [vmem:[#allocation2 + $0x408] sm:$0xf]
    %v385 = vld [vmem:[#allocation2 + $0x40c] sm:$0xf]
    %v386 = vld [vmem:[#allocation2 + $0x410] sm:$0xf]
    %v387 = vld [vmem:[#allocation2 + $0x414] sm:$0xf]
    %v388 = vld [vmem:[#allocation2 + $0x418] sm:$0xf]
    %v389 = vld [vmem:[#allocation2 + $0x41c] sm:$0xf]
    %v390 = vld [vmem:[#allocation2 + $0x420] sm:$0xf]
    %v391 = vld [vmem:[#allocation2 + $0x424] sm:$0xf]
    %v392 = vld [vmem:[#allocation2 + $0x428] sm:$0xf]
    %v393 = vld [vmem:[#allocation2 + $0x42c] sm:$0xf]
    %v394 = vld [vmem:[#allocation2 + $0x430] sm:$0xf]
    %v395 = vld [vmem:[#allocation2 + $0x434] sm:$0xf]
    %v396 = vld [vmem:[#allocation2 + $0x438] sm:$0xf]
    %v397 = vld [vmem:[#allocation2 + $0x43c] sm:$0xf]
    %v398 = vld [vmem:[#allocation2 + $0x440] sm:$0xf]
    %v399 = vld [vmem:[#allocation2 + $0x444] sm:$0xf]
    %v400 = vld [vmem:[#allocation2 + $0x448] sm:$0xf]
    %v401 = vld [vmem:[#allocation2 + $0x44c] sm:$0xf]
    %v402 = vld [vmem:[#allocation2 + $0x450] sm:$0xf]
    %v403 = vld [vmem:[#allocation2 + $0x454] sm:$0xf]
    %v404 = vld [vmem:[#allocation2 + $0x458] sm:$0xf]
    %v405 = vld [vmem:[#allocation2 + $0x45c] sm:$0xf]
    %v406 = vld [vmem:[#allocation2 + $0x460] sm:$0xf]
    %v407 = vld [vmem:[#allocation2 + $0x464] sm:$0xf]
    %v408 = vld [vmem:[#allocation2 + $0x468] sm:$0xf]
    %v409 = vld [vmem:[#allocation2 + $0x46c] sm:$0xf]
    %v410 = vld [vmem:[#allocation2 + $0x470] sm:$0xf]
    %v411 = vld [vmem:[#allocation2 + $0x474] sm:$0xf]
    %v412 = vld [vmem:[#allocation2 + $0x478] sm:$0xf]
    %v413 = vld [vmem:[#allocation2 + $0x47c] sm:$0xf]
    %v414 = vld [vmem:[#allocation2 + $0x480] sm:$0xf]
    %v415 = vld [vmem:[#allocation2 + $0x484] sm:$0xf]
    %v416 = vld [vmem:[#allocation2 + $0x488] sm:$0xf]
    %v417 = vld [vmem:[#allocation2 + $0x48c] sm:$0xf]
    %v418 = vld [vmem:[#allocation2 + $0x490] sm:$0xf]
    %v419 = vld [vmem:[#allocation2 + $0x494] sm:$0xf]
    %v420 = vld [vmem:[#allocation2 + $0x498] sm:$0xf]
    %v421 = vld [vmem:[#allocation2 + $0x49c] sm:$0xf]
    %v422 = vld [vmem:[#allocation2 + $0x4a0] sm:$0xf]
    %v423 = vld [vmem:[#allocation2 + $0x4a4] sm:$0xf]
    %v424 = vld [vmem:[#allocation2 + $0x4a8] sm:$0xf]
    %v425 = vld [vmem:[#allocation2 + $0x4ac] sm:$0xf]
    %v426 = vld [vmem:[#allocation2 + $0x4b0] sm:$0xf]
    %v427 = vld [vmem:[#allocation2 + $0x4b4] sm:$0xf]
    %v428 = vld [vmem:[#allocation2 + $0x4b8] sm:$0xf]
    %v429 = vld [vmem:[#allocation2 + $0x4bc] sm:$0xf]
    %v430 = vld [vmem:[#allocation2 + $0x4c0] sm:$0xf]
    %v431 = vld [vmem:[#allocation2 + $0x4c4] sm:$0xf]
    %v432 = vld [vmem:[#allocation2 + $0x4c8] sm:$0xf]
    %v433 = vld [vmem:[#allocation2 + $0x4cc] sm:$0xf]
    %v434 = vld [vmem:[#allocation2 + $0x4d0] sm:$0xf]
    %v435 = vld [vmem:[#allocation2 + $0x4d4] sm:$0xf]
    %v436 = vld [vmem:[#allocation2 + $0x4d8] sm:$0xf]
    %v437 = vld [vmem:[#allocation2 + $0x4dc] sm:$0xf]
    %v438 = vld [vmem:[#allocation2 + $0x4e0] sm:$0xf]
    %v439 = vld [vmem:[#allocation2 + $0x4e4] sm:$0xf]
    %v440 = vld [vmem:[#allocation2 + $0x4e8] sm:$0xf]
    %v441 = vld [vmem:[#allocation2 + $0x4ec] sm:$0xf]
    %v442 = vld [vmem:[#allocation2 + $0x4f0] sm:$0xf]
    %v443 = vld [vmem:[#allocation2 + $0x4f4] sm:$0xf]
    %v444 = vld [vmem:[#allocation2 + $0x4f8] sm:$0xf]
    %v445 = vld [vmem:[#allocation2 + $0x4fc] sm:$0xf]
    %v446 = vld [vmem:[#allocation2 + $0x500] sm:$0xf]
    %v447 = vld [vmem:[#allocation2 + $0x504] sm:$0xf]
    %v448 = vld [vmem:[#allocation2 + $0x508] sm:$0xf]
    %v449 = vld [vmem:[#allocation2 + $0x50c] sm:$0xf]
    %v450 = vld [vmem:[#allocation2 + $0x510] sm:$0xf]
    %v451 = vld [vmem:[#allocation2 + $0x514] sm:$0xf]
    %v452 = vld [vmem:[#allocation2 + $0x518] sm:$0xf]
    %v453 = vld [vmem:[#allocation2 + $0x51c] sm:$0xf]
    %v454 = vld [vmem:[#allocation2 + $0x520] sm:$0xf]
    %v455 = vld [vmem:[#allocation2 + $0x524] sm:$0xf]
    %v456 = vld [vmem:[#allocation2 + $0x528] sm:$0xf]
    %v457 = vld [vmem:[#allocation2 + $0x52c] sm:$0xf]
    %v458 = vld [vmem:[#allocation2 + $0x530] sm:$0xf]
    %v459 = vld [vmem:[#allocation2 + $0x534] sm:$0xf]
    %v460 = vld [vmem:[#allocation2 + $0x538] sm:$0xf]
    %v461 = vld [vmem:[#allocation2 + $0x53c] sm:$0xf]
    %v462 = vld [vmem:[#allocation2 + $0x540] sm:$0xf]
    %v463 = vld [vmem:[#allocation2 + $0x544] sm:$0xf]
    %v464 = vld [vmem:[#allocation2 + $0x548] sm:$0xf]
    %v465 = vld [vmem:[#allocation2 + $0x54c] sm:$0xf]
    %v466 = vld [vmem:[#allocation2 + $0x550] sm:$0xf]
    %v467 = vld [vmem:[#allocation2 + $0x554] sm:$0xf]
    %v468 = vld [vmem:[#allocation2 + $0x558] sm:$0xf]
    %v469 = vld [vmem:[#allocation2 + $0x55c] sm:$0xf]
    %v470 = vld [vmem:[#allocation2 + $0x560] sm:$0xf]
    %v471 = vld [vmem:[#allocation2 + $0x564] sm:$0xf]
    %v472 = vld [vmem:[#allocation2 + $0x568] sm:$0xf]
    %v473 = vld [vmem:[#allocation2 + $0x56c] sm:$0xf]
    %v474 = vld [vmem:[#allocation2 + $0x570] sm:$0xf]
    %v475 = vld [vmem:[#allocation2 + $0x574] sm:$0xf]
    %v476 = vld [vmem:[#allocation2 + $0x578] sm:$0xf]
    %v477 = vld [vmem:[#allocation2 + $0x57c] sm:$0xf]
    %v478 = vld [vmem:[#allocation2 + $0x580] sm:$0xf]
    %v479 = vld [vmem:[#allocation2 + $0x584] sm:$0xf]
    %v480 = vld [vmem:[#allocation2 + $0x588] sm:$0xf]
    %v481 = vld [vmem:[#allocation2 + $0x58c] sm:$0xf]
    %v482 = vld [vmem:[#allocation2 + $0x590] sm:$0xf]
    %v483 = vld [vmem:[#allocation2 + $0x594] sm:$0xf]
    %v484 = vld [vmem:[#allocation2 + $0x598] sm:$0xf]
    %v485 = vld [vmem:[#allocation2 + $0x59c] sm:$0xf]
    %v486 = vld [vmem:[#allocation2 + $0x5a0] sm:$0xf]
    %v487 = vld [vmem:[#allocation2 + $0x5a4] sm:$0xf]
    %v488 = vld [vmem:[#allocation2 + $0x5a8] sm:$0xf]
    %v489 = vld [vmem:[#allocation2 + $0x5ac] sm:$0xf]
    %v490 = vld [vmem:[#allocation2 + $0x5b0] sm:$0xf]
    %v491 = vld [vmem:[#allocation2 + $0x5b4] sm:$0xf]
    %v492 = vld [vmem:[#allocation2 + $0x5b8] sm:$0xf]
    %v493 = vld [vmem:[#allocation2 + $0x5bc] sm:$0xf]
    %v494 = vld [vmem:[#allocation2 + $0x5c0] sm:$0xf]
    %v495 = vld [vmem:[#allocation2 + $0x5c4] sm:$0xf]
    %v496 = vld [vmem:[#allocation2 + $0x5c8] sm:$0xf]
    %v497 = vld [vmem:[#allocation2 + $0x5cc] sm:$0xf]
    %v498 = vld [vmem:[#allocation2 + $0x5d0] sm:$0xf]
    %v499 = vld [vmem:[#allocation2 + $0x5d4] sm:$0xf]
    %v500 = vld [vmem:[#allocation2 + $0x5d8] sm:$0xf]
    %v501 = vld [vmem:[#allocation2 + $0x5dc] sm:$0xf]
    %v502 = vld [vmem:[#allocation2 + $0x5e0] sm:$0xf]
    %v503 = vld [vmem:[#allocation2 + $0x5e4] sm:$0xf]
    %v504 = vld [vmem:[#allocation2 + $0x5e8] sm:$0xf]
    %v505 = vld [vmem:[#allocation2 + $0x5ec] sm:$0xf]
    %v506 = vld [vmem:[#allocation2 + $0x5f0] sm:$0xf]
    %v507 = vld [vmem:[#allocation2 + $0x5f4] sm:$0xf]
    %v508 = vld [vmem:[#allocation2 + $0x5f8] sm:$0xf]
    %v509 = vld [vmem:[#allocation2 + $0x5fc] sm:$0xf]
    %v510 = vld [vmem:[#allocation2 + $0x600] sm:$0xf]
    %v511 = vld [vmem:[#allocation2 + $0x604] sm:$0xf]
    %v512 = vld [vmem:[#allocation2 + $0x608] sm:$0xf]
    %v513 = vld [vmem:[#allocation2 + $0x60c] sm:$0xf]
    %v514 = vld [vmem:[#allocation2 + $0x610] sm:$0xf]
    %v515 = vld [vmem:[#allocation2 + $0x614] sm:$0xf]
    %v516 = vld [vmem:[#allocation2 + $0x618] sm:$0xf]
    %v517 = vld [vmem:[#allocation2 + $0x61c] sm:$0xf]
    %v518 = vld [vmem:[#allocation2 + $0x620] sm:$0xf]
    %v519 = vld [vmem:[#allocation2 + $0x624] sm:$0xf]
    %v520 = vld [vmem:[#allocation2 + $0x628] sm:$0xf]
    %v521 = vld [vmem:[#allocation2 + $0x62c] sm:$0xf]
    %v522 = vld [vmem:[#allocation2 + $0x630] sm:$0xf]
    %v523 = vld [vmem:[#allocation2 + $0x634] sm:$0xf]
    %v524 = vld [vmem:[#allocation2 + $0x638] sm:$0xf]
    %v525 = vld [vmem:[#allocation2 + $0x63c] sm:$0xf]
    %v526 = vld [vmem:[#allocation2 + $0x640] sm:$0xf]
    %v527 = vld [vmem:[#allocation2 + $0x644] sm:$0xf]
    %v528 = vld [vmem:[#allocation2 + $0x648] sm:$0xf]
    %v529 = vld [vmem:[#allocation2 + $0x64c] sm:$0xf]
    %v530 = vld [vmem:[#allocation2 + $0x650] sm:$0xf]
    %v531 = vld [vmem:[#allocation2 + $0x654] sm:$0xf]
    %v532 = vld [vmem:[#allocation2 + $0x658] sm:$0xf]
    %v533 = vld [vmem:[#allocation2 + $0x65c] sm:$0xf]
    %v534 = vld [vmem:[#allocation2 + $0x660] sm:$0xf]
    %v535 = vld [vmem:[#allocation2 + $0x664] sm:$0xf]
    %v536 = vld [vmem:[#allocation2 + $0x668] sm:$0xf]
    %v537 = vld [vmem:[#allocation2 + $0x66c] sm:$0xf]
    %v538 = vld [vmem:[#allocation2 + $0x670] sm:$0xf]
    %v539 = vld [vmem:[#allocation2 + $0x674] sm:$0xf]
    %v540 = vld [vmem:[#allocation2 + $0x678] sm:$0xf]
    %v541 = vld [vmem:[#allocation2 + $0x67c] sm:$0xf]
    %v542 = vld [vmem:[#allocation2 + $0x680] sm:$0xf]
    %v543 = vld [vmem:[#allocation2 + $0x684] sm:$0xf]
    %v544 = vld [vmem:[#allocation2 + $0x688] sm:$0xf]
    %v545 = vld [vmem:[#allocation2 + $0x68c] sm:$0xf]
    %v546 = vld [vmem:[#allocation2 + $0x690] sm:$0xf]
    %v547 = vld [vmem:[#allocation2 + $0x694] sm:$0xf]
    %v548 = vld [vmem:[#allocation2 + $0x698] sm:$0xf]
    %v549 = vld [vmem:[#allocation2 + $0x69c] sm:$0xf]
    %v550 = vld [vmem:[#allocation2 + $0x6a0] sm:$0xf]
    %v551 = vld [vmem:[#allocation2 + $0x6a4] sm:$0xf]
    %v552 = vld [vmem:[#allocation2 + $0x6a8] sm:$0xf]
    %v553 = vld [vmem:[#allocation2 + $0x6ac] sm:$0xf]
    %v554 = vld [vmem:[#allocation2 + $0x6b0] sm:$0xf]
    %v555 = vld [vmem:[#allocation2 + $0x6b4] sm:$0xf]
    %v556 = vld [vmem:[#allocation2 + $0x6b8] sm:$0xf]
    %v557 = vld [vmem:[#allocation2 + $0x6bc] sm:$0xf]
    %v558 = vld [vmem:[#allocation2 + $0x6c0] sm:$0xf]
    %v559 = vld [vmem:[#allocation2 + $0x6c4] sm:$0xf]
    %v560 = vld [vmem:[#allocation2 + $0x6c8] sm:$0xf]
    %v561 = vld [vmem:[#allocation2 + $0x6cc] sm:$0xf]
    %v562 = vld [vmem:[#allocation2 + $0x6d0] sm:$0xf]
    %v563 = vld [vmem:[#allocation2 + $0x6d4] sm:$0xf]
    %v564 = vld [vmem:[#allocation2 + $0x6d8] sm:$0xf]
    %v565 = vld [vmem:[#allocation2 + $0x6dc] sm:$0xf]
    %v566 = vld [vmem:[#allocation2 + $0x6e0] sm:$0xf]
    %v567 = vld [vmem:[#allocation2 + $0x6e4] sm:$0xf]
    %v568 = vld [vmem:[#allocation2 + $0x6e8] sm:$0xf]
    %v569 = vld [vmem:[#allocation2 + $0x6ec] sm:$0xf]
    %v570 = vld [vmem:[#allocation2 + $0x6f0] sm:$0xf]
    %v571 = vld [vmem:[#allocation2 + $0x6f4] sm:$0xf]
    %v572 = vld [vmem:[#allocation2 + $0x6f8] sm:$0xf]
    %v573 = vld [vmem:[#allocation2 + $0x6fc] sm:$0xf]
    %v574 = vld [vmem:[#allocation2 + $0x700] sm:$0xf]
    %v575 = vld [vmem:[#allocation2 + $0x704] sm:$0xf]
    %v576 = vld [vmem:[#allocation2 + $0x708] sm:$0xf]
    %v577 = vld [vmem:[#allocation2 + $0x70c] sm:$0xf]
    %v578 = vld [vmem:[#allocation2 + $0x710] sm:$0xf]
    %v579 = vld [vmem:[#allocation2 + $0x714] sm:$0xf]
    %v580 = vld [vmem:[#allocation2 + $0x718] sm:$0xf]
    %v581 = vld [vmem:[#allocation2 + $0x71c] sm:$0xf]
    %v582 = vld [vmem:[#allocation2 + $0x720] sm:$0xf]
    %v583 = vld [vmem:[#allocation2 + $0x724] sm:$0xf]
    %v584 = vld [vmem:[#allocation2 + $0x728] sm:$0xf]
    %v585 = vld [vmem:[#allocation2 + $0x72c] sm:$0xf]
    %v586 = vld [vmem:[#allocation2 + $0x730] sm:$0xf]
    %v587 = vld [vmem:[#allocation2 + $0x734] sm:$0xf]
    %v588 = vld [vmem:[#allocation2 + $0x738] sm:$0xf]
    %v589 = vld [vmem:[#allocation2 + $0x73c] sm:$0xf]
    %v590 = vld [vmem:[#allocation2 + $0x740] sm:$0xf]
    %v591 = vld [vmem:[#allocation2 + $0x744] sm:$0xf]
    %v592 = vld [vmem:[#allocation2 + $0x748] sm:$0xf]
    %v593 = vld [vmem:[#allocation2 + $0x74c] sm:$0xf]
    %v594 = vld [vmem:[#allocation2 + $0x750] sm:$0xf]
    %v595 = vld [vmem:[#allocation2 + $0x754] sm:$0xf]
    %v596 = vld [vmem:[#allocation2 + $0x758] sm:$0xf]
    %v597 = vld [vmem:[#allocation2 + $0x75c] sm:$0xf]
    %v598 = vld [vmem:[#allocation2 + $0x760] sm:$0xf]
    %v599 = vld [vmem:[#allocation2 + $0x764] sm:$0xf]
    %v600 = vld [vmem:[#allocation2 + $0x768] sm:$0xf]
    %v601 = vld [vmem:[#allocation2 + $0x76c] sm:$0xf]
    %v602 = vld [vmem:[#allocation2 + $0x770] sm:$0xf]
    %v603 = vld [vmem:[#allocation2 + $0x774] sm:$0xf]
    %v604 = vld [vmem:[#allocation2 + $0x778] sm:$0xf]
    %v605 = vld [vmem:[#allocation2 + $0x77c] sm:$0xf]
    %v606 = vld [vmem:[#allocation2 + $0x780] sm:$0xf]
    %v607 = vld [vmem:[#allocation2 + $0x784] sm:$0xf]
    %v608 = vld [vmem:[#allocation2 + $0x788] sm:$0xf]
    %v609 = vld [vmem:[#allocation2 + $0x78c] sm:$0xf]
    %v610 = vld [vmem:[#allocation2 + $0x790] sm:$0xf]
    %v611 = vld [vmem:[#allocation2 + $0x794] sm:$0xf]
    %v612 = vld [vmem:[#allocation2 + $0x798] sm:$0xf]
    %v613 = vld [vmem:[#allocation2 + $0x79c] sm:$0xf]
    %v614 = vld [vmem:[#allocation2 + $0x7a0] sm:$0xf]
    %v615 = vld [vmem:[#allocation2 + $0x7a4] sm:$0xf]
    %v616 = vld [vmem:[#allocation2 + $0x7a8] sm:$0xf]
    %v617 = vld [vmem:[#allocation2 + $0x7ac] sm:$0xf]
    %v618 = vld [vmem:[#allocation2 + $0x7b0] sm:$0xf]
    %v619 = vld [vmem:[#allocation2 + $0x7b4] sm:$0xf]
    %v620 = vld [vmem:[#allocation2 + $0x7b8] sm:$0xf]
    %v621 = vld [vmem:[#allocation2 + $0x7bc] sm:$0xf]
    %v622 = vld [vmem:[#allocation2 + $0x7c0] sm:$0xf]
    %v623 = vld [vmem:[#allocation2 + $0x7c4] sm:$0xf]
    %v624 = vld [vmem:[#allocation2 + $0x7c8] sm:$0xf]
    %v625 = vld [vmem:[#allocation2 + $0x7cc] sm:$0xf]
    %v626 = vld [vmem:[#allocation2 + $0x7d0] sm:$0xf]
    %v627 = vld [vmem:[#allocation2 + $0x7d4] sm:$0xf]
    %v628 = vld [vmem:[#allocation2 + $0x7d8] sm:$0xf]
    %v629 = vld [vmem:[#allocation2 + $0x7dc] sm:$0xf]
    %v630 = vld [vmem:[#allocation2 + $0x7e0] sm:$0xf]
    %v631 = vld [vmem:[#allocation2 + $0x7e4] sm:$0xf]
    %v632 = vld [vmem:[#allocation2 + $0x7e8] sm:$0xf]
    %v633 = vld [vmem:[#allocation2 + $0x7ec] sm:$0xf]
    %v634 = vld [vmem:[#allocation2 + $0x7f0] sm:$0xf]
    %v635 = vld [vmem:[#allocation2 + $0x7f4] sm:$0xf]
    %v636 = vld [vmem:[#allocation2 + $0x7f8] sm:$0xf]
    %v637 = vld [vmem:[#allocation2 + $0x7fc] sm:$0xf]
    %v638 = vld [vmem:[#allocation2 + $0x800] sm:$0xf]
    %v639 = vld [vmem:[#allocation2 + $0x804] sm:$0xf]
    %v640 = vld [vmem:[#allocation2 + $0x808] sm:$0xf]
    %v641 = vld [vmem:[#allocation2 + $0x80c] sm:$0xf]
    %v642 = vld [vmem:[#allocation2 + $0x810] sm:$0xf]
    %v643 = vld [vmem:[#allocation2 + $0x814] sm:$0xf]
    %v644 = vld [vmem:[#allocation2 + $0x818] sm:$0xf]
    %v645 = vld [vmem:[#allocation2 + $0x81c] sm:$0xf]
    %v646 = vld [vmem:[#allocation2 + $0x820] sm:$0xf]
    %v647 = vld [vmem:[#allocation2 + $0x824] sm:$0xf]
    %v648 = vld [vmem:[#allocation2 + $0x828] sm:$0xf]
    %v649 = vld [vmem:[#allocation2 + $0x82c] sm:$0xf]
    %v650 = vld [vmem:[#allocation2 + $0x830] sm:$0xf]
    %v651 = vld [vmem:[#allocation2 + $0x834] sm:$0xf]
    %v652 = vld [vmem:[#allocation2 + $0x838] sm:$0xf]
    %v653 = vld [vmem:[#allocation2 + $0x83c] sm:$0xf]
    %v654 = vld [vmem:[#allocation2 + $0x840] sm:$0xf]
    %v655 = vld [vmem:[#allocation2 + $0x844] sm:$0xf]
    %v656 = vld [vmem:[#allocation2 + $0x848] sm:$0xf]
    %v657 = vld [vmem:[#allocation2 + $0x84c] sm:$0xf]
    %v658 = vld [vmem:[#allocation2 + $0x850] sm:$0xf]
    %v659 = vld [vmem:[#allocation2 + $0x854] sm:$0xf]
    %v660 = vld [vmem:[#allocation2 + $0x858] sm:$0xf]
    %v661 = vld [vmem:[#allocation2 + $0x85c] sm:$0xf]
    %v662 = vld [vmem:[#allocation2 + $0x860] sm:$0xf]
    %v663 = vld [vmem:[#allocation2 + $0x864] sm:$0xf]
    %v664 = vld [vmem:[#allocation2 + $0x868] sm:$0xf]
    %v665 = vld [vmem:[#allocation2 + $0x86c] sm:$0xf]
    %v666 = vld [vmem:[#allocation2 + $0x870] sm:$0xf]
    %v667 = vld [vmem:[#allocation2 + $0x874] sm:$0xf]
    %v668 = vld [vmem:[#allocation2 + $0x878] sm:$0xf]
    %v669 = vld [vmem:[#allocation2 + $0x87c] sm:$0xf]
    %v670 = vld [vmem:[#allocation2 + $0x880] sm:$0xf]
    %v671 = vld [vmem:[#allocation2 + $0x884] sm:$0xf]
    %v672 = vld [vmem:[#allocation2 + $0x888] sm:$0xf]
    %v673 = vld [vmem:[#allocation2 + $0x88c] sm:$0xf]
    %v674 = vld [vmem:[#allocation2 + $0x890] sm:$0xf]
    %v675 = vld [vmem:[#allocation2 + $0x894] sm:$0xf]
    %v676 = vld [vmem:[#allocation2 + $0x898] sm:$0xf]
    %v677 = vld [vmem:[#allocation7] sm:$0x1]
    %v679 = vperm.slane %v677, 0
    %v699 = vunpack.c.l.b16 %v106
    %v700 = vunpack.c.h.b16 %v106
    %v701 = vunpack.c.l.b16 %v107
    %v702 = vunpack.c.h.b16 %v107
    %v703 = vunpack.c.l.b16 %v108
    %v704 = vunpack.c.h.b16 %v108
    %v705 = vunpack.c.l.b16 %v109
    %v706 = vunpack.c.h.b16 %v109
    %v707 = vunpack.c.l.b16 %v110
    %v708 = vunpack.c.h.b16 %v110
    %v709 = vunpack.c.l.b16 %v111
    %v710 = vunpack.c.h.b16 %v111
    %v711 = vunpack.c.l.b16 %v112
    %v712 = vunpack.c.h.b16 %v112
    %v713 = vunpack.c.l.b16 %v113
    %v714 = vunpack.c.h.b16 %v113
    %v715 = vunpack.c.l.b16 %v114
    %v716 = vunpack.c.h.b16 %v114
    %v717 = vunpack.c.l.b16 %v115
    %v718 = vunpack.c.h.b16 %v115
    %v719 = vunpack.c.l.b16 %v116
    %v720 = vunpack.c.h.b16 %v116
    %v721 = vunpack.c.l.b16 %v117
    %v722 = vunpack.c.h.b16 %v117
    %v723 = vunpack.c.l.b16 %v118
    %v724 = vunpack.c.h.b16 %v118
    %v725 = vunpack.c.l.b16 %v119
    %v726 = vunpack.c.h.b16 %v119
    %v727 = vunpack.c.l.b16 %v120
    %v728 = vunpack.c.h.b16 %v120
    %v729 = vunpack.c.l.b16 %v121
    %v730 = vunpack.c.h.b16 %v121
    %v731 = vunpack.c.l.b16 %v122
    %v732 = vunpack.c.h.b16 %v122
    %v733 = vunpack.c.l.b16 %v123
    %v734 = vpack.c.b16 %v699, %v699
    %v735 = vpack.c.b16 %v700, %v700
    %v736 = vpack.c.b16 %v701, %v701
    %v737 = vpack.c.b16 %v702, %v702
    %v738 = vpack.c.b16 %v703, %v703
    %v739 = vpack.c.b16 %v704, %v704
    %v740 = vpack.c.b16 %v705, %v705
    %v741 = vpack.c.b16 %v706, %v706
    %v742 = vpack.c.b16 %v707, %v707
    %v743 = vpack.c.b16 %v708, %v708
    %v744 = vpack.c.b16 %v709, %v709
    %v745 = vpack.c.b16 %v710, %v710
    %v746 = vpack.c.b16 %v711, %v711
    %v747 = vpack.c.b16 %v712, %v712
    %v748 = vpack.c.b16 %v713, %v713
    %v749 = vpack.c.b16 %v714, %v714
    %v750 = vpack.c.b16 %v715, %v715
    %v751 = vpack.c.b16 %v716, %v716
    %v752 = vpack.c.b16 %v717, %v717
    %v753 = vpack.c.b16 %v718, %v718
    %v754 = vpack.c.b16 %v719, %v719
    %v755 = vpack.c.b16 %v720, %v720
    %v756 = vpack.c.b16 %v721, %v721
    %v757 = vpack.c.b16 %v722, %v722
    %v758 = vpack.c.b16 %v723, %v723
    %v759 = vpack.c.b16 %v724, %v724
    %v760 = vpack.c.b16 %v725, %v725
    %v761 = vpack.c.b16 %v726, %v726
    %v762 = vpack.c.b16 %v727, %v727
    %v763 = vpack.c.b16 %v728, %v728
    %v764 = vpack.c.b16 %v729, %v729
    %v765 = vpack.c.b16 %v730, %v730
    %v766 = vpack.c.b16 %v731, %v731
    %v767 = vpack.c.b16 %v732, %v732
    %v768 = vpack.c.b16 %v733, %v733
    %v1354 = vunpack.c.l.b16 %v126
    %v1355 = vunpack.c.l.b16 %v127
    %v1356 = vunpack.c.l.b16 %v128
    %v1357 = vunpack.c.l.b16 %v129
    %v1358 = vunpack.c.l.b16 %v130
    %v1359 = vunpack.c.l.b16 %v131
    %v1360 = vunpack.c.l.b16 %v132
    %v1361 = vunpack.c.l.b16 %v133
    %v1362 = vunpack.c.l.b16 %v134
    %v1363 = vunpack.c.l.b16 %v135
    %v1364 = vunpack.c.l.b16 %v136
    %v1365 = vunpack.c.l.b16 %v137
    %v1366 = vunpack.c.l.b16 %v138
    %v1367 = vunpack.c.l.b16 %v139
    %v1368 = vunpack.c.l.b16 %v140
    %v1369 = vunpack.c.l.b16 %v141
    %v1370 = vunpack.c.l.b16 %v142
    %v1371 = vunpack.c.l.b16 %v143
    %v1372 = vunpack.c.l.b16 %v144
    %v1373 = vunpack.c.l.b16 %v145
    %v1374 = vunpack.c.l.b16 %v146
    %v1375 = vunpack.c.l.b16 %v147
    %v1376 = vunpack.c.l.b16 %v148
    %v1377 = vunpack.c.l.b16 %v149
    %v1378 = vunpack.c.l.b16 %v150
    %v1379 = vunpack.c.l.b16 %v151
    %v1380 = vunpack.c.l.b16 %v152
    %v1381 = vunpack.c.l.b16 %v153
    %v1382 = vunpack.c.l.b16 %v154
    %v1383 = vunpack.c.l.b16 %v155
    %v1384 = vunpack.c.l.b16 %v156
    %v1385 = vunpack.c.l.b16 %v157
    %v1386 = vunpack.c.l.b16 %v158
    %v1387 = vunpack.c.l.b16 %v159
    %v1388 = vunpack.c.l.b16 %v160
    %v1389 = vunpack.c.l.b16 %v161
    %v1390 = vunpack.c.l.b16 %v162
    %v1391 = vunpack.c.l.b16 %v163
    %v1392 = vunpack.c.l.b16 %v164
    %v1393 = vunpack.c.l.b16 %v165
    %v1394 = vunpack.c.l.b16 %v166
    %v1395 = vunpack.c.l.b16 %v167
    %v1396 = vunpack.c.l.b16 %v168
    %v1397 = vunpack.c.l.b16 %v169
    %v1398 = vunpack.c.l.b16 %v170
    %v1399 = vunpack.c.l.b16 %v171
    %v1400 = vunpack.c.l.b16 %v172
    %v1401 = vunpack.c.l.b16 %v173
    %v1402 = vunpack.c.l.b16 %v174
    %v1403 = vunpack.c.l.b16 %v175
    %v1404 = vunpack.c.l.b16 %v176
    %v1405 = vunpack.c.l.b16 %v177
    %v1406 = vunpack.c.l.b16 %v178
    %v1407 = vunpack.c.l.b16 %v179
    %v1408 = vunpack.c.l.b16 %v180
    %v1409 = vunpack.c.l.b16 %v181
    %v1410 = vunpack.c.l.b16 %v182
    %v1411 = vunpack.c.l.b16 %v183
    %v1412 = vunpack.c.l.b16 %v184
    %v1413 = vunpack.c.l.b16 %v185
    %v1414 = vunpack.c.l.b16 %v186
    %v1415 = vunpack.c.l.b16 %v187
    %v1416 = vunpack.c.l.b16 %v188
    %v1417 = vunpack.c.l.b16 %v189
    %v1418 = vunpack.c.l.b16 %v190
    %v1419 = vunpack.c.l.b16 %v191
    %v1420 = vunpack.c.l.b16 %v192
    %v1421 = vunpack.c.l.b16 %v193
    %v1422 = vunpack.c.l.b16 %v194
    %v1423 = vunpack.c.l.b16 %v195
    %v1424 = vunpack.c.l.b16 %v196
    %v1425 = vunpack.c.l.b16 %v197
    %v1426 = vunpack.c.l.b16 %v198
    %v1427 = vunpack.c.l.b16 %v199
    %v1428 = vunpack.c.l.b16 %v200
    %v1429 = vunpack.c.l.b16 %v201
    %v1430 = vunpack.c.l.b16 %v202
    %v1431 = vunpack.c.l.b16 %v203
    %v1432 = vunpack.c.l.b16 %v204
    %v1433 = vunpack.c.l.b16 %v205
    %v1434 = vunpack.c.l.b16 %v206
    %v1435 = vunpack.c.l.b16 %v207
    %v1436 = vunpack.c.l.b16 %v208
    %v1437 = vunpack.c.l.b16 %v209
    %v1438 = vunpack.c.l.b16 %v210
    %v1439 = vunpack.c.l.b16 %v211
    %v1440 = vunpack.c.l.b16 %v212
    %v1441 = vunpack.c.l.b16 %v213
    %v1442 = vunpack.c.l.b16 %v214
    %v1443 = vunpack.c.l.b16 %v215
    %v1444 = vunpack.c.l.b16 %v216
    %v1445 = vunpack.c.l.b16 %v217
    %v1446 = vunpack.c.l.b16 %v218
    %v1447 = vunpack.c.l.b16 %v219
    %v1448 = vunpack.c.l.b16 %v220
    %v1449 = vunpack.c.l.b16 %v221
    %v1450 = vunpack.c.l.b16 %v222
    %v1451 = vunpack.c.l.b16 %v223
    %v1452 = vunpack.c.l.b16 %v224
    %v1453 = vunpack.c.l.b16 %v225
    %v1454 = vunpack.c.l.b16 %v226
    %v1455 = vunpack.c.l.b16 %v227
    %v1456 = vunpack.c.l.b16 %v228
    %v1457 = vunpack.c.l.b16 %v229
    %v1458 = vunpack.c.l.b16 %v230
    %v1459 = vunpack.c.l.b16 %v231
    %v1460 = vunpack.c.l.b16 %v232
    %v1461 = vunpack.c.l.b16 %v233
    %v1462 = vunpack.c.l.b16 %v234
    %v1463 = vunpack.c.l.b16 %v235
    %v1464 = vunpack.c.l.b16 %v236
    %v1465 = vunpack.c.l.b16 %v237
    %v1466 = vunpack.c.l.b16 %v238
    %v1467 = vunpack.c.l.b16 %v239
    %v1468 = vunpack.c.l.b16 %v240
    %v1469 = vunpack.c.l.b16 %v241
    %v1470 = vunpack.c.l.b16 %v242
    %v1471 = vunpack.c.l.b16 %v243
    %v1472 = vunpack.c.l.b16 %v244
    %v1473 = vunpack.c.l.b16 %v245
    %v1474 = vunpack.c.l.b16 %v246
    %v1475 = vunpack.c.l.b16 %v247
    %v1476 = vunpack.c.l.b16 %v248
    %v1477 = vunpack.c.l.b16 %v249
    %v1478 = vunpack.c.l.b16 %v250
    %v1479 = vunpack.c.l.b16 %v251
    %v1480 = vunpack.c.l.b16 %v252
    %v1481 = vunpack.c.l.b16 %v253
    %v1482 = vunpack.c.l.b16 %v254
    %v1483 = vunpack.c.l.b16 %v255
    %v1484 = vunpack.c.l.b16 %v256
    %v1485 = vunpack.c.l.b16 %v257
    %v1486 = vunpack.c.l.b16 %v258
    %v1487 = vunpack.c.l.b16 %v259
    %v1488 = vunpack.c.l.b16 %v260
    %v1489 = vunpack.c.l.b16 %v261
    %v1490 = vunpack.c.l.b16 %v262
    %v1491 = vunpack.c.l.b16 %v263
    %v1492 = vunpack.c.l.b16 %v264
    %v1493 = vunpack.c.l.b16 %v265
    %v1494 = vunpack.c.l.b16 %v266
    %v1495 = vunpack.c.l.b16 %v267
    %v1496 = vunpack.c.l.b16 %v268
    %v1497 = vunpack.c.l.b16 %v269
    %v1498 = vunpack.c.l.b16 %v270
    %v1499 = vunpack.c.l.b16 %v271
    %v1500 = vunpack.c.l.b16 %v272
    %v1501 = vunpack.c.l.b16 %v273
    %v1502 = vunpack.c.l.b16 %v274
    %v1503 = vunpack.c.l.b16 %v275
    %v1504 = vunpack.c.l.b16 %v276
    %v1505 = vunpack.c.l.b16 %v277
    %v1506 = vunpack.c.l.b16 %v278
    %v1507 = vunpack.c.l.b16 %v279
    %v1508 = vunpack.c.l.b16 %v280
    %v1509 = vunpack.c.l.b16 %v281
    %v1510 = vunpack.c.l.b16 %v282
    %v1511 = vunpack.c.l.b16 %v283
    %v1512 = vunpack.c.l.b16 %v284
    %v1513 = vunpack.c.l.b16 %v285
    %v1514 = vunpack.c.l.b16 %v286
    %v1515 = vunpack.c.l.b16 %v287
    %v1516 = vunpack.c.l.b16 %v288
    %v1517 = vunpack.c.l.b16 %v289
    %v1518 = vunpack.c.l.b16 %v290
    %v1519 = vunpack.c.l.b16 %v291
    %v1520 = vunpack.c.l.b16 %v292
    %v1521 = vunpack.c.l.b16 %v293
    %v1522 = vunpack.c.l.b16 %v294
    %v1523 = vunpack.c.l.b16 %v295
    %v1524 = vunpack.c.l.b16 %v296
    %v1525 = vunpack.c.l.b16 %v297
    %v1526 = vunpack.c.l.b16 %v298
    %v1527 = vunpack.c.l.b16 %v299
    %v1528 = vunpack.c.l.b16 %v300
    %v1529 = vunpack.c.l.b16 %v301
    %v1530 = vunpack.c.l.b16 %v302
    %v1531 = vunpack.c.l.b16 %v303
    %v1532 = vunpack.c.l.b16 %v304
    %v1533 = vunpack.c.l.b16 %v305
    %v1534 = vunpack.c.l.b16 %v306
    %v1535 = vunpack.c.l.b16 %v307
    %v1536 = vunpack.c.l.b16 %v308
    %v1537 = vunpack.c.l.b16 %v309
    %v1538 = vunpack.c.l.b16 %v310
    %v1539 = vunpack.c.l.b16 %v311
    %v1540 = vunpack.c.l.b16 %v312
    %v1541 = vunpack.c.l.b16 %v313
    %v1542 = vunpack.c.l.b16 %v314
    %v1543 = vunpack.c.l.b16 %v315
    %v1544 = vunpack.c.l.b16 %v316
    %v1545 = vunpack.c.l.b16 %v317
    %v1546 = vunpack.c.l.b16 %v318
    %v1547 = vunpack.c.l.b16 %v319
    %v1548 = vunpack.c.l.b16 %v320
    %v1549 = vunpack.c.l.b16 %v321
    %v1550 = vunpack.c.l.b16 %v322
    %v1551 = vunpack.c.l.b16 %v323
    %v1552 = vunpack.c.l.b16 %v324
    %v1553 = vunpack.c.l.b16 %v325
    %v1554 = vunpack.c.l.b16 %v326
    %v1555 = vunpack.c.l.b16 %v327
    %v1556 = vunpack.c.l.b16 %v328
    %v1557 = vunpack.c.l.b16 %v329
    %v1558 = vunpack.c.l.b16 %v330
    %v1559 = vunpack.c.l.b16 %v331
    %v1560 = vunpack.c.l.b16 %v332
    %v1561 = vunpack.c.l.b16 %v333
    %v1562 = vunpack.c.l.b16 %v334
    %v1563 = vunpack.c.l.b16 %v335
    %v1564 = vunpack.c.l.b16 %v336
    %v1565 = vunpack.c.l.b16 %v337
    %v1566 = vunpack.c.l.b16 %v338
    %v1567 = vunpack.c.l.b16 %v339
    %v1568 = vunpack.c.l.b16 %v340
    %v1569 = vunpack.c.l.b16 %v341
    %v1570 = vunpack.c.l.b16 %v342
    %v1571 = vunpack.c.l.b16 %v343
    %v1572 = vunpack.c.l.b16 %v344
    %v1573 = vunpack.c.l.b16 %v345
    %v1574 = vunpack.c.l.b16 %v346
    %v1575 = vunpack.c.l.b16 %v347
    %v1576 = vunpack.c.l.b16 %v348
    %v1577 = vunpack.c.l.b16 %v349
    %v1578 = vunpack.c.l.b16 %v350
    %v1579 = vunpack.c.l.b16 %v351
    %v1580 = vunpack.c.l.b16 %v352
    %v1581 = vunpack.c.l.b16 %v353
    %v1582 = vunpack.c.l.b16 %v354
    %v1583 = vunpack.c.l.b16 %v355
    %v1584 = vunpack.c.l.b16 %v356
    %v1585 = vunpack.c.l.b16 %v357
    %v1586 = vunpack.c.l.b16 %v358
    %v1587 = vunpack.c.l.b16 %v359
    %v1588 = vunpack.c.l.b16 %v360
    %v1589 = vunpack.c.l.b16 %v361
    %v1590 = vunpack.c.l.b16 %v362
    %v1591 = vunpack.c.l.b16 %v363
    %v1592 = vunpack.c.l.b16 %v364
    %v1593 = vunpack.c.l.b16 %v365
    %v1594 = vunpack.c.l.b16 %v366
    %v1595 = vunpack.c.l.b16 %v367
    %v1596 = vunpack.c.l.b16 %v368
    %v1597 = vunpack.c.l.b16 %v369
    %v1598 = vunpack.c.l.b16 %v370
    %v1599 = vunpack.c.l.b16 %v371
    %v1600 = vunpack.c.l.b16 %v372
    %v1601 = vunpack.c.l.b16 %v373
    %v1602 = vunpack.c.l.b16 %v374
    %v1603 = vunpack.c.l.b16 %v375
    %v1604 = vunpack.c.l.b16 %v376
    %v1605 = vunpack.c.l.b16 %v377
    %v1606 = vunpack.c.l.b16 %v378
    %v1607 = vunpack.c.l.b16 %v379
    %v1608 = vunpack.c.l.b16 %v380
    %v1609 = vunpack.c.l.b16 %v381
    %v1610 = vunpack.c.l.b16 %v382
    %v1611 = vunpack.c.l.b16 %v383
    %v1612 = vunpack.c.l.b16 %v384
    %v1613 = vunpack.c.l.b16 %v385
    %v1614 = vunpack.c.l.b16 %v386
    %v1615 = vunpack.c.l.b16 %v387
    %v1616 = vunpack.c.l.b16 %v388
    %v1617 = vunpack.c.l.b16 %v389
    %v1618 = vunpack.c.l.b16 %v390
    %v1619 = vunpack.c.l.b16 %v391
    %v1620 = vunpack.c.l.b16 %v392
    %v1621 = vunpack.c.l.b16 %v393
    %v1622 = vunpack.c.l.b16 %v394
    %v1623 = vunpack.c.l.b16 %v395
    %v1624 = vunpack.c.l.b16 %v396
    %v1625 = vunpack.c.l.b16 %v397
    %v1626 = vunpack.c.l.b16 %v398
    %v1627 = vunpack.c.l.b16 %v399
    %v1628 = vunpack.c.l.b16 %v400
    %v1629 = vunpack.c.l.b16 %v401
    %v1630 = vunpack.c.l.b16 %v402
    %v1631 = vunpack.c.l.b16 %v403
    %v1632 = vunpack.c.l.b16 %v404
    %v1633 = vunpack.c.l.b16 %v405
    %v1634 = vunpack.c.l.b16 %v406
    %v1635 = vunpack.c.l.b16 %v407
    %v1636 = vunpack.c.l.b16 %v408
    %v1637 = vunpack.c.l.b16 %v409
    %v1638 = vunpack.c.l.b16 %v410
    %v1639 = vunpack.c.l.b16 %v411
    %v1640 = vunpack.c.l.b16 %v412
    %v1641 = vunpack.c.l.b16 %v413
    %v1642 = vunpack.c.l.b16 %v414
    %v1643 = vunpack.c.l.b16 %v415
    %v1644 = vunpack.c.l.b16 %v416
    %v1645 = vunpack.c.l.b16 %v417
    %v1646 = vunpack.c.l.b16 %v418
    %v1647 = vunpack.c.l.b16 %v419
    %v1648 = vunpack.c.l.b16 %v420
    %v1649 = vunpack.c.l.b16 %v421
    %v1650 = vunpack.c.l.b16 %v422
    %v1651 = vunpack.c.l.b16 %v423
    %v1652 = vunpack.c.l.b16 %v424
    %v1653 = vunpack.c.l.b16 %v425
    %v1654 = vunpack.c.l.b16 %v426
    %v1655 = vunpack.c.l.b16 %v427
    %v1656 = vunpack.c.l.b16 %v428
    %v1657 = vunpack.c.l.b16 %v429
    %v1658 = vunpack.c.l.b16 %v430
    %v1659 = vunpack.c.l.b16 %v431
    %v1660 = vunpack.c.l.b16 %v432
    %v1661 = vunpack.c.l.b16 %v433
    %v1662 = vunpack.c.l.b16 %v434
    %v1663 = vunpack.c.l.b16 %v435
    %v1664 = vunpack.c.l.b16 %v436
    %v1665 = vunpack.c.l.b16 %v437
    %v1666 = vunpack.c.l.b16 %v438
    %v1667 = vunpack.c.l.b16 %v439
    %v1668 = vunpack.c.l.b16 %v440
    %v1669 = vunpack.c.l.b16 %v441
    %v1670 = vunpack.c.l.b16 %v442
    %v1671 = vunpack.c.l.b16 %v443
    %v1672 = vunpack.c.l.b16 %v444
    %v1673 = vunpack.c.l.b16 %v445
    %v1674 = vunpack.c.l.b16 %v446
    %v1675 = vunpack.c.l.b16 %v447
    %v1676 = vunpack.c.l.b16 %v448
    %v1677 = vunpack.c.l.b16 %v449
    %v1678 = vunpack.c.l.b16 %v450
    %v1679 = vunpack.c.l.b16 %v451
    %v1680 = vunpack.c.l.b16 %v452
    %v1681 = vunpack.c.l.b16 %v453
    %v1682 = vunpack.c.l.b16 %v454
    %v1683 = vunpack.c.l.b16 %v455
    %v1684 = vunpack.c.l.b16 %v456
    %v1685 = vunpack.c.l.b16 %v457
    %v1686 = vunpack.c.l.b16 %v458
    %v1687 = vunpack.c.l.b16 %v459
    %v1688 = vunpack.c.l.b16 %v460
    %v1689 = vunpack.c.l.b16 %v461
    %v1690 = vunpack.c.l.b16 %v462
    %v1691 = vunpack.c.l.b16 %v463
    %v1692 = vunpack.c.l.b16 %v464
    %v1693 = vunpack.c.l.b16 %v465
    %v1694 = vunpack.c.l.b16 %v466
    %v1695 = vunpack.c.l.b16 %v467
    %v1696 = vunpack.c.l.b16 %v468
    %v1697 = vunpack.c.l.b16 %v469
    %v1698 = vunpack.c.l.b16 %v470
    %v1699 = vunpack.c.l.b16 %v471
    %v1700 = vunpack.c.l.b16 %v472
    %v1701 = vunpack.c.l.b16 %v473
    %v1702 = vunpack.c.l.b16 %v474
    %v1703 = vunpack.c.l.b16 %v475
    %v1704 = vunpack.c.l.b16 %v476
    %v1705 = vunpack.c.l.b16 %v477
    %v1706 = vunpack.c.l.b16 %v478
    %v1707 = vunpack.c.l.b16 %v479
    %v1708 = vunpack.c.l.b16 %v480
    %v1709 = vunpack.c.l.b16 %v481
    %v1710 = vunpack.c.l.b16 %v482
    %v1711 = vunpack.c.l.b16 %v483
    %v1712 = vunpack.c.l.b16 %v484
    %v1713 = vunpack.c.l.b16 %v485
    %v1714 = vunpack.c.l.b16 %v486
    %v1715 = vunpack.c.l.b16 %v487
    %v1716 = vunpack.c.l.b16 %v488
    %v1717 = vunpack.c.l.b16 %v489
    %v1718 = vunpack.c.l.b16 %v490
    %v1719 = vunpack.c.l.b16 %v491
    %v1720 = vunpack.c.l.b16 %v492
    %v1721 = vunpack.c.l.b16 %v493
    %v1722 = vunpack.c.l.b16 %v494
    %v1723 = vunpack.c.l.b16 %v495
    %v1724 = vunpack.c.l.b16 %v496
    %v1725 = vunpack.c.l.b16 %v497
    %v1726 = vunpack.c.l.b16 %v498
    %v1727 = vunpack.c.l.b16 %v499
    %v1728 = vunpack.c.l.b16 %v500
    %v1729 = vunpack.c.l.b16 %v501
    %v1730 = vunpack.c.l.b16 %v502
    %v1731 = vunpack.c.l.b16 %v503
    %v1732 = vunpack.c.l.b16 %v504
    %v1733 = vunpack.c.l.b16 %v505
    %v1734 = vunpack.c.l.b16 %v506
    %v1735 = vunpack.c.l.b16 %v507
    %v1736 = vunpack.c.l.b16 %v508
    %v1737 = vunpack.c.l.b16 %v509
    %v1738 = vunpack.c.l.b16 %v510
    %v1739 = vunpack.c.l.b16 %v511
    %v1740 = vunpack.c.l.b16 %v512
    %v1741 = vunpack.c.l.b16 %v513
    %v1742 = vunpack.c.l.b16 %v514
    %v1743 = vunpack.c.l.b16 %v515
    %v1744 = vunpack.c.l.b16 %v516
    %v1745 = vunpack.c.l.b16 %v517
    %v1746 = vunpack.c.l.b16 %v518
    %v1747 = vunpack.c.l.b16 %v519
    %v1748 = vunpack.c.l.b16 %v520
    %v1749 = vunpack.c.l.b16 %v521
    %v1750 = vunpack.c.l.b16 %v522
    %v1751 = vunpack.c.l.b16 %v523
    %v1752 = vunpack.c.l.b16 %v524
    %v1753 = vunpack.c.l.b16 %v525
    %v1754 = vunpack.c.l.b16 %v526
    %v1755 = vunpack.c.l.b16 %v527
    %v1756 = vunpack.c.l.b16 %v528
    %v1757 = vunpack.c.l.b16 %v529
    %v1758 = vunpack.c.l.b16 %v530
    %v1759 = vunpack.c.l.b16 %v531
    %v1760 = vunpack.c.l.b16 %v532
    %v1761 = vunpack.c.l.b16 %v533
    %v1762 = vunpack.c.l.b16 %v534
    %v1763 = vunpack.c.l.b16 %v535
    %v1764 = vunpack.c.l.b16 %v536
    %v1765 = vunpack.c.l.b16 %v537
    %v1766 = vunpack.c.l.b16 %v538
    %v1767 = vunpack.c.l.b16 %v539
    %v1768 = vunpack.c.l.b16 %v540
    %v1769 = vunpack.c.l.b16 %v541
    %v1770 = vunpack.c.l.b16 %v542
    %v1771 = vunpack.c.l.b16 %v543
    %v1772 = vunpack.c.l.b16 %v544
    %v1773 = vunpack.c.l.b16 %v545
    %v1774 = vunpack.c.l.b16 %v546
    %v1775 = vunpack.c.l.b16 %v547
    %v1776 = vunpack.c.l.b16 %v548
    %v1777 = vunpack.c.l.b16 %v549
    %v1778 = vunpack.c.l.b16 %v550
    %v1779 = vunpack.c.l.b16 %v551
    %v1780 = vunpack.c.l.b16 %v552
    %v1781 = vunpack.c.l.b16 %v553
    %v1782 = vunpack.c.l.b16 %v554
    %v1783 = vunpack.c.l.b16 %v555
    %v1784 = vunpack.c.l.b16 %v556
    %v1785 = vunpack.c.l.b16 %v557
    %v1786 = vunpack.c.l.b16 %v558
    %v1787 = vunpack.c.l.b16 %v559
    %v1788 = vunpack.c.l.b16 %v560
    %v1789 = vunpack.c.l.b16 %v561
    %v1790 = vunpack.c.l.b16 %v562
    %v1791 = vunpack.c.l.b16 %v563
    %v1792 = vunpack.c.l.b16 %v564
    %v1793 = vunpack.c.l.b16 %v565
    %v1794 = vunpack.c.l.b16 %v566
    %v1795 = vunpack.c.l.b16 %v567
    %v1796 = vunpack.c.l.b16 %v568
    %v1797 = vunpack.c.l.b16 %v569
    %v1798 = vunpack.c.l.b16 %v570
    %v1799 = vunpack.c.l.b16 %v571
    %v1800 = vunpack.c.l.b16 %v572
    %v1801 = vunpack.c.l.b16 %v573
    %v1802 = vunpack.c.l.b16 %v574
    %v1803 = vunpack.c.l.b16 %v575
    %v1804 = vunpack.c.l.b16 %v576
    %v1805 = vunpack.c.l.b16 %v577
    %v1806 = vunpack.c.l.b16 %v578
    %v1807 = vunpack.c.l.b16 %v579
    %v1808 = vunpack.c.l.b16 %v580
    %v1809 = vunpack.c.l.b16 %v581
    %v1810 = vunpack.c.l.b16 %v582
    %v1811 = vunpack.c.l.b16 %v583
    %v1812 = vunpack.c.l.b16 %v584
    %v1813 = vunpack.c.l.b16 %v585
    %v1814 = vunpack.c.l.b16 %v586
    %v1815 = vunpack.c.l.b16 %v587
    %v1816 = vunpack.c.l.b16 %v588
    %v1817 = vunpack.c.l.b16 %v589
    %v1818 = vunpack.c.l.b16 %v590
    %v1819 = vunpack.c.l.b16 %v591
    %v1820 = vunpack.c.l.b16 %v592
    %v1821 = vunpack.c.l.b16 %v593
    %v1822 = vunpack.c.l.b16 %v594
    %v1823 = vunpack.c.l.b16 %v595
    %v1824 = vunpack.c.l.b16 %v596
    %v1825 = vunpack.c.l.b16 %v597
    %v1826 = vunpack.c.l.b16 %v598
    %v1827 = vunpack.c.l.b16 %v599
    %v1828 = vunpack.c.l.b16 %v600
    %v1829 = vunpack.c.l.b16 %v601
    %v1830 = vunpack.c.l.b16 %v602
    %v1831 = vunpack.c.l.b16 %v603
    %v1832 = vunpack.c.l.b16 %v604
    %v1833 = vunpack.c.l.b16 %v605
    %v1834 = vunpack.c.l.b16 %v606
    %v1835 = vunpack.c.l.b16 %v607
    %v1836 = vunpack.c.l.b16 %v608
    %v1837 = vunpack.c.l.b16 %v609
    %v1838 = vunpack.c.l.b16 %v610
    %v1839 = vunpack.c.l.b16 %v611
    %v1840 = vunpack.c.l.b16 %v612
    %v1841 = vunpack.c.l.b16 %v613
    %v1842 = vunpack.c.l.b16 %v614
    %v1843 = vunpack.c.l.b16 %v615
    %v1844 = vunpack.c.l.b16 %v616
    %v1845 = vunpack.c.l.b16 %v617
    %v1846 = vunpack.c.l.b16 %v618
    %v1847 = vunpack.c.l.b16 %v619
    %v1848 = vunpack.c.l.b16 %v620
    %v1849 = vunpack.c.l.b16 %v621
    %v1850 = vunpack.c.l.b16 %v622
    %v1851 = vunpack.c.l.b16 %v623
    %v1852 = vunpack.c.l.b16 %v624
    %v1853 = vunpack.c.l.b16 %v625
    %v1854 = vunpack.c.l.b16 %v626
    %v1855 = vunpack.c.l.b16 %v627
    %v1856 = vunpack.c.l.b16 %v628
    %v1857 = vunpack.c.l.b16 %v629
    %v1858 = vunpack.c.l.b16 %v630
    %v1859 = vunpack.c.l.b16 %v631
    %v1860 = vunpack.c.l.b16 %v632
    %v1861 = vunpack.c.l.b16 %v633
    %v1862 = vunpack.c.l.b16 %v634
    %v1863 = vunpack.c.l.b16 %v635
    %v1864 = vunpack.c.l.b16 %v636
    %v1865 = vunpack.c.l.b16 %v637
    %v1866 = vunpack.c.l.b16 %v638
    %v1867 = vunpack.c.l.b16 %v639
    %v1868 = vunpack.c.l.b16 %v640
    %v1869 = vunpack.c.l.b16 %v641
    %v1870 = vunpack.c.l.b16 %v642
    %v1871 = vunpack.c.l.b16 %v643
    %v1872 = vunpack.c.l.b16 %v644
    %v1873 = vunpack.c.l.b16 %v645
    %v1874 = vunpack.c.l.b16 %v646
    %v1875 = vunpack.c.l.b16 %v647
    %v1876 = vunpack.c.l.b16 %v648
    %v1877 = vunpack.c.l.b16 %v649
    %v1878 = vunpack.c.l.b16 %v650
    %v1879 = vunpack.c.l.b16 %v651
    %v1880 = vunpack.c.l.b16 %v652
    %v1881 = vunpack.c.l.b16 %v653
    %v1882 = vunpack.c.l.b16 %v654
    %v1883 = vunpack.c.l.b16 %v655
    %v1884 = vunpack.c.l.b16 %v656
    %v1885 = vunpack.c.l.b16 %v657
    %v1886 = vunpack.c.l.b16 %v658
    %v1887 = vunpack.c.l.b16 %v659
    %v1888 = vunpack.c.l.b16 %v660
    %v1889 = vunpack.c.l.b16 %v661
    %v1890 = vunpack.c.l.b16 %v662
    %v1891 = vunpack.c.l.b16 %v663
    %v1892 = vunpack.c.l.b16 %v664
    %v1893 = vunpack.c.l.b16 %v665
    %v1894 = vunpack.c.l.b16 %v666
    %v1895 = vunpack.c.l.b16 %v667
    %v1896 = vunpack.c.l.b16 %v668
    %v1897 = vunpack.c.l.b16 %v669
    %v1898 = vunpack.c.l.b16 %v670
    %v1899 = vunpack.c.l.b16 %v671
    %v1900 = vunpack.c.l.b16 %v672
    %v1901 = vunpack.c.l.b16 %v673
    %v1902 = vunpack.c.l.b16 %v674
    %v1903 = vunpack.c.l.b16 %v675
    %v1904 = vunpack.c.l.b16 %v676
    %v1905 = vpack.c.b16 %v1355, %v1354
    %v1906 = vpack.c.b16 %v1357, %v1356
    %v1907 = vpack.c.b16 %v1359, %v1358
    %v1908 = vpack.c.b16 %v1361, %v1360
    %v1909 = vpack.c.b16 %v1363, %v1362
    %v1910 = vpack.c.b16 %v1365, %v1364
    %v1911 = vpack.c.b16 %v1367, %v1366
    %v1912 = vpack.c.b16 %v1369, %v1368
    %v1913 = vpack.c.b16 %v1371, %v1370
    %v1914 = vpack.c.b16 %v1373, %v1372
    %v1915 = vpack.c.b16 %v1375, %v1374
    %v1916 = vpack.c.b16 %v1377, %v1376
    %v1917 = vpack.c.b16 %v1379, %v1378
    %v1918 = vpack.c.b16 %v1381, %v1380
    %v1919 = vpack.c.b16 %v1383, %v1382
    %v1920 = vpack.c.b16 %v1385, %v1384
    %v1921 = vpack.c.b16 %v1387, %v1386
    %v1922 = vpack.c.b16 %v1389, %v1388
    %v1923 = vpack.c.b16 %v1391, %v1390
    %v1924 = vpack.c.b16 %v1393, %v1392
    %v1925 = vpack.c.b16 %v1395, %v1394
    %v1926 = vpack.c.b16 %v1397, %v1396
    %v1927 = vpack.c.b16 %v1399, %v1398
    %v1928 = vpack.c.b16 %v1401, %v1400
    %v1929 = vpack.c.b16 %v1403, %v1402
    %v1930 = vpack.c.b16 %v1405, %v1404
    %v1931 = vpack.c.b16 %v1407, %v1406
    %v1932 = vpack.c.b16 %v1409, %v1408
    %v1933 = vpack.c.b16 %v1411, %v1410
    %v1934 = vpack.c.b16 %v1413, %v1412
    %v1935 = vpack.c.b16 %v1415, %v1414
    %v1936 = vpack.c.b16 %v1417, %v1416
    %v1937 = vpack.c.b16 %v1419, %v1418
    %v1938 = vpack.c.b16 %v1421, %v1420
    %v1939 = vpack.c.b16 %v1423, %v1422
    %v1940 = vpack.c.b16 %v1425, %v1424
    %v1941 = vpack.c.b16 %v1427, %v1426
    %v1942 = vpack.c.b16 %v1429, %v1428
    %v1943 = vpack.c.b16 %v1431, %v1430
    %v1944 = vpack.c.b16 %v1433, %v1432
    %v1945 = vpack.c.b16 %v1435, %v1434
    %v1946 = vpack.c.b16 %v1437, %v1436
    %v1947 = vpack.c.b16 %v1439, %v1438
    %v1948 = vpack.c.b16 %v1441, %v1440
    %v1949 = vpack.c.b16 %v1443, %v1442
    %v1950 = vpack.c.b16 %v1445, %v1444
    %v1951 = vpack.c.b16 %v1447, %v1446
    %v1952 = vpack.c.b16 %v1449, %v1448
    %v1953 = vpack.c.b16 %v1451, %v1450
    %v1954 = vpack.c.b16 %v1453, %v1452
    %v1955 = vpack.c.b16 %v1455, %v1454
    %v1956 = vpack.c.b16 %v1457, %v1456
    %v1957 = vpack.c.b16 %v1459, %v1458
    %v1958 = vpack.c.b16 %v1461, %v1460
    %v1959 = vpack.c.b16 %v1463, %v1462
    %v1960 = vpack.c.b16 %v1465, %v1464
    %v1961 = vpack.c.b16 %v1467, %v1466
    %v1962 = vpack.c.b16 %v1469, %v1468
    %v1963 = vpack.c.b16 %v1471, %v1470
    %v1964 = vpack.c.b16 %v1473, %v1472
    %v1965 = vpack.c.b16 %v1475, %v1474
    %v1966 = vpack.c.b16 %v1477, %v1476
    %v1967 = vpack.c.b16 %v1479, %v1478
    %v1968 = vpack.c.b16 %v1481, %v1480
    %v1969 = vpack.c.b16 %v1483, %v1482
    %v1970 = vpack.c.b16 %v1485, %v1484
    %v1971 = vpack.c.b16 %v1487, %v1486
    %v1972 = vpack.c.b16 %v1489, %v1488
    %v1973 = vpack.c.b16 %v1491, %v1490
    %v1974 = vpack.c.b16 %v1493, %v1492
    %v1975 = vpack.c.b16 %v1495, %v1494
    %v1976 = vpack.c.b16 %v1497, %v1496
    %v1977 = vpack.c.b16 %v1499, %v1498
    %v1978 = vpack.c.b16 %v1501, %v1500
    %v1979 = vpack.c.b16 %v1503, %v1502
    %v1980 = vpack.c.b16 %v1505, %v1504
    %v1981 = vpack.c.b16 %v1507, %v1506
    %v1982 = vpack.c.b16 %v1509, %v1508
    %v1983 = vpack.c.b16 %v1511, %v1510
    %v1984 = vpack.c.b16 %v1513, %v1512
    %v1985 = vpack.c.b16 %v1515, %v1514
    %v1986 = vpack.c.b16 %v1517, %v1516
    %v1987 = vpack.c.b16 %v1519, %v1518
    %v1988 = vpack.c.b16 %v1521, %v1520
    %v1989 = vpack.c.b16 %v1523, %v1522
    %v1990 = vpack.c.b16 %v1525, %v1524
    %v1991 = vpack.c.b16 %v1527, %v1526
    %v1992 = vpack.c.b16 %v1529, %v1528
    %v1993 = vpack.c.b16 %v1531, %v1530
    %v1994 = vpack.c.b16 %v1533, %v1532
    %v1995 = vpack.c.b16 %v1535, %v1534
    %v1996 = vpack.c.b16 %v1537, %v1536
    %v1997 = vpack.c.b16 %v1539, %v1538
    %v1998 = vpack.c.b16 %v1541, %v1540
    %v1999 = vpack.c.b16 %v1543, %v1542
    %v2000 = vpack.c.b16 %v1545, %v1544
    %v2001 = vpack.c.b16 %v1547, %v1546
    %v2002 = vpack.c.b16 %v1549, %v1548
    %v2003 = vpack.c.b16 %v1551, %v1550
    %v2004 = vpack.c.b16 %v1553, %v1552
    %v2005 = vpack.c.b16 %v1555, %v1554
    %v2006 = vpack.c.b16 %v1557, %v1556
    %v2007 = vpack.c.b16 %v1559, %v1558
    %v2008 = vpack.c.b16 %v1561, %v1560
    %v2009 = vpack.c.b16 %v1563, %v1562
    %v2010 = vpack.c.b16 %v1565, %v1564
    %v2011 = vpack.c.b16 %v1567, %v1566
    %v2012 = vpack.c.b16 %v1569, %v1568
    %v2013 = vpack.c.b16 %v1571, %v1570
    %v2014 = vpack.c.b16 %v1573, %v1572
    %v2015 = vpack.c.b16 %v1575, %v1574
    %v2016 = vpack.c.b16 %v1577, %v1576
    %v2017 = vpack.c.b16 %v1579, %v1578
    %v2018 = vpack.c.b16 %v1581, %v1580
    %v2019 = vpack.c.b16 %v1583, %v1582
    %v2020 = vpack.c.b16 %v1585, %v1584
    %v2021 = vpack.c.b16 %v1587, %v1586
    %v2022 = vpack.c.b16 %v1589, %v1588
    %v2023 = vpack.c.b16 %v1591, %v1590
    %v2024 = vpack.c.b16 %v1593, %v1592
    %v2025 = vpack.c.b16 %v1595, %v1594
    %v2026 = vpack.c.b16 %v1597, %v1596
    %v2027 = vpack.c.b16 %v1599, %v1598
    %v2028 = vpack.c.b16 %v1601, %v1600
    %v2029 = vpack.c.b16 %v1603, %v1602
    %v2030 = vpack.c.b16 %v1605, %v1604
    %v2031 = vpack.c.b16 %v1607, %v1606
    %v2032 = vpack.c.b16 %v1609, %v1608
    %v2033 = vpack.c.b16 %v1611, %v1610
    %v2034 = vpack.c.b16 %v1613, %v1612
    %v2035 = vpack.c.b16 %v1615, %v1614
    %v2036 = vpack.c.b16 %v1617, %v1616
    %v2037 = vpack.c.b16 %v1619, %v1618
    %v2038 = vpack.c.b16 %v1621, %v1620
    %v2039 = vpack.c.b16 %v1623, %v1622
    %v2040 = vpack.c.b16 %v1625, %v1624
    %v2041 = vpack.c.b16 %v1627, %v1626
    %v2042 = vpack.c.b16 %v1629, %v1628
    %v2043 = vpack.c.b16 %v1631, %v1630
    %v2044 = vpack.c.b16 %v1633, %v1632
    %v2045 = vpack.c.b16 %v1635, %v1634
    %v2046 = vpack.c.b16 %v1637, %v1636
    %v2047 = vpack.c.b16 %v1639, %v1638
    %v2048 = vpack.c.b16 %v1641, %v1640
    %v2049 = vpack.c.b16 %v1643, %v1642
    %v2050 = vpack.c.b16 %v1645, %v1644
    %v2051 = vpack.c.b16 %v1647, %v1646
    %v2052 = vpack.c.b16 %v1649, %v1648
    %v2053 = vpack.c.b16 %v1651, %v1650
    %v2054 = vpack.c.b16 %v1653, %v1652
    %v2055 = vpack.c.b16 %v1655, %v1654
    %v2056 = vpack.c.b16 %v1657, %v1656
    %v2057 = vpack.c.b16 %v1659, %v1658
    %v2058 = vpack.c.b16 %v1661, %v1660
    %v2059 = vpack.c.b16 %v1663, %v1662
    %v2060 = vpack.c.b16 %v1665, %v1664
    %v2061 = vpack.c.b16 %v1667, %v1666
    %v2062 = vpack.c.b16 %v1669, %v1668
    %v2063 = vpack.c.b16 %v1671, %v1670
    %v2064 = vpack.c.b16 %v1673, %v1672
    %v2065 = vpack.c.b16 %v1675, %v1674
    %v2066 = vpack.c.b16 %v1677, %v1676
    %v2067 = vpack.c.b16 %v1679, %v1678
    %v2068 = vpack.c.b16 %v1681, %v1680
    %v2069 = vpack.c.b16 %v1683, %v1682
    %v2070 = vpack.c.b16 %v1685, %v1684
    %v2071 = vpack.c.b16 %v1687, %v1686
    %v2072 = vpack.c.b16 %v1689, %v1688
    %v2073 = vpack.c.b16 %v1691, %v1690
    %v2074 = vpack.c.b16 %v1693, %v1692
    %v2075 = vpack.c.b16 %v1695, %v1694
    %v2076 = vpack.c.b16 %v1697, %v1696
    %v2077 = vpack.c.b16 %v1699, %v1698
    %v2078 = vpack.c.b16 %v1701, %v1700
    %v2079 = vpack.c.b16 %v1703, %v1702
    %v2080 = vpack.c.b16 %v1705, %v1704
    %v2081 = vpack.c.b16 %v1707, %v1706
    %v2082 = vpack.c.b16 %v1709, %v1708
    %v2083 = vpack.c.b16 %v1711, %v1710
    %v2084 = vpack.c.b16 %v1713, %v1712
    %v2085 = vpack.c.b16 %v1715, %v1714
    %v2086 = vpack.c.b16 %v1717, %v1716
    %v2087 = vpack.c.b16 %v1719, %v1718
    %v2088 = vpack.c.b16 %v1721, %v1720
    %v2089 = vpack.c.b16 %v1723, %v1722
    %v2090 = vpack.c.b16 %v1725, %v1724
    %v2091 = vpack.c.b16 %v1727, %v1726
    %v2092 = vpack.c.b16 %v1729, %v1728
    %v2093 = vpack.c.b16 %v1731, %v1730
    %v2094 = vpack.c.b16 %v1733, %v1732
    %v2095 = vpack.c.b16 %v1735, %v1734
    %v2096 = vpack.c.b16 %v1737, %v1736
    %v2097 = vpack.c.b16 %v1739, %v1738
    %v2098 = vpack.c.b16 %v1741, %v1740
    %v2099 = vpack.c.b16 %v1743, %v1742
    %v2100 = vpack.c.b16 %v1745, %v1744
    %v2101 = vpack.c.b16 %v1747, %v1746
    %v2102 = vpack.c.b16 %v1749, %v1748
    %v2103 = vpack.c.b16 %v1751, %v1750
    %v2104 = vpack.c.b16 %v1753, %v1752
    %v2105 = vpack.c.b16 %v1755, %v1754
    %v2106 = vpack.c.b16 %v1757, %v1756
    %v2107 = vpack.c.b16 %v1759, %v1758
    %v2108 = vpack.c.b16 %v1761, %v1760
    %v2109 = vpack.c.b16 %v1763, %v1762
    %v2110 = vpack.c.b16 %v1765, %v1764
    %v2111 = vpack.c.b16 %v1767, %v1766
    %v2112 = vpack.c.b16 %v1769, %v1768
    %v2113 = vpack.c.b16 %v1771, %v1770
    %v2114 = vpack.c.b16 %v1773, %v1772
    %v2115 = vpack.c.b16 %v1775, %v1774
    %v2116 = vpack.c.b16 %v1777, %v1776
    %v2117 = vpack.c.b16 %v1779, %v1778
    %v2118 = vpack.c.b16 %v1781, %v1780
    %v2119 = vpack.c.b16 %v1783, %v1782
    %v2120 = vpack.c.b16 %v1785, %v1784
    %v2121 = vpack.c.b16 %v1787, %v1786
    %v2122 = vpack.c.b16 %v1789, %v1788
    %v2123 = vpack.c.b16 %v1791, %v1790
    %v2124 = vpack.c.b16 %v1793, %v1792
    %v2125 = vpack.c.b16 %v1795, %v1794
    %v2126 = vpack.c.b16 %v1797, %v1796
    %v2127 = vpack.c.b16 %v1799, %v1798
    %v2128 = vpack.c.b16 %v1801, %v1800
    %v2129 = vpack.c.b16 %v1803, %v1802
    %v2130 = vpack.c.b16 %v1805, %v1804
    %v2131 = vpack.c.b16 %v1807, %v1806
    %v2132 = vpack.c.b16 %v1809, %v1808
    %v2133 = vpack.c.b16 %v1811, %v1810
    %v2134 = vpack.c.b16 %v1813, %v1812
    %v2135 = vpack.c.b16 %v1815, %v1814
    %v2136 = vpack.c.b16 %v1817, %v1816
    %v2137 = vpack.c.b16 %v1819, %v1818
    %v2138 = vpack.c.b16 %v1821, %v1820
    %v2139 = vpack.c.b16 %v1823, %v1822
    %v2140 = vpack.c.b16 %v1825, %v1824
    %v2141 = vpack.c.b16 %v1827, %v1826
    %v2142 = vpack.c.b16 %v1829, %v1828
    %v2143 = vpack.c.b16 %v1831, %v1830
    %v2144 = vpack.c.b16 %v1833, %v1832
    %v2145 = vpack.c.b16 %v1835, %v1834
    %v2146 = vpack.c.b16 %v1837, %v1836
    %v2147 = vpack.c.b16 %v1839, %v1838
    %v2148 = vpack.c.b16 %v1841, %v1840
    %v2149 = vpack.c.b16 %v1843, %v1842
    %v2150 = vpack.c.b16 %v1845, %v1844
    %v2151 = vpack.c.b16 %v1847, %v1846
    %v2152 = vpack.c.b16 %v1849, %v1848
    %v2153 = vpack.c.b16 %v1851, %v1850
    %v2154 = vpack.c.b16 %v1853, %v1852
    %v2155 = vpack.c.b16 %v1855, %v1854
    %v2156 = vpack.c.b16 %v1857, %v1856
    %v2157 = vpack.c.b16 %v1859, %v1858
    %v2158 = vpack.c.b16 %v1861, %v1860
    %v2159 = vpack.c.b16 %v1863, %v1862
    %v2160 = vpack.c.b16 %v1865, %v1864
    %v2161 = vpack.c.b16 %v1867, %v1866
    %v2162 = vpack.c.b16 %v1869, %v1868
    %v2163 = vpack.c.b16 %v1871, %v1870
    %v2164 = vpack.c.b16 %v1873, %v1872
    %v2165 = vpack.c.b16 %v1875, %v1874
    %v2166 = vpack.c.b16 %v1877, %v1876
    %v2167 = vpack.c.b16 %v1879, %v1878
    %v2168 = vpack.c.b16 %v1881, %v1880
    %v2169 = vpack.c.b16 %v1883, %v1882
    %v2170 = vpack.c.b16 %v1885, %v1884
    %v2171 = vpack.c.b16 %v1887, %v1886
    %v2172 = vpack.c.b16 %v1889, %v1888
    %v2173 = vpack.c.b16 %v1891, %v1890
    %v2174 = vpack.c.b16 %v1893, %v1892
    %v2175 = vpack.c.b16 %v1895, %v1894
    %v2176 = vpack.c.b16 %v1897, %v1896
    %v2177 = vpack.c.b16 %v1899, %v1898
    %v2178 = vpack.c.b16 %v1901, %v1900
    %v2179 = vpack.c.b16 %v1903, %v1902
    %v2180 = vpack.c.b16 %v1904, %v1904
    %vm2456 = vcmask 457728
    %v2458 = vsel %vm2456, %v768, 0
    %vm2460 = vcmask 1043456
    %v2462 = vsel %vm2460, %v2180, 0
    %2464 = vmatpush.bf16.msra.mxu0 %v1912
    %2465 = vmatpush.bf16.msra.mxu0 %v1911
    %2466 = vmatpush.bf16.msra.mxu0 %v1910
    %2467 = vmatpush.bf16.msra.mxu0 %v1909
    %2468 = vmatpush.bf16.msra.mxu0 %v1908
    %2469 = vmatpush.bf16.msra.mxu0 %v1907
    %2470 = vmatpush.bf16.msra.mxu0 %v1906
    %2471 = vmatpush.bf16.msra.mxu0 %v1905
    %2472 = vmatmul.bf16.gmra.mxu0 %v734
    %v2473 = vpop.f32.mrf.mxu0
    %v2474 = vadd.f32 %v679, %v2473
    %v2475 = vpop.f32.mrf.mxu0
    %2476 = vdwg.mxu0
    %2477 = vmatpush.bf16.msra.mxu0 %v1920
    %2478 = vmatpush.bf16.msra.mxu0 %v1919
    %2479 = vmatpush.bf16.msra.mxu0 %v1918
    %2480 = vmatpush.bf16.msra.mxu0 %v1917
    %2481 = vmatpush.bf16.msra.mxu0 %v1916
    %2482 = vmatpush.bf16.msra.mxu0 %v1915
    %2483 = vmatpush.bf16.msra.mxu0 %v1914
    %2484 = vmatpush.bf16.msra.mxu0 %v1913
    %2485 = vmatmul.bf16.gmra.mxu0 %v735
    %v2486 = vpop.f32.mrf.mxu0
    %v2487 = vadd.f32 %v2474, %v2486
    %v2488 = vpop.f32.mrf.mxu0
    %2489 = vdwg.mxu0
    %2490 = vmatpush.bf16.msra.mxu0 %v1928
    %2491 = vmatpush.bf16.msra.mxu0 %v1927
    %2492 = vmatpush.bf16.msra.mxu0 %v1926
    %2493 = vmatpush.bf16.msra.mxu0 %v1925
    %2494 = vmatpush.bf16.msra.mxu0 %v1924
    %2495 = vmatpush.bf16.msra.mxu0 %v1923
    %2496 = vmatpush.bf16.msra.mxu0 %v1922
    %2497 = vmatpush.bf16.msra.mxu0 %v1921
    %2498 = vmatmul.bf16.gmra.mxu0 %v736
    %v2499 = vpop.f32.mrf.mxu0
    %v2500 = vadd.f32 %v2487, %v2499
    %v2501 = vpop.f32.mrf.mxu0
    %2502 = vdwg.mxu0
    %2503 = vmatpush.bf16.msra.mxu0 %v1936
    %2504 = vmatpush.bf16.msra.mxu0 %v1935
    %2505 = vmatpush.bf16.msra.mxu0 %v1934
    %2506 = vmatpush.bf16.msra.mxu0 %v1933
    %2507 = vmatpush.bf16.msra.mxu0 %v1932
    %2508 = vmatpush.bf16.msra.mxu0 %v1931
    %2509 = vmatpush.bf16.msra.mxu0 %v1930
    %2510 = vmatpush.bf16.msra.mxu0 %v1929
    %2511 = vmatmul.bf16.gmra.mxu0 %v737
    %v2512 = vpop.f32.mrf.mxu0
    %v2513 = vadd.f32 %v2500, %v2512
    %v2514 = vpop.f32.mrf.mxu0
    %2515 = vdwg.mxu0
    %2516 = vmatpush.bf16.msra.mxu0 %v1944
    %2517 = vmatpush.bf16.msra.mxu0 %v1943
    %2518 = vmatpush.bf16.msra.mxu0 %v1942
    %2519 = vmatpush.bf16.msra.mxu0 %v1941
    %2520 = vmatpush.bf16.msra.mxu0 %v1940
    %2521 = vmatpush.bf16.msra.mxu0 %v1939
    %2522 = vmatpush.bf16.msra.mxu0 %v1938
    %2523 = vmatpush.bf16.msra.mxu0 %v1937
    %2524 = vmatmul.bf16.gmra.mxu0 %v738
    %v2525 = vpop.f32.mrf.mxu0
    %v2526 = vadd.f32 %v2513, %v2525
    %v2527 = vpop.f32.mrf.mxu0
    %2528 = vdwg.mxu0
    %2529 = vmatpush.bf16.msra.mxu0 %v1952
    %2530 = vmatpush.bf16.msra.mxu0 %v1951
    %2531 = vmatpush.bf16.msra.mxu0 %v1950
    %2532 = vmatpush.bf16.msra.mxu0 %v1949
    %2533 = vmatpush.bf16.msra.mxu0 %v1948
    %2534 = vmatpush.bf16.msra.mxu0 %v1947
    %2535 = vmatpush.bf16.msra.mxu0 %v1946
    %2536 = vmatpush.bf16.msra.mxu0 %v1945
    %2537 = vmatmul.bf16.gmra.mxu0 %v739
    %v2538 = vpop.f32.mrf.mxu0
    %v2539 = vadd.f32 %v2526, %v2538
    %v2540 = vpop.f32.mrf.mxu0
    %2541 = vdwg.mxu0
    %2542 = vmatpush.bf16.msra.mxu0 %v1960
    %2543 = vmatpush.bf16.msra.mxu0 %v1959
    %2544 = vmatpush.bf16.msra.mxu0 %v1958
    %2545 = vmatpush.bf16.msra.mxu0 %v1957
    %2546 = vmatpush.bf16.msra.mxu0 %v1956
    %2547 = vmatpush.bf16.msra.mxu0 %v1955
    %2548 = vmatpush.bf16.msra.mxu0 %v1954
    %2549 = vmatpush.bf16.msra.mxu0 %v1953
    %2550 = vmatmul.bf16.gmra.mxu0 %v740
    %v2551 = vpop.f32.mrf.mxu0
    %v2552 = vadd.f32 %v2539, %v2551
    %v2553 = vpop.f32.mrf.mxu0
    %2554 = vdwg.mxu0
    %2555 = vmatpush.bf16.msra.mxu0 %v1968
    %2556 = vmatpush.bf16.msra.mxu0 %v1967
    %2557 = vmatpush.bf16.msra.mxu0 %v1966
    %2558 = vmatpush.bf16.msra.mxu0 %v1965
    %2559 = vmatpush.bf16.msra.mxu0 %v1964
    %2560 = vmatpush.bf16.msra.mxu0 %v1963
    %2561 = vmatpush.bf16.msra.mxu0 %v1962
    %2562 = vmatpush.bf16.msra.mxu0 %v1961
    %2563 = vmatmul.bf16.gmra.mxu0 %v741
    %v2564 = vpop.f32.mrf.mxu0
    %v2565 = vadd.f32 %v2552, %v2564
    %v2566 = vpop.f32.mrf.mxu0
    %2567 = vdwg.mxu0
    %2568 = vmatpush.bf16.msra.mxu0 %v1976
    %2569 = vmatpush.bf16.msra.mxu0 %v1975
    %2570 = vmatpush.bf16.msra.mxu0 %v1974
    %2571 = vmatpush.bf16.msra.mxu0 %v1973
    %2572 = vmatpush.bf16.msra.mxu0 %v1972
    %2573 = vmatpush.bf16.msra.mxu0 %v1971
    %2574 = vmatpush.bf16.msra.mxu0 %v1970
    %2575 = vmatpush.bf16.msra.mxu0 %v1969
    %2576 = vmatmul.bf16.gmra.mxu0 %v742
    %v2577 = vpop.f32.mrf.mxu0
    %v2578 = vadd.f32 %v2565, %v2577
    %v2579 = vpop.f32.mrf.mxu0
    %2580 = vdwg.mxu0
    %2581 = vmatpush.bf16.msra.mxu0 %v1984
    %2582 = vmatpush.bf16.msra.mxu0 %v1983
    %2583 = vmatpush.bf16.msra.mxu0 %v1982
    %2584 = vmatpush.bf16.msra.mxu0 %v1981
    %2585 = vmatpush.bf16.msra.mxu0 %v1980
    %2586 = vmatpush.bf16.msra.mxu0 %v1979
    %2587 = vmatpush.bf16.msra.mxu0 %v1978
    %2588 = vmatpush.bf16.msra.mxu0 %v1977
    %2589 = vmatmul.bf16.gmra.mxu0 %v743
    %v2590 = vpop.f32.mrf.mxu0
    %v2591 = vadd.f32 %v2578, %v2590
    %v2592 = vpop.f32.mrf.mxu0
    %2593 = vdwg.mxu0
    %2594 = vmatpush.bf16.msra.mxu0 %v1992
    %2595 = vmatpush.bf16.msra.mxu0 %v1991
    %2596 = vmatpush.bf16.msra.mxu0 %v1990
    %2597 = vmatpush.bf16.msra.mxu0 %v1989
    %2598 = vmatpush.bf16.msra.mxu0 %v1988
    %2599 = vmatpush.bf16.msra.mxu0 %v1987
    %2600 = vmatpush.bf16.msra.mxu0 %v1986
    %2601 = vmatpush.bf16.msra.mxu0 %v1985
    %2602 = vmatmul.bf16.gmra.mxu0 %v744
    %v2603 = vpop.f32.mrf.mxu0
    %v2604 = vadd.f32 %v2591, %v2603
    %v2605 = vpop.f32.mrf.mxu0
    %2606 = vdwg.mxu0
    %2607 = vmatpush.bf16.msra.mxu0 %v2000
    %2608 = vmatpush.bf16.msra.mxu0 %v1999
    %2609 = vmatpush.bf16.msra.mxu0 %v1998
    %2610 = vmatpush.bf16.msra.mxu0 %v1997
    %2611 = vmatpush.bf16.msra.mxu0 %v1996
    %2612 = vmatpush.bf16.msra.mxu0 %v1995
    %2613 = vmatpush.bf16.msra.mxu0 %v1994
    %2614 = vmatpush.bf16.msra.mxu0 %v1993
    %2615 = vmatmul.bf16.gmra.mxu0 %v745
    %v2616 = vpop.f32.mrf.mxu0
    %v2617 = vadd.f32 %v2604, %v2616
    %v2618 = vpop.f32.mrf.mxu0
    %2619 = vdwg.mxu0
    %2620 = vmatpush.bf16.msra.mxu0 %v2008
    %2621 = vmatpush.bf16.msra.mxu0 %v2007
    %2622 = vmatpush.bf16.msra.mxu0 %v2006
    %2623 = vmatpush.bf16.msra.mxu0 %v2005
    %2624 = vmatpush.bf16.msra.mxu0 %v2004
    %2625 = vmatpush.bf16.msra.mxu0 %v2003
    %2626 = vmatpush.bf16.msra.mxu0 %v2002
    %2627 = vmatpush.bf16.msra.mxu0 %v2001
    %2628 = vmatmul.bf16.gmra.mxu0 %v746
    %v2629 = vpop.f32.mrf.mxu0
    %v2630 = vadd.f32 %v2617, %v2629
    %v2631 = vpop.f32.mrf.mxu0
    %2632 = vdwg.mxu0
    %2633 = vmatpush.bf16.msra.mxu0 %v2016
    %2634 = vmatpush.bf16.msra.mxu0 %v2015
    %2635 = vmatpush.bf16.msra.mxu0 %v2014
    %2636 = vmatpush.bf16.msra.mxu0 %v2013
    %2637 = vmatpush.bf16.msra.mxu0 %v2012
    %2638 = vmatpush.bf16.msra.mxu0 %v2011
    %2639 = vmatpush.bf16.msra.mxu0 %v2010
    %2640 = vmatpush.bf16.msra.mxu0 %v2009
    %2641 = vmatmul.bf16.gmra.mxu0 %v747
    %v2642 = vpop.f32.mrf.mxu0
    %v2643 = vadd.f32 %v2630, %v2642
    %v2644 = vpop.f32.mrf.mxu0
    %2645 = vdwg.mxu0
    %2646 = vmatpush.bf16.msra.mxu0 %v2024
    %2647 = vmatpush.bf16.msra.mxu0 %v2023
    %2648 = vmatpush.bf16.msra.mxu0 %v2022
    %2649 = vmatpush.bf16.msra.mxu0 %v2021
    %2650 = vmatpush.bf16.msra.mxu0 %v2020
    %2651 = vmatpush.bf16.msra.mxu0 %v2019
    %2652 = vmatpush.bf16.msra.mxu0 %v2018
    %2653 = vmatpush.bf16.msra.mxu0 %v2017
    %2654 = vmatmul.bf16.gmra.mxu0 %v748
    %v2655 = vpop.f32.mrf.mxu0
    %v2656 = vadd.f32 %v2643, %v2655
    %v2657 = vpop.f32.mrf.mxu0
    %2658 = vdwg.mxu0
    %2659 = vmatpush.bf16.msra.mxu0 %v2032
    %2660 = vmatpush.bf16.msra.mxu0 %v2031
    %2661 = vmatpush.bf16.msra.mxu0 %v2030
    %2662 = vmatpush.bf16.msra.mxu0 %v2029
    %2663 = vmatpush.bf16.msra.mxu0 %v2028
    %2664 = vmatpush.bf16.msra.mxu0 %v2027
    %2665 = vmatpush.bf16.msra.mxu0 %v2026
    %2666 = vmatpush.bf16.msra.mxu0 %v2025
    %2667 = vmatmul.bf16.gmra.mxu0 %v749
    %v2668 = vpop.f32.mrf.mxu0
    %v2669 = vadd.f32 %v2656, %v2668
    %v2670 = vpop.f32.mrf.mxu0
    %2671 = vdwg.mxu0
    %2672 = vmatpush.bf16.msra.mxu0 %v2040
    %2673 = vmatpush.bf16.msra.mxu0 %v2039
    %2674 = vmatpush.bf16.msra.mxu0 %v2038
    %2675 = vmatpush.bf16.msra.mxu0 %v2037
    %2676 = vmatpush.bf16.msra.mxu0 %v2036
    %2677 = vmatpush.bf16.msra.mxu0 %v2035
    %2678 = vmatpush.bf16.msra.mxu0 %v2034
    %2679 = vmatpush.bf16.msra.mxu0 %v2033
    %2680 = vmatmul.bf16.gmra.mxu0 %v750
    %v2681 = vpop.f32.mrf.mxu0
    %v2682 = vadd.f32 %v2669, %v2681
    %v2683 = vpop.f32.mrf.mxu0
    %2684 = vdwg.mxu0
    %2685 = vmatpush.bf16.msra.mxu0 %v2048
    %2686 = vmatpush.bf16.msra.mxu0 %v2047
    %2687 = vmatpush.bf16.msra.mxu0 %v2046
    %2688 = vmatpush.bf16.msra.mxu0 %v2045
    %2689 = vmatpush.bf16.msra.mxu0 %v2044
    %2690 = vmatpush.bf16.msra.mxu0 %v2043
    %2691 = vmatpush.bf16.msra.mxu0 %v2042
    %2692 = vmatpush.bf16.msra.mxu0 %v2041
    %2693 = vmatmul.bf16.gmra.mxu0 %v751
    %v2694 = vpop.f32.mrf.mxu0
    %v2695 = vadd.f32 %v2682, %v2694
    %v2696 = vpop.f32.mrf.mxu0
    %2697 = vdwg.mxu0
    %2698 = vmatpush.bf16.msra.mxu0 %v2056
    %2699 = vmatpush.bf16.msra.mxu0 %v2055
    %2700 = vmatpush.bf16.msra.mxu0 %v2054
    %2701 = vmatpush.bf16.msra.mxu0 %v2053
    %2702 = vmatpush.bf16.msra.mxu0 %v2052
    %2703 = vmatpush.bf16.msra.mxu0 %v2051
    %2704 = vmatpush.bf16.msra.mxu0 %v2050
    %2705 = vmatpush.bf16.msra.mxu0 %v2049
    %2706 = vmatmul.bf16.gmra.mxu0 %v752
    %v2707 = vpop.f32.mrf.mxu0
    %v2708 = vadd.f32 %v2695, %v2707
    %v2709 = vpop.f32.mrf.mxu0
    %2710 = vdwg.mxu0
    %2711 = vmatpush.bf16.msra.mxu0 %v2064
    %2712 = vmatpush.bf16.msra.mxu0 %v2063
    %2713 = vmatpush.bf16.msra.mxu0 %v2062
    %2714 = vmatpush.bf16.msra.mxu0 %v2061
    %2715 = vmatpush.bf16.msra.mxu0 %v2060
    %2716 = vmatpush.bf16.msra.mxu0 %v2059
    %2717 = vmatpush.bf16.msra.mxu0 %v2058
    %2718 = vmatpush.bf16.msra.mxu0 %v2057
    %2719 = vmatmul.bf16.gmra.mxu0 %v753
    %v2720 = vpop.f32.mrf.mxu0
    %v2721 = vadd.f32 %v2708, %v2720
    %v2722 = vpop.f32.mrf.mxu0
    %2723 = vdwg.mxu0
    %2724 = vmatpush.bf16.msra.mxu0 %v2072
    %2725 = vmatpush.bf16.msra.mxu0 %v2071
    %2726 = vmatpush.bf16.msra.mxu0 %v2070
    %2727 = vmatpush.bf16.msra.mxu0 %v2069
    %2728 = vmatpush.bf16.msra.mxu0 %v2068
    %2729 = vmatpush.bf16.msra.mxu0 %v2067
    %2730 = vmatpush.bf16.msra.mxu0 %v2066
    %2731 = vmatpush.bf16.msra.mxu0 %v2065
    %2732 = vmatmul.bf16.gmra.mxu0 %v754
    %v2733 = vpop.f32.mrf.mxu0
    %v2734 = vadd.f32 %v2721, %v2733
    %v2735 = vpop.f32.mrf.mxu0
    %2736 = vdwg.mxu0
    %2737 = vmatpush.bf16.msra.mxu0 %v2080
    %2738 = vmatpush.bf16.msra.mxu0 %v2079
    %2739 = vmatpush.bf16.msra.mxu0 %v2078
    %2740 = vmatpush.bf16.msra.mxu0 %v2077
    %2741 = vmatpush.bf16.msra.mxu0 %v2076
    %2742 = vmatpush.bf16.msra.mxu0 %v2075
    %2743 = vmatpush.bf16.msra.mxu0 %v2074
    %2744 = vmatpush.bf16.msra.mxu0 %v2073
    %2745 = vmatmul.bf16.gmra.mxu0 %v755
    %v2746 = vpop.f32.mrf.mxu0
    %v2747 = vadd.f32 %v2734, %v2746
    %v2748 = vpop.f32.mrf.mxu0
    %2749 = vdwg.mxu0
    %2750 = vmatpush.bf16.msra.mxu0 %v2088
    %2751 = vmatpush.bf16.msra.mxu0 %v2087
    %2752 = vmatpush.bf16.msra.mxu0 %v2086
    %2753 = vmatpush.bf16.msra.mxu0 %v2085
    %2754 = vmatpush.bf16.msra.mxu0 %v2084
    %2755 = vmatpush.bf16.msra.mxu0 %v2083
    %2756 = vmatpush.bf16.msra.mxu0 %v2082
    %2757 = vmatpush.bf16.msra.mxu0 %v2081
    %2758 = vmatmul.bf16.gmra.mxu0 %v756
    %v2759 = vpop.f32.mrf.mxu0
    %v2760 = vadd.f32 %v2747, %v2759
    %v2761 = vpop.f32.mrf.mxu0
    %2762 = vdwg.mxu0
    %2763 = vmatpush.bf16.msra.mxu0 %v2096
    %2764 = vmatpush.bf16.msra.mxu0 %v2095
    %2765 = vmatpush.bf16.msra.mxu0 %v2094
    %2766 = vmatpush.bf16.msra.mxu0 %v2093
    %2767 = vmatpush.bf16.msra.mxu0 %v2092
    %2768 = vmatpush.bf16.msra.mxu0 %v2091
    %2769 = vmatpush.bf16.msra.mxu0 %v2090
    %2770 = vmatpush.bf16.msra.mxu0 %v2089
    %2771 = vmatmul.bf16.gmra.mxu0 %v757
    %v2772 = vpop.f32.mrf.mxu0
    %v2773 = vadd.f32 %v2760, %v2772
    %v2774 = vpop.f32.mrf.mxu0
    %2775 = vdwg.mxu0
    %2776 = vmatpush.bf16.msra.mxu0 %v2104
    %2777 = vmatpush.bf16.msra.mxu0 %v2103
    %2778 = vmatpush.bf16.msra.mxu0 %v2102
    %2779 = vmatpush.bf16.msra.mxu0 %v2101
    %2780 = vmatpush.bf16.msra.mxu0 %v2100
    %2781 = vmatpush.bf16.msra.mxu0 %v2099
    %2782 = vmatpush.bf16.msra.mxu0 %v2098
    %2783 = vmatpush.bf16.msra.mxu0 %v2097
    %2784 = vmatmul.bf16.gmra.mxu0 %v758
    %v2785 = vpop.f32.mrf.mxu0
    %v2786 = vadd.f32 %v2773, %v2785
    %v2787 = vpop.f32.mrf.mxu0
    %2788 = vdwg.mxu0
    %2789 = vmatpush.bf16.msra.mxu0 %v2112
    %2790 = vmatpush.bf16.msra.mxu0 %v2111
    %2791 = vmatpush.bf16.msra.mxu0 %v2110
    %2792 = vmatpush.bf16.msra.mxu0 %v2109
    %2793 = vmatpush.bf16.msra.mxu0 %v2108
    %2794 = vmatpush.bf16.msra.mxu0 %v2107
    %2795 = vmatpush.bf16.msra.mxu0 %v2106
    %2796 = vmatpush.bf16.msra.mxu0 %v2105
    %2797 = vmatmul.bf16.gmra.mxu0 %v759
    %v2798 = vpop.f32.mrf.mxu0
    %v2799 = vadd.f32 %v2786, %v2798
    %v2800 = vpop.f32.mrf.mxu0
    %2801 = vdwg.mxu0
    %2802 = vmatpush.bf16.msra.mxu0 %v2120
    %2803 = vmatpush.bf16.msra.mxu0 %v2119
    %2804 = vmatpush.bf16.msra.mxu0 %v2118
    %2805 = vmatpush.bf16.msra.mxu0 %v2117
    %2806 = vmatpush.bf16.msra.mxu0 %v2116
    %2807 = vmatpush.bf16.msra.mxu0 %v2115
    %2808 = vmatpush.bf16.msra.mxu0 %v2114
    %2809 = vmatpush.bf16.msra.mxu0 %v2113
    %2810 = vmatmul.bf16.gmra.mxu0 %v760
    %v2811 = vpop.f32.mrf.mxu0
    %v2812 = vadd.f32 %v2799, %v2811
    %v2813 = vpop.f32.mrf.mxu0
    %2814 = vdwg.mxu0
    %2815 = vmatpush.bf16.msra.mxu0 %v2128
    %2816 = vmatpush.bf16.msra.mxu0 %v2127
    %2817 = vmatpush.bf16.msra.mxu0 %v2126
    %2818 = vmatpush.bf16.msra.mxu0 %v2125
    %2819 = vmatpush.bf16.msra.mxu0 %v2124
    %2820 = vmatpush.bf16.msra.mxu0 %v2123
    %2821 = vmatpush.bf16.msra.mxu0 %v2122
    %2822 = vmatpush.bf16.msra.mxu0 %v2121
    %2823 = vmatmul.bf16.gmra.mxu0 %v761
    %v2824 = vpop.f32.mrf.mxu0
    %v2825 = vadd.f32 %v2812, %v2824
    %v2826 = vpop.f32.mrf.mxu0
    %2827 = vdwg.mxu0
    %2828 = vmatpush.bf16.msra.mxu0 %v2136
    %2829 = vmatpush.bf16.msra.mxu0 %v2135
    %2830 = vmatpush.bf16.msra.mxu0 %v2134
    %2831 = vmatpush.bf16.msra.mxu0 %v2133
    %2832 = vmatpush.bf16.msra.mxu0 %v2132
    %2833 = vmatpush.bf16.msra.mxu0 %v2131
    %2834 = vmatpush.bf16.msra.mxu0 %v2130
    %2835 = vmatpush.bf16.msra.mxu0 %v2129
    %2836 = vmatmul.bf16.gmra.mxu0 %v762
    %v2837 = vpop.f32.mrf.mxu0
    %v2838 = vadd.f32 %v2825, %v2837
    %v2839 = vpop.f32.mrf.mxu0
    %2840 = vdwg.mxu0
    %2841 = vmatpush.bf16.msra.mxu0 %v2144
    %2842 = vmatpush.bf16.msra.mxu0 %v2143
    %2843 = vmatpush.bf16.msra.mxu0 %v2142
    %2844 = vmatpush.bf16.msra.mxu0 %v2141
    %2845 = vmatpush.bf16.msra.mxu0 %v2140
    %2846 = vmatpush.bf16.msra.mxu0 %v2139
    %2847 = vmatpush.bf16.msra.mxu0 %v2138
    %2848 = vmatpush.bf16.msra.mxu0 %v2137
    %2849 = vmatmul.bf16.gmra.mxu0 %v763
    %v2850 = vpop.f32.mrf.mxu0
    %v2851 = vadd.f32 %v2838, %v2850
    %v2852 = vpop.f32.mrf.mxu0
    %2853 = vdwg.mxu0
    %2854 = vmatpush.bf16.msra.mxu0 %v2152
    %2855 = vmatpush.bf16.msra.mxu0 %v2151
    %2856 = vmatpush.bf16.msra.mxu0 %v2150
    %2857 = vmatpush.bf16.msra.mxu0 %v2149
    %2858 = vmatpush.bf16.msra.mxu0 %v2148
    %2859 = vmatpush.bf16.msra.mxu0 %v2147
    %2860 = vmatpush.bf16.msra.mxu0 %v2146
    %2861 = vmatpush.bf16.msra.mxu0 %v2145
    %2862 = vmatmul.bf16.gmra.mxu0 %v764
    %v2863 = vpop.f32.mrf.mxu0
    %v2864 = vadd.f32 %v2851, %v2863
    %v2865 = vpop.f32.mrf.mxu0
    %2866 = vdwg.mxu0
    %2867 = vmatpush.bf16.msra.mxu0 %v2160
    %2868 = vmatpush.bf16.msra.mxu0 %v2159
    %2869 = vmatpush.bf16.msra.mxu0 %v2158
    %2870 = vmatpush.bf16.msra.mxu0 %v2157
    %2871 = vmatpush.bf16.msra.mxu0 %v2156
    %2872 = vmatpush.bf16.msra.mxu0 %v2155
    %2873 = vmatpush.bf16.msra.mxu0 %v2154
    %2874 = vmatpush.bf16.msra.mxu0 %v2153
    %2875 = vmatmul.bf16.gmra.mxu0 %v765
    %v2876 = vpop.f32.mrf.mxu0
    %v2877 = vadd.f32 %v2864, %v2876
    %v2878 = vpop.f32.mrf.mxu0
    %2879 = vdwg.mxu0
    %2880 = vmatpush.bf16.msra.mxu0 %v2168
    %2881 = vmatpush.bf16.msra.mxu0 %v2167
    %2882 = vmatpush.bf16.msra.mxu0 %v2166
    %2883 = vmatpush.bf16.msra.mxu0 %v2165
    %2884 = vmatpush.bf16.msra.mxu0 %v2164
    %2885 = vmatpush.bf16.msra.mxu0 %v2163
    %2886 = vmatpush.bf16.msra.mxu0 %v2162
    %2887 = vmatpush.bf16.msra.mxu0 %v2161
    %2888 = vmatmul.bf16.gmra.mxu0 %v766
    %v2889 = vpop.f32.mrf.mxu0
    %v2890 = vadd.f32 %v2877, %v2889
    %v2891 = vpop.f32.mrf.mxu0
    %2892 = vdwg.mxu0
    %2893 = vmatpush.bf16.msra.mxu0 %v2176
    %2894 = vmatpush.bf16.msra.mxu0 %v2175
    %2895 = vmatpush.bf16.msra.mxu0 %v2174
    %2896 = vmatpush.bf16.msra.mxu0 %v2173
    %2897 = vmatpush.bf16.msra.mxu0 %v2172
    %2898 = vmatpush.bf16.msra.mxu0 %v2171
    %2899 = vmatpush.bf16.msra.mxu0 %v2170
    %2900 = vmatpush.bf16.msra.mxu0 %v2169
    %2901 = vmatmul.bf16.gmra.mxu0 %v767
    %v2902 = vpop.f32.mrf.mxu0
    %v2903 = vadd.f32 %v2890, %v2902
    %v2904 = vpop.f32.mrf.mxu0
    %2905 = vdwg.mxu0
    %2906 = vmatpush.bf16.msra.mxu0 0
    %2907 = vmatpush.bf16.msra.mxu0 0
    %2908 = vmatpush.bf16.msra.mxu0 0
    %2909 = vmatpush.bf16.msra.mxu0 0
    %2910 = vmatpush.bf16.msra.mxu0 %v2462
    %2911 = vmatpush.bf16.msra.mxu0 %v2179
    %2912 = vmatpush.bf16.msra.mxu0 %v2178
    %2913 = vmatpush.bf16.msra.mxu0 %v2177
    %2914 = vmatmul.bf16.gmra.mxu0 %v2458
    %v2915 = vpop.f32.mrf.mxu0
    %v2916 = vadd.f32 %v2903, %v2915
    %v2917 = vpop.f32.mrf.mxu0
    %2918 = vdwg.mxu0
    %vm2919 = vcmask 261120
    %v2920 = vsel %vm2919, %v2916, 0.0
    %2921 = vadd.xlane.f32.xlu0 %v2920
    %v2922 = vpop.xlane.xlu0 %2921
    %v2923 = vrcp.pop 32.0
    %v2924 = vmul.f32 32.0, %v2923
    %v2925 = vsub.f32 1.0, %v2924
    %v2926 = vmul.f32 %v2923, %v2925
    %v2927 = vadd.f32 %v2923, %v2926
    %vm2928 = vweird.f32 %v2923
    %v2929 = vsel %vm2928, %v2923, %v2927
    %v2930 = vmul.f32 %v2922, %v2929
    %v2931 = vsub.f32 %v2916, %v2930
    %v2932 = vmul.f32 %v2931, %v2931
    %v2933 = vsel %vm2919, %v2932, 0.0
    %2934 = vadd.xlane.f32.xlu0 %v2933
    %v2935 = vpop.xlane.xlu0 %2934
    %v2936 = vmul.f32 %v2935, %v2929
    %v2937 = vadd.f32 %v2936, 1e-05
    %v2938 = vrsqrt.pop %v2937
    %v2939 = vmul.f32 %v2938, %v2937
    %v2940 = vmul.f32 %v2939, %v2938
    %v2941 = vmul.f32 0.5, %v2940
    %v2942 = vsub.f32 1.5, %v2941
    %v2943 = vmul.f32 %v2938, %v2942
    %vm2944 = vweird.f32 %v2937
    %vm2945 = vweird.f32 %v2938
    %vm2946 = vmor %vm2944, %vm2945
    %v2947 = vsel %vm2946, %v2938, %v2943
    %v2948 = vmul.f32 %v2931, %v2947
    %v2950 = vperm.slane %v93, 0
    %v2952 = vmul.f32 %v2948, %v2950
    %v2954 = vperm.slane %v94, 0
    %v2956 = vadd.f32 %v2952, %v2954
    %vm2957 = vcmp.gt.f32.partialorder %v2956, 0.0
    %v2958 = vmul.f32 %v2956, 0.01
    %v2959 = vsel %vm2957, %v2956, %v2958
    %v2960 = vld [vmem:[#allocation4] sm:$0xf]
    %v2961 = vld [vmem:[#allocation4 + $0xc0] sm:$0xf]
    %v2962 = vld [vmem:[#allocation4 + $0x180] sm:$0xf]
    %v2963 = vld [vmem:[#allocation4 + $0x240] sm:$0xf]
    %v2964 = vpack.c.bf16 %v2959, %v2959
    %v2965 = vld [vmem:[#allocation7 + $0x1] sm:$0x1]
    %v2967 = vperm.slane %v2965, 0
    %v2973 = vunpack.c.l.b16 %v2960
    %v2974 = vunpack.c.l.b16 %v2961
    %v2975 = vunpack.c.l.b16 %v2962
    %v2976 = vunpack.c.l.b16 %v2963
    %v2977 = vpack.c.b16 %v2974, %v2973
    %v2978 = vpack.c.b16 %v2976, %v2975
    %v2982 = vsel %vm2919, %v2964, 0
    %2984 = vmatpush.bf16.msra.mxu0 0
    %2985 = vmatpush.bf16.msra.mxu0 0
    %2986 = vmatpush.bf16.msra.mxu0 0
    %2987 = vmatpush.bf16.msra.mxu0 0
    %2988 = vmatpush.bf16.msra.mxu0 0
    %2989 = vmatpush.bf16.msra.mxu0 0
    %2990 = vmatpush.bf16.msra.mxu0 %v2978
    %2991 = vmatpush.bf16.msra.mxu0 %v2977
    %2992 = vmatmul.bf16.gmra.mxu0 %v2982
    %v2993 = vpop.f32.mrf.mxu0
    %v2994 = vadd.f32 %v2967, %v2993
    %v2995 = vpop.f32.mrf.mxu0
    %2996 = vdwg.mxu0
    %v2997 = vsel %vm2919, %v2994, 0.0
    %2998 = vadd.xlane.f32.xlu0 %v2997
    %v2999 = vpop.xlane.xlu0 %2998
    %v3000 = vmul.f32 %v2999, %v2929
    %v3001 = vsub.f32 %v2994, %v3000
    %v3002 = vmul.f32 %v3001, %v3001
    %v3003 = vsel %vm2919, %v3002, 0.0
    %3004 = vadd.xlane.f32.xlu0 %v3003
    %v3005 = vpop.xlane.xlu0 %3004
    %v3006 = vmul.f32 %v3005, %v2929
    %v3007 = vadd.f32 %v3006, 1e-05
    %v3008 = vrsqrt.pop %v3007
    %v3009 = vmul.f32 %v3008, %v3007
    %v3010 = vmul.f32 %v3009, %v3008
    %v3011 = vmul.f32 0.5, %v3010
    %v3012 = vsub.f32 1.5, %v3011
    %v3013 = vmul.f32 %v3008, %v3012
    %vm3014 = vweird.f32 %v3007
    %vm3015 = vweird.f32 %v3008
    %vm3016 = vmor %vm3014, %vm3015
    %v3017 = vsel %vm3016, %v3008, %v3013
    %v3018 = vmul.f32 %v3001, %v3017
    %v3019 = vmul.f32 %v3018, %v2950
    %v3020 = vadd.f32 %v3019, %v2954
    %vm3021 = vcmp.gt.f32.partialorder %v3020, 0.0
    %v3022 = vmul.f32 %v3020, 0.01
    %v3023 = vsel %vm3021, %v3020, %v3022
    %v3024 = vld [vmem:[#allocation4 + $0x4] sm:$0xf]
    %v3025 = vld [vmem:[#allocation4 + $0xc4] sm:$0xf]
    %v3026 = vld [vmem:[#allocation4 + $0x184] sm:$0xf]
    %v3027 = vld [vmem:[#allocation4 + $0x244] sm:$0xf]
    %v3028 = vpack.c.bf16 %v3023, %v3023
    %v3029 = vld [vmem:[#allocation7 + $0x2] sm:$0x1]
    %v3031 = vperm.slane %v3029, 0
    %v3037 = vunpack.c.l.b16 %v3024
    %v3038 = vunpack.c.l.b16 %v3025
    %v3039 = vunpack.c.l.b16 %v3026
    %v3040 = vunpack.c.l.b16 %v3027
    %v3041 = vpack.c.b16 %v3038, %v3037
    %v3042 = vpack.c.b16 %v3040, %v3039
    %v3046 = vsel %vm2919, %v3028, 0
    %3048 = vmatpush.bf16.msra.mxu0 0
    %3049 = vmatpush.bf16.msra.mxu0 0
    %3050 = vmatpush.bf16.msra.mxu0 0
    %3051 = vmatpush.bf16.msra.mxu0 0
    %3052 = vmatpush.bf16.msra.mxu0 0
    %3053 = vmatpush.bf16.msra.mxu0 0
    %3054 = vmatpush.bf16.msra.mxu0 %v3042
    %3055 = vmatpush.bf16.msra.mxu0 %v3041
    %3056 = vmatmul.bf16.gmra.mxu0 %v3046
    %v3057 = vpop.f32.mrf.mxu0
    %v3058 = vadd.f32 %v3031, %v3057
    %v3059 = vpop.f32.mrf.mxu0
    %3060 = vdwg.mxu0
    %v3061 = vsel %vm2919, %v3058, 0.0
    %3062 = vadd.xlane.f32.xlu0 %v3061
    %v3063 = vpop.xlane.xlu0 %3062
    %v3064 = vmul.f32 %v3063, %v2929
    %v3065 = vsub.f32 %v3058, %v3064
    %v3066 = vmul.f32 %v3065, %v3065
    %v3067 = vsel %vm2919, %v3066, 0.0
    %3068 = vadd.xlane.f32.xlu0 %v3067
    %v3069 = vpop.xlane.xlu0 %3068
    %v3070 = vmul.f32 %v3069, %v2929
    %v3071 = vadd.f32 %v3070, 1e-05
    %v3072 = vrsqrt.pop %v3071
    %v3073 = vmul.f32 %v3072, %v3071
    %v3074 = vmul.f32 %v3073, %v3072
    %v3075 = vmul.f32 0.5, %v3074
    %v3076 = vsub.f32 1.5, %v3075
    %v3077 = vmul.f32 %v3072, %v3076
    %vm3078 = vweird.f32 %v3071
    %vm3079 = vweird.f32 %v3072
    %vm3080 = vmor %vm3078, %vm3079
    %v3081 = vsel %vm3080, %v3072, %v3077
    %v3082 = vmul.f32 %v3065, %v3081
    %v3083 = vmul.f32 %v3082, %v2950
    %v3084 = vadd.f32 %v3083, %v2954
    %vm3085 = vcmp.gt.f32.partialorder %v3084, 0.0
    %v3086 = vmul.f32 %v3084, 0.01
    %v3087 = vsel %vm3085, %v3084, %v3086
    %v3088 = vld [vmem:[#allocation4 + $0x8] sm:$0xf]
    %v3089 = vld [vmem:[#allocation4 + $0xc8] sm:$0xf]
    %v3090 = vld [vmem:[#allocation4 + $0x188] sm:$0xf]
    %v3091 = vld [vmem:[#allocation4 + $0x248] sm:$0xf]
    %v3092 = vpack.c.bf16 %v124, %v124
    %v3093 = vld [vmem:[#allocation7 + $0x5] sm:$0x1]
    %v3095 = vperm.slane %v3093, 0
    %v3101 = vunpack.c.l.b16 %v3088
    %v3102 = vunpack.c.l.b16 %v3089
    %v3103 = vunpack.c.l.b16 %v3090
    %v3104 = vunpack.c.l.b16 %v3091
    %v3105 = vpack.c.b16 %v3102, %v3101
    %v3106 = vpack.c.b16 %v3104, %v3103
    %v3110 = vsel %vm2919, %v3092, 0
    %3112 = vmatpush.bf16.msra.mxu0 0
    %3113 = vmatpush.bf16.msra.mxu0 0
    %3114 = vmatpush.bf16.msra.mxu0 0
    %3115 = vmatpush.bf16.msra.mxu0 0
    %3116 = vmatpush.bf16.msra.mxu0 0
    %3117 = vmatpush.bf16.msra.mxu0 0
    %3118 = vmatpush.bf16.msra.mxu0 %v3106
    %3119 = vmatpush.bf16.msra.mxu0 %v3105
    %3120 = vmatmul.bf16.gmra.mxu0 %v3110
    %v3121 = vpop.f32.mrf.mxu0
    %v3122 = vadd.f32 %v3095, %v3121
    %v3123 = vpop.f32.mrf.mxu0
    %3124 = vdwg.mxu0
    %3126 = vrot.lane.b32.xlu0 %v3122, 32
    %v3127 = vpop.permute.xlu0 %3126
    %v3129 = vadd.f32 %v2916, %v3127
    %v3130 = vxor.u32 %v3129, 2147483648
    %v3131 = vmul.f32 %v3130, 1.442695
    %v3132 = vpow.pop %v3131
    %v3133 = vadd.f32 %v3132, 1.0
    %v3134 = vrcp.pop %v3133
    %v3135 = vmul.f32 %v3133, %v3134
    %v3136 = vsub.f32 1.0, %v3135
    %v3137 = vmul.f32 %v3134, %v3136
    %v3138 = vadd.f32 %v3134, %v3137
    %vm3139 = vweird.f32 %v3133
    %vm3140 = vweird.f32 %v3134
    %vm3141 = vmor %vm3139, %vm3140
    %v3142 = vsel %vm3141, %v3134, %v3138
    %v3143 = vand.u32 2147483647, %v3133
    %vm3144 = vcmp.eq.f32.partialorder %v3143, 8.507059e+37
    %v3145 = vand.u32 %v3133, 2147483648
    %v3146 = vor.u32 1.1754944e-38, %v3145
    %v3147 = vsel %vm3144, %v3146, %v3142
    %v3148 = vmul.f32 1.0, %v3147
    %3149 = vrot.lane.b32.xlu0 %v3122, 96
    %v3150 = vpop.permute.xlu0 %3149
    %v3152 = vmul.f32 %v3148, %v3150
    %3154 = vrot.lane.b32.xlu0 %v3152, 64
    %v3155 = vpop.permute.xlu0 %3154
    %v3157 = vadd.f32 %v2916, %v3155
    %v3158 = vtanh.pop %v3157
    %v3159 = vsub.f32 1.0, %v3148
    %3161 = vrot.lane.b32.xlu0 %v3158, 96
    %v3162 = vpop.permute.xlu0 %3161
    %v3164 = vmul.f32 %v3159, %v3162
    %3166 = vrot.lane.b32.xlu0 %v124, 64
    %v3167 = vpop.permute.xlu0 %3166
    %v3169 = vmul.f32 %v3148, %v3167
    %v3170 = vadd.f32 %v3164, %v3169
    %v3171 = vld [vmem:[#allocation7 + $0x6] sm:$0x1]
    %v3172 = vld [vmem:[#allocation7 + $0x7] sm:$0x1]
    %3174 = vrot.lane.b32.xlu0 %v3170, 64
    %v3175 = vpop.permute.xlu0 %3174
    %v3177 = vsel %vm2919, %v3175, 0.0
    %3178 = vadd.xlane.f32.xlu0 %v3177
    %v3179 = vpop.xlane.xlu0 %3178
    %v3180 = vmul.f32 %v3179, %v2929
    %v3181 = vsub.f32 %v3170, %v3180
    %v3182 = vmul.f32 %v3181, %v3181
    %3184 = vrot.lane.b32.xlu0 %v3182, 64
    %v3185 = vpop.permute.xlu0 %3184
    %v3187 = vsel %vm2919, %v3185, 0.0
    %3188 = vadd.xlane.f32.xlu0 %v3187
    %v3189 = vpop.xlane.xlu0 %3188
    %v3190 = vmul.f32 %v3189, %v2929
    %v3191 = vadd.f32 %v3190, 1e-05
    %v3192 = vrsqrt.pop %v3191
    %v3193 = vmul.f32 %v3192, %v3191
    %v3194 = vmul.f32 %v3193, %v3192
    %v3195 = vmul.f32 0.5, %v3194
    %v3196 = vsub.f32 1.5, %v3195
    %v3197 = vmul.f32 %v3192, %v3196
    %vm3198 = vweird.f32 %v3191
    %vm3199 = vweird.f32 %v3192
    %vm3200 = vmor %vm3198, %vm3199
    %v3201 = vsel %vm3200, %v3192, %v3197
    %v3202 = vmul.f32 %v3181, %v3201
    %v3204 = vperm.slane %v3171, 0
    %3205 = vrot.lane.b32.xlu0 %v3204, 64
    %v3206 = vpop.permute.xlu0 %3205
    %v3208 = vmul.f32 %v3202, %v3206
    %v3210 = vperm.slane %v3172, 0
    %3211 = vrot.lane.b32.xlu0 %v3210, 64
    %v3212 = vpop.permute.xlu0 %3211
    %v3214 = vadd.f32 %v3208, %v3212
    %vm3215 = vcmp.gt.f32.partialorder %v3214, 0.0
    %v3216 = vmul.f32 %v3214, 0.01
    %v3217 = vsel %vm3215, %v3214, %v3216
    %v3218 = vld [vmem:[#allocation4 + $0xc] sm:$0xf]
    %v3219 = vld [vmem:[#allocation4 + $0xcc] sm:$0xf]
    %v3220 = vld [vmem:[#allocation4 + $0x18c] sm:$0xf]
    %v3221 = vld [vmem:[#allocation4 + $0x24c] sm:$0xf]
    %v3222 = vpack.c.bf16 %v3217, %v3217
    %v3223 = vld [vmem:[#allocation7 + $0x8] sm:$0x1]
    %v3225 = vperm.slane %v3223, 0
    %3228 = vrot.lane.b32.xlu0 %v3222, 64
    %v3229 = vpop.permute.xlu0 %3228
    %v3234 = vunpack.c.l.b16 %v3218
    %v3235 = vunpack.c.l.b16 %v3219
    %v3236 = vunpack.c.l.b16 %v3220
    %v3237 = vunpack.c.l.b16 %v3221
    %v3238 = vpack.c.b16 %v3235, %v3234
    %v3239 = vpack.c.b16 %v3237, %v3236
    %v3243 = vsel %vm2919, %v3229, 0
    %3245 = vmatpush.bf16.msra.mxu0 0
    %3246 = vmatpush.bf16.msra.mxu0 0
    %3247 = vmatpush.bf16.msra.mxu0 0
    %3248 = vmatpush.bf16.msra.mxu0 0
    %3249 = vmatpush.bf16.msra.mxu0 0
    %3250 = vmatpush.bf16.msra.mxu0 0
    %3251 = vmatpush.bf16.msra.mxu0 %v3239
    %3252 = vmatpush.bf16.msra.mxu0 %v3238
    %3253 = vmatmul.bf16.gmra.mxu0 %v3243
    %v3254 = vpop.f32.mrf.mxu0
    %v3255 = vadd.f32 %v3225, %v3254
    %v3256 = vpop.f32.mrf.mxu0
    %3257 = vdwg.mxu0
    %vm3258 = vcmp.gt.f32.partialorder %v3255, 0.0
    %v3259 = vmul.f32 %v3255, 0.01
    %v3260 = vsel %vm3258, %v3255, %v3259
    %v3261 = vld [vmem:[#allocation4 + $0x10] sm:$0xff]
    %v3262 = vld [vmem:[#allocation4 + $0xd0] sm:$0xff]
    %v3263 = vld [vmem:[#allocation4 + $0x190] sm:$0xff]
    %v3264 = vld [vmem:[#allocation4 + $0x250] sm:$0xff]
    %v3265 = vpack.c.bf16 %v3087, %v3087
    %v3266 = vld [vmem:[#allocation7 + $0x9] sm:$0x3]
    %v3268 = vperm.slane %v3266, 0
    %v3269 = vperm.slane %v3266, 1
    %v3276 = vunpack.c.l.b16 %v3261
    %v3277 = vunpack.c.h.b16 %v3261
    %v3278 = vunpack.c.l.b16 %v3262
    %v3279 = vunpack.c.h.b16 %v3262
    %v3280 = vunpack.c.l.b16 %v3263
    %v3281 = vunpack.c.h.b16 %v3263
    %v3282 = vunpack.c.l.b16 %v3264
    %v3283 = vunpack.c.h.b16 %v3264
    %v3284 = vpack.c.b16 %v3278, %v3276
    %v3285 = vpack.c.b16 %v3279, %v3277
    %v3286 = vpack.c.b16 %v3282, %v3280
    %v3287 = vpack.c.b16 %v3283, %v3281
    %v3293 = vsel %vm2919, %v3265, 0
    %3295 = vmatpush.bf16.msra.mxu0 0
    %3296 = vmatpush.bf16.msra.mxu0 0
    %3297 = vmatpush.bf16.msra.mxu0 0
    %3298 = vmatpush.bf16.msra.mxu0 0
    %3299 = vmatpush.bf16.msra.mxu0 0
    %3300 = vmatpush.bf16.msra.mxu0 0
    %3301 = vmatpush.bf16.msra.mxu0 %v3286
    %3302 = vmatpush.bf16.msra.mxu0 %v3284
    %3303 = vmatmul.bf16.gmra.mxu0 %v3293
    %v3304 = vpop.f32.mrf.mxu0
    %v3305 = vadd.f32 %v3268, %v3304
    %v3306 = vpop.f32.mrf.mxu0
    %3307 = vdwg.mxu0
    %3308 = vmatpush.bf16.msra.mxu0 0
    %3309 = vmatpush.bf16.msra.mxu0 0
    %3310 = vmatpush.bf16.msra.mxu0 0
    %3311 = vmatpush.bf16.msra.mxu0 0
    %3312 = vmatpush.bf16.msra.mxu0 0
    %3313 = vmatpush.bf16.msra.mxu0 0
    %3314 = vmatpush.bf16.msra.mxu0 %v3287
    %3315 = vmatpush.bf16.msra.mxu0 %v3285
    %3316 = vmatmul.bf16.gmra.mxu0 %v3293
    %v3317 = vpop.f32.mrf.mxu0
    %v3318 = vadd.f32 %v3269, %v3317
    %v3319 = vpop.f32.mrf.mxu0
    %3320 = vdwg.mxu0
    %vm3321 = vcmp.gt.f32.partialorder %v3305, 0.0
    %vm3322 = vcmp.gt.f32.partialorder %v3318, 0.0
    %v3323 = vmul.f32 %v3305, 0.01
    %v3324 = vmul.f32 %v3318, 0.01
    %v3325 = vsel %vm3321, %v3305, %v3323
    %v3326 = vsel %vm3322, %v3318, %v3324
    %v3327 = vld [vmem:[#allocation4 + $0xa4] sm:$0xff]
    %v3328 = vld [vmem:[#allocation4 + $0x164] sm:$0xff]
    %v3329 = vld [vmem:[#allocation4 + $0x224] sm:$0xff]
    %v3330 = vld [vmem:[#allocation4 + $0x2e4] sm:$0xff]
    %v3331 = vpack.c.bf16 %v3260, %v3260
    %v3332 = vld [vmem:[#allocation4 + $0xac] sm:$0xff]
    %v3333 = vld [vmem:[#allocation4 + $0x16c] sm:$0xff]
    %v3334 = vld [vmem:[#allocation4 + $0x22c] sm:$0xff]
    %v3335 = vld [vmem:[#allocation4 + $0x2ec] sm:$0xff]
    %v3336 = vpack.c.bf16 %v3325, %v3325
    %v3341 = vunpack.c.l.b16 %v3332
    %v3342 = vunpack.c.h.b16 %v3332
    %v3343 = vunpack.c.l.b16 %v3333
    %v3344 = vunpack.c.h.b16 %v3333
    %v3345 = vunpack.c.l.b16 %v3334
    %v3346 = vunpack.c.h.b16 %v3334
    %v3347 = vunpack.c.l.b16 %v3335
    %v3348 = vunpack.c.h.b16 %v3335
    %v3349 = vpack.c.b16 %v3343, %v3341
    %v3350 = vpack.c.b16 %v3344, %v3342
    %v3351 = vpack.c.b16 %v3347, %v3345
    %v3352 = vpack.c.b16 %v3348, %v3346
    %v3358 = vsel %vm2919, %v3336, 0
    %3360 = vmatpush.bf16.msra.mxu0 0
    %3361 = vmatpush.bf16.msra.mxu0 0
    %3362 = vmatpush.bf16.msra.mxu0 0
    %3363 = vmatpush.bf16.msra.mxu0 0
    %3364 = vmatpush.bf16.msra.mxu0 0
    %3365 = vmatpush.bf16.msra.mxu0 0
    %3366 = vmatpush.bf16.msra.mxu0 %v3351
    %3367 = vmatpush.bf16.msra.mxu0 %v3349
    %3368 = vmatmul.bf16.gmra.mxu0 %v3358
    %v3369 = vpop.f32.mrf.mxu0
    %v3370 = vadd.f32 0.0, %v3369
    %v3371 = vpop.f32.mrf.mxu0
    %3372 = vdwg.mxu0
    %3373 = vmatpush.bf16.msra.mxu0 0
    %3374 = vmatpush.bf16.msra.mxu0 0
    %3375 = vmatpush.bf16.msra.mxu0 0
    %3376 = vmatpush.bf16.msra.mxu0 0
    %3377 = vmatpush.bf16.msra.mxu0 0
    %3378 = vmatpush.bf16.msra.mxu0 0
    %3379 = vmatpush.bf16.msra.mxu0 %v3352
    %3380 = vmatpush.bf16.msra.mxu0 %v3350
    %3381 = vmatmul.bf16.gmra.mxu0 %v3358
    %v3382 = vpop.f32.mrf.mxu0
    %v3383 = vadd.f32 0.0, %v3382
    %v3384 = vpop.f32.mrf.mxu0
    %3385 = vdwg.mxu0
    %v3390 = vunpack.c.l.b16 %v3327
    %v3391 = vunpack.c.h.b16 %v3327
    %v3392 = vunpack.c.l.b16 %v3328
    %v3393 = vunpack.c.h.b16 %v3328
    %v3394 = vunpack.c.l.b16 %v3329
    %v3395 = vunpack.c.h.b16 %v3329
    %v3396 = vunpack.c.l.b16 %v3330
    %v3397 = vunpack.c.h.b16 %v3330
    %v3398 = vpack.c.b16 %v3392, %v3390
    %v3399 = vpack.c.b16 %v3393, %v3391
    %v3400 = vpack.c.b16 %v3396, %v3394
    %v3401 = vpack.c.b16 %v3397, %v3395
    %v3407 = vsel %vm2919, %v3331, 0
    %3409 = vmatpush.bf16.msra.mxu0 0
    %3410 = vmatpush.bf16.msra.mxu0 0
    %3411 = vmatpush.bf16.msra.mxu0 0
    %3412 = vmatpush.bf16.msra.mxu0 0
    %3413 = vmatpush.bf16.msra.mxu0 0
    %3414 = vmatpush.bf16.msra.mxu0 0
    %3415 = vmatpush.bf16.msra.mxu0 %v3400
    %3416 = vmatpush.bf16.msra.mxu0 %v3398
    %3417 = vmatmul.bf16.gmra.mxu0 %v3407
    %v3418 = vpop.f32.mrf.mxu0
    %v3419 = vadd.f32 %v3370, %v3418
    %v3420 = vpop.f32.mrf.mxu0
    %3421 = vdwg.mxu0
    %3422 = vmatpush.bf16.msra.mxu0 0
    %3423 = vmatpush.bf16.msra.mxu0 0
    %3424 = vmatpush.bf16.msra.mxu0 0
    %3425 = vmatpush.bf16.msra.mxu0 0
    %3426 = vmatpush.bf16.msra.mxu0 0
    %3427 = vmatpush.bf16.msra.mxu0 0
    %3428 = vmatpush.bf16.msra.mxu0 %v3401
    %3429 = vmatpush.bf16.msra.mxu0 %v3399
    %3430 = vmatmul.bf16.gmra.mxu0 %v3407
    %v3431 = vpop.f32.mrf.mxu0
    %v3432 = vadd.f32 %v3383, %v3431
    %v3433 = vpop.f32.mrf.mxu0
    %3434 = vdwg.mxu0
    %v3435 = vld [vmem:[#allocation7 + $0xb] sm:$0x3]
    %v3437 = vperm.slane %v3435, 0
    %v3438 = vperm.slane %v3435, 1
    %v3441 = vadd.f32 %v3419, %v3437
    %v3442 = vadd.f32 %v3432, %v3438
    %v3443 = vld [vmem:[#allocation4 + $0x18] sm:$0xff]
    %v3444 = vld [vmem:[#allocation4 + $0x20] sm:$0xff]
    %v3445 = vld [vmem:[#allocation4 + $0x28] sm:$0xff]
    %v3446 = vld [vmem:[#allocation4 + $0x30] sm:$0xff]
    %v3447 = vld [vmem:[#allocation4 + $0x38] sm:$0xff]
    %v3448 = vld [vmem:[#allocation4 + $0x40] sm:$0xff]
    %v3449 = vld [vmem:[#allocation4 + $0x48] sm:$0xff]
    %v3450 = vld [vmem:[#allocation4 + $0x50] sm:$0xff]
    %v3451 = vld [vmem:[#allocation4 + $0x58] sm:$0xff]
    %v3452 = vld [vmem:[#allocation4 + $0x60] sm:$0xff]
    %v3453 = vld [vmem:[#allocation4 + $0x68] sm:$0xff]
    %v3454 = vld [vmem:[#allocation4 + $0x70] sm:$0xff]
    %v3455 = vld [vmem:[#allocation4 + $0x78] sm:$0xff]
    %v3456 = vld [vmem:[#allocation4 + $0x80] sm:$0xff]
    %v3457 = vld [vmem:[#allocation4 + $0x88] sm:$0xff]
    %v3458 = vld [vmem:[#allocation4 + $0x90] sm:$0xff]
    %v3459 = vld [vmem:[#allocation4 + $0x98] sm:$0xff]
    %v3460 = vld [vmem:[#allocation4 + $0xa0] sm:$0xf]
    %v3461 = vld [vmem:[#allocation4 + $0xd8] sm:$0xff]
    %v3462 = vld [vmem:[#allocation4 + $0xe0] sm:$0xff]
    %v3463 = vld [vmem:[#allocation4 + $0xe8] sm:$0xff]
    %v3464 = vld [vmem:[#allocation4 + $0xf0] sm:$0xff]
    %v3465 = vld [vmem:[#allocation4 + $0xf8] sm:$0xff]
    %v3466 = vld [vmem:[#allocation4 + $0x100] sm:$0xff]
    %v3467 = vld [vmem:[#allocation4 + $0x108] sm:$0xff]
    %v3468 = vld [vmem:[#allocation4 + $0x110] sm:$0xff]
    %v3469 = vld [vmem:[#allocation4 + $0x118] sm:$0xff]
    %v3470 = vld [vmem:[#allocation4 + $0x120] sm:$0xff]
    %v3471 = vld [vmem:[#allocation4 + $0x128] sm:$0xff]
    %v3472 = vld [vmem:[#allocation4 + $0x130] sm:$0xff]
    %v3473 = vld [vmem:[#allocation4 + $0x138] sm:$0xff]
    %v3474 = vld [vmem:[#allocation4 + $0x140] sm:$0xff]
    %v3475 = vld [vmem:[#allocation4 + $0x148] sm:$0xff]
    %v3476 = vld [vmem:[#allocation4 + $0x150] sm:$0xff]
    %v3477 = vld [vmem:[#allocation4 + $0x158] sm:$0xff]
    %v3478 = vld [vmem:[#allocation4 + $0x160] sm:$0xf]
    %v3479 = vld [vmem:[#allocation4 + $0x198] sm:$0xff]
    %v3480 = vld [vmem:[#allocation4 + $0x1a0] sm:$0xff]
    %v3481 = vld [vmem:[#allocation4 + $0x1a8] sm:$0xff]
    %v3482 = vld [vmem:[#allocation4 + $0x1b0] sm:$0xff]
    %v3483 = vld [vmem:[#allocation4 + $0x1b8] sm:$0xff]
    %v3484 = vld [vmem:[#allocation4 + $0x1c0] sm:$0xff]
    %v3485 = vld [vmem:[#allocation4 + $0x1c8] sm:$0xff]
    %v3486 = vld [vmem:[#allocation4 + $0x1d0] sm:$0xff]
    %v3487 = vld [vmem:[#allocation4 + $0x1d8] sm:$0xff]
    %v3488 = vld [vmem:[#allocation4 + $0x1e0] sm:$0xff]
    %v3489 = vld [vmem:[#allocation4 + $0x1e8] sm:$0xff]
    %v3490 = vld [vmem:[#allocation4 + $0x1f0] sm:$0xff]
    %v3491 = vld [vmem:[#allocation4 + $0x1f8] sm:$0xff]
    %v3492 = vld [vmem:[#allocation4 + $0x200] sm:$0xff]
    %v3493 = vld [vmem:[#allocation4 + $0x208] sm:$0xff]
    %v3494 = vld [vmem:[#allocation4 + $0x210] sm:$0xff]
    %v3495 = vld [vmem:[#allocation4 + $0x218] sm:$0xff]
    %v3496 = vld [vmem:[#allocation4 + $0x220] sm:$0xf]
    %v3497 = vld [vmem:[#allocation4 + $0x258] sm:$0xff]
    %v3498 = vld [vmem:[#allocation4 + $0x260] sm:$0xff]
    %v3499 = vld [vmem:[#allocation4 + $0x268] sm:$0xff]
    %v3500 = vld [vmem:[#allocation4 + $0x270] sm:$0xff]
    %v3501 = vld [vmem:[#allocation4 + $0x278] sm:$0xff]
    %v3502 = vld [vmem:[#allocation4 + $0x280] sm:$0xff]
    %v3503 = vld [vmem:[#allocation4 + $0x288] sm:$0xff]
    %v3504 = vld [vmem:[#allocation4 + $0x290] sm:$0xff]
    %v3505 = vld [vmem:[#allocation4 + $0x298] sm:$0xff]
    %v3506 = vld [vmem:[#allocation4 + $0x2a0] sm:$0xff]
    %v3507 = vld [vmem:[#allocation4 + $0x2a8] sm:$0xff]
    %v3508 = vld [vmem:[#allocation4 + $0x2b0] sm:$0xff]
    %v3509 = vld [vmem:[#allocation4 + $0x2b8] sm:$0xff]
    %v3510 = vld [vmem:[#allocation4 + $0x2c0] sm:$0xff]
    %v3511 = vld [vmem:[#allocation4 + $0x2c8] sm:$0xff]
    %v3512 = vld [vmem:[#allocation4 + $0x2d0] sm:$0xff]
    %v3513 = vld [vmem:[#allocation4 + $0x2d8] sm:$0xff]
    %v3514 = vld [vmem:[#allocation4 + $0x2e0] sm:$0xf]
    %v3515 = vld [vmem:[#allocation7 + $0xd] sm:$0xff]
    %v3516 = vld [vmem:[#allocation7 + $0x15] sm:$0xff]
    %v3517 = vld [vmem:[#allocation7 + $0x1d] sm:$0xff]
    %v3518 = vld [vmem:[#allocation7 + $0x25] sm:$0xff]
    %v3519 = vld [vmem:[#allocation7 + $0x2d] sm:$0x7]
    %v3525 = vperm.slane %v3515, 0
    %v3526 = vperm.slane %v3515, 1
    %v3527 = vperm.slane %v3515, 2
    %v3528 = vperm.slane %v3515, 3
    %v3529 = vperm.slane %v3515, 4
    %v3530 = vperm.slane %v3515, 5
    %v3531 = vperm.slane %v3515, 6
    %v3532 = vperm.slane %v3515, 7
    %v3533 = vperm.slane %v3516, 0
    %v3534 = vperm.slane %v3516, 1
    %v3535 = vperm.slane %v3516, 2
    %v3536 = vperm.slane %v3516, 3
    %v3537 = vperm.slane %v3516, 4
    %v3538 = vperm.slane %v3516, 5
    %v3539 = vperm.slane %v3516, 6
    %v3540 = vperm.slane %v3516, 7
    %v3541 = vperm.slane %v3517, 0
    %v3542 = vperm.slane %v3517, 1
    %v3543 = vperm.slane %v3517, 2
    %v3544 = vperm.slane %v3517, 3
    %v3545 = vperm.slane %v3517, 4
    %v3546 = vperm.slane %v3517, 5
    %v3547 = vperm.slane %v3517, 6
    %v3548 = vperm.slane %v3517, 7
    %v3549 = vperm.slane %v3518, 0
    %v3550 = vperm.slane %v3518, 1
    %v3551 = vperm.slane %v3518, 2
    %v3552 = vperm.slane %v3518, 3
    %v3553 = vperm.slane %v3518, 4
    %v3554 = vperm.slane %v3518, 5
    %v3555 = vperm.slane %v3518, 6
    %v3556 = vperm.slane %v3518, 7
    %v3557 = vperm.slane %v3519, 0
    %v3558 = vperm.slane %v3519, 1
    %v3559 = vperm.slane %v3519, 2
    %3596 = vrot.lane.b32.xlu0 %v3336, 96
    %v3597 = vpop.permute.xlu0 %3596
    %v3670 = vunpack.c.l.b16 %v3443
    %v3671 = vunpack.c.h.b16 %v3443
    %v3672 = vunpack.c.l.b16 %v3444
    %v3673 = vunpack.c.h.b16 %v3444
    %v3674 = vunpack.c.l.b16 %v3445
    %v3675 = vunpack.c.h.b16 %v3445
    %v3676 = vunpack.c.l.b16 %v3446
    %v3677 = vunpack.c.h.b16 %v3446
    %v3678 = vunpack.c.l.b16 %v3447
    %v3679 = vunpack.c.h.b16 %v3447
    %v3680 = vunpack.c.l.b16 %v3448
    %v3681 = vunpack.c.h.b16 %v3448
    %v3682 = vunpack.c.l.b16 %v3449
    %v3683 = vunpack.c.h.b16 %v3449
    %v3684 = vunpack.c.l.b16 %v3450
    %v3685 = vunpack.c.h.b16 %v3450
    %v3686 = vunpack.c.l.b16 %v3451
    %v3687 = vunpack.c.h.b16 %v3451
    %v3688 = vunpack.c.l.b16 %v3452
    %v3689 = vunpack.c.h.b16 %v3452
    %v3690 = vunpack.c.l.b16 %v3453
    %v3691 = vunpack.c.h.b16 %v3453
    %v3692 = vunpack.c.l.b16 %v3454
    %v3693 = vunpack.c.h.b16 %v3454
    %v3694 = vunpack.c.l.b16 %v3455
    %v3695 = vunpack.c.h.b16 %v3455
    %v3696 = vunpack.c.l.b16 %v3456
    %v3697 = vunpack.c.h.b16 %v3456
    %v3698 = vunpack.c.l.b16 %v3457
    %v3699 = vunpack.c.h.b16 %v3457
    %v3700 = vunpack.c.l.b16 %v3458
    %v3701 = vunpack.c.h.b16 %v3458
    %v3702 = vunpack.c.l.b16 %v3459
    %v3703 = vunpack.c.h.b16 %v3459
    %v3704 = vunpack.c.l.b16 %v3460
    %v3705 = vunpack.c.l.b16 %v3461
    %v3706 = vunpack.c.h.b16 %v3461
    %v3707 = vunpack.c.l.b16 %v3462
    %v3708 = vunpack.c.h.b16 %v3462
    %v3709 = vunpack.c.l.b16 %v3463
    %v3710 = vunpack.c.h.b16 %v3463
    %v3711 = vunpack.c.l.b16 %v3464
    %v3712 = vunpack.c.h.b16 %v3464
    %v3713 = vunpack.c.l.b16 %v3465
    %v3714 = vunpack.c.h.b16 %v3465
    %v3715 = vunpack.c.l.b16 %v3466
    %v3716 = vunpack.c.h.b16 %v3466
    %v3717 = vunpack.c.l.b16 %v3467
    %v3718 = vunpack.c.h.b16 %v3467
    %v3719 = vunpack.c.l.b16 %v3468
    %v3720 = vunpack.c.h.b16 %v3468
    %v3721 = vunpack.c.l.b16 %v3469
    %v3722 = vunpack.c.h.b16 %v3469
    %v3723 = vunpack.c.l.b16 %v3470
    %v3724 = vunpack.c.h.b16 %v3470
    %v3725 = vunpack.c.l.b16 %v3471
    %v3726 = vunpack.c.h.b16 %v3471
    %v3727 = vunpack.c.l.b16 %v3472
    %v3728 = vunpack.c.h.b16 %v3472
    %v3729 = vunpack.c.l.b16 %v3473
    %v3730 = vunpack.c.h.b16 %v3473
    %v3731 = vunpack.c.l.b16 %v3474
    %v3732 = vunpack.c.h.b16 %v3474
    %v3733 = vunpack.c.l.b16 %v3475
    %v3734 = vunpack.c.h.b16 %v3475
    %v3735 = vunpack.c.l.b16 %v3476
    %v3736 = vunpack.c.h.b16 %v3476
    %v3737 = vunpack.c.l.b16 %v3477
    %v3738 = vunpack.c.h.b16 %v3477
    %v3739 = vunpack.c.l.b16 %v3478
    %v3740 = vunpack.c.l.b16 %v3479
    %v3741 = vunpack.c.h.b16 %v3479
    %v3742 = vunpack.c.l.b16 %v3480
    %v3743 = vunpack.c.h.b16 %v3480
    %v3744 = vunpack.c.l.b16 %v3481
    %v3745 = vunpack.c.h.b16 %v3481
    %v3746 = vunpack.c.l.b16 %v3482
    %v3747 = vunpack.c.h.b16 %v3482
    %v3748 = vunpack.c.l.b16 %v3483
    %v3749 = vunpack.c.h.b16 %v3483
    %v3750 = vunpack.c.l.b16 %v3484
    %v3751 = vunpack.c.h.b16 %v3484
    %v3752 = vunpack.c.l.b16 %v3485
    %v3753 = vunpack.c.h.b16 %v3485
    %v3754 = vunpack.c.l.b16 %v3486
    %v3755 = vunpack.c.h.b16 %v3486
    %v3756 = vunpack.c.l.b16 %v3487
    %v3757 = vunpack.c.h.b16 %v3487
    %v3758 = vunpack.c.l.b16 %v3488
    %v3759 = vunpack.c.h.b16 %v3488
    %v3760 = vunpack.c.l.b16 %v3489
    %v3761 = vunpack.c.h.b16 %v3489
    %v3762 = vunpack.c.l.b16 %v3490
    %v3763 = vunpack.c.h.b16 %v3490
    %v3764 = vunpack.c.l.b16 %v3491
    %v3765 = vunpack.c.h.b16 %v3491
    %v3766 = vunpack.c.l.b16 %v3492
    %v3767 = vunpack.c.h.b16 %v3492
    %v3768 = vunpack.c.l.b16 %v3493
    %v3769 = vunpack.c.h.b16 %v3493
    %v3770 = vunpack.c.l.b16 %v3494
    %v3771 = vunpack.c.h.b16 %v3494
    %v3772 = vunpack.c.l.b16 %v3495
    %v3773 = vunpack.c.h.b16 %v3495
    %v3774 = vunpack.c.l.b16 %v3496
    %v3775 = vunpack.c.l.b16 %v3497
    %v3776 = vunpack.c.h.b16 %v3497
    %v3777 = vunpack.c.l.b16 %v3498
    %v3778 = vunpack.c.h.b16 %v3498
    %v3779 = vunpack.c.l.b16 %v3499
    %v3780 = vunpack.c.h.b16 %v3499
    %v3781 = vunpack.c.l.b16 %v3500
    %v3782 = vunpack.c.h.b16 %v3500
    %v3783 = vunpack.c.l.b16 %v3501
    %v3784 = vunpack.c.h.b16 %v3501
    %v3785 = vunpack.c.l.b16 %v3502
    %v3786 = vunpack.c.h.b16 %v3502
    %v3787 = vunpack.c.l.b16 %v3503
    %v3788 = vunpack.c.h.b16 %v3503
    %v3789 = vunpack.c.l.b16 %v3504
    %v3790 = vunpack.c.h.b16 %v3504
    %v3791 = vunpack.c.l.b16 %v3505
    %v3792 = vunpack.c.h.b16 %v3505
    %v3793 = vunpack.c.l.b16 %v3506
    %v3794 = vunpack.c.h.b16 %v3506
    %v3795 = vunpack.c.l.b16 %v3507
    %v3796 = vunpack.c.h.b16 %v3507
    %v3797 = vunpack.c.l.b16 %v3508
    %v3798 = vunpack.c.h.b16 %v3508
    %v3799 = vunpack.c.l.b16 %v3509
    %v3800 = vunpack.c.h.b16 %v3509
    %v3801 = vunpack.c.l.b16 %v3510
    %v3802 = vunpack.c.h.b16 %v3510
    %v3803 = vunpack.c.l.b16 %v3511
    %v3804 = vunpack.c.h.b16 %v3511
    %v3805 = vunpack.c.l.b16 %v3512
    %v3806 = vunpack.c.h.b16 %v3512
    %v3807 = vunpack.c.l.b16 %v3513
    %v3808 = vunpack.c.h.b16 %v3513
    %v3809 = vunpack.c.l.b16 %v3514
    %v3810 = vpack.c.b16 %v3705, %v3670
    %v3811 = vpack.c.b16 %v3706, %v3671
    %v3812 = vpack.c.b16 %v3707, %v3672
    %v3813 = vpack.c.b16 %v3708, %v3673
    %v3814 = vpack.c.b16 %v3709, %v3674
    %v3815 = vpack.c.b16 %v3710, %v3675
    %v3816 = vpack.c.b16 %v3711, %v3676
    %v3817 = vpack.c.b16 %v3712, %v3677
    %v3818 = vpack.c.b16 %v3713, %v3678
    %v3819 = vpack.c.b16 %v3714, %v3679
    %v3820 = vpack.c.b16 %v3715, %v3680
    %v3821 = vpack.c.b16 %v3716, %v3681
    %v3822 = vpack.c.b16 %v3717, %v3682
    %v3823 = vpack.c.b16 %v3718, %v3683
    %v3824 = vpack.c.b16 %v3719, %v3684
    %v3825 = vpack.c.b16 %v3720, %v3685
    %v3826 = vpack.c.b16 %v3721, %v3686
    %v3827 = vpack.c.b16 %v3722, %v3687
    %v3828 = vpack.c.b16 %v3723, %v3688
    %v3829 = vpack.c.b16 %v3724, %v3689
    %v3830 = vpack.c.b16 %v3725, %v3690
    %v3831 = vpack.c.b16 %v3726, %v3691
    %v3832 = vpack.c.b16 %v3727, %v3692
    %v3833 = vpack.c.b16 %v3728, %v3693
    %v3834 = vpack.c.b16 %v3729, %v3694
    %v3835 = vpack.c.b16 %v3730, %v3695
    %v3836 = vpack.c.b16 %v3731, %v3696
    %v3837 = vpack.c.b16 %v3732, %v3697
    %v3838 = vpack.c.b16 %v3733, %v3698
    %v3839 = vpack.c.b16 %v3734, %v3699
    %v3840 = vpack.c.b16 %v3735, %v3700
    %v3841 = vpack.c.b16 %v3736, %v3701
    %v3842 = vpack.c.b16 %v3737, %v3702
    %v3843 = vpack.c.b16 %v3738, %v3703
    %v3844 = vpack.c.b16 %v3739, %v3704
    %v3845 = vpack.c.b16 %v3775, %v3740
    %v3846 = vpack.c.b16 %v3776, %v3741
    %v3847 = vpack.c.b16 %v3777, %v3742
    %v3848 = vpack.c.b16 %v3778, %v3743
    %v3849 = vpack.c.b16 %v3779, %v3744
    %v3850 = vpack.c.b16 %v3780, %v3745
    %v3851 = vpack.c.b16 %v3781, %v3746
    %v3852 = vpack.c.b16 %v3782, %v3747
    %v3853 = vpack.c.b16 %v3783, %v3748
    %v3854 = vpack.c.b16 %v3784, %v3749
    %v3855 = vpack.c.b16 %v3785, %v3750
    %v3856 = vpack.c.b16 %v3786, %v3751
    %v3857 = vpack.c.b16 %v3787, %v3752
    %v3858 = vpack.c.b16 %v3788, %v3753
    %v3859 = vpack.c.b16 %v3789, %v3754
    %v3860 = vpack.c.b16 %v3790, %v3755
    %v3861 = vpack.c.b16 %v3791, %v3756
    %v3862 = vpack.c.b16 %v3792, %v3757
    %v3863 = vpack.c.b16 %v3793, %v3758
    %v3864 = vpack.c.b16 %v3794, %v3759
    %v3865 = vpack.c.b16 %v3795, %v3760
    %v3866 = vpack.c.b16 %v3796, %v3761
    %v3867 = vpack.c.b16 %v3797, %v3762
    %v3868 = vpack.c.b16 %v3798, %v3763
    %v3869 = vpack.c.b16 %v3799, %v3764
    %v3870 = vpack.c.b16 %v3800, %v3765
    %v3871 = vpack.c.b16 %v3801, %v3766
    %v3872 = vpack.c.b16 %v3802, %v3767
    %v3873 = vpack.c.b16 %v3803, %v3768
    %v3874 = vpack.c.b16 %v3804, %v3769
    %v3875 = vpack.c.b16 %v3805, %v3770
    %v3876 = vpack.c.b16 %v3806, %v3771
    %v3877 = vpack.c.b16 %v3807, %v3772
    %v3878 = vpack.c.b16 %v3808, %v3773
    %v3879 = vpack.c.b16 %v3809, %v3774
    %v3951 = vsel %vm2919, %v3597, 0
    %3953 = vmatpush.bf16.msra.mxu0 0
    %3954 = vmatpush.bf16.msra.mxu0 0
    %3955 = vmatpush.bf16.msra.mxu0 0
    %3956 = vmatpush.bf16.msra.mxu0 0
    %3957 = vmatpush.bf16.msra.mxu0 0
    %3958 = vmatpush.bf16.msra.mxu0 0
    %3959 = vmatpush.bf16.msra.mxu0 %v3845
    %3960 = vmatpush.bf16.msra.mxu0 %v3810
    %3961 = vmatmul.bf16.gmra.mxu0 %v3951
    %v3962 = vpop.f32.mrf.mxu0
    %v3963 = vadd.f32 %v3525, %v3962
    %v3964 = vpop.f32.mrf.mxu0
    %3965 = vdwg.mxu0
    %3966 = vmatpush.bf16.msra.mxu0 0
    %3967 = vmatpush.bf16.msra.mxu0 0
    %3968 = vmatpush.bf16.msra.mxu0 0
    %3969 = vmatpush.bf16.msra.mxu0 0
    %3970 = vmatpush.bf16.msra.mxu0 0
    %3971 = vmatpush.bf16.msra.mxu0 0
    %3972 = vmatpush.bf16.msra.mxu0 %v3846
    %3973 = vmatpush.bf16.msra.mxu0 %v3811
    %3974 = vmatmul.bf16.gmra.mxu0 %v3951
    %v3975 = vpop.f32.mrf.mxu0
    %v3976 = vadd.f32 %v3526, %v3975
    %v3977 = vpop.f32.mrf.mxu0
    %3978 = vdwg.mxu0
    %3979 = vmatpush.bf16.msra.mxu0 0
    %3980 = vmatpush.bf16.msra.mxu0 0
    %3981 = vmatpush.bf16.msra.mxu0 0
    %3982 = vmatpush.bf16.msra.mxu0 0
    %3983 = vmatpush.bf16.msra.mxu0 0
    %3984 = vmatpush.bf16.msra.mxu0 0
    %3985 = vmatpush.bf16.msra.mxu0 %v3847
    %3986 = vmatpush.bf16.msra.mxu0 %v3812
    %3987 = vmatmul.bf16.gmra.mxu0 %v3951
    %v3988 = vpop.f32.mrf.mxu0
    %v3989 = vadd.f32 %v3527, %v3988
    %v3990 = vpop.f32.mrf.mxu0
    %3991 = vdwg.mxu0
    %3992 = vmatpush.bf16.msra.mxu0 0
    %3993 = vmatpush.bf16.msra.mxu0 0
    %3994 = vmatpush.bf16.msra.mxu0 0
    %3995 = vmatpush.bf16.msra.mxu0 0
    %3996 = vmatpush.bf16.msra.mxu0 0
    %3997 = vmatpush.bf16.msra.mxu0 0
    %3998 = vmatpush.bf16.msra.mxu0 %v3848
    %3999 = vmatpush.bf16.msra.mxu0 %v3813
    %4000 = vmatmul.bf16.gmra.mxu0 %v3951
    %v4001 = vpop.f32.mrf.mxu0
    %v4002 = vadd.f32 %v3528, %v4001
    %v4003 = vpop.f32.mrf.mxu0
    %4004 = vdwg.mxu0
    %4005 = vmatpush.bf16.msra.mxu0 0
    %4006 = vmatpush.bf16.msra.mxu0 0
    %4007 = vmatpush.bf16.msra.mxu0 0
    %4008 = vmatpush.bf16.msra.mxu0 0
    %4009 = vmatpush.bf16.msra.mxu0 0
    %4010 = vmatpush.bf16.msra.mxu0 0
    %4011 = vmatpush.bf16.msra.mxu0 %v3849
    %4012 = vmatpush.bf16.msra.mxu0 %v3814
    %4013 = vmatmul.bf16.gmra.mxu0 %v3951
    %v4014 = vpop.f32.mrf.mxu0
    %v4015 = vadd.f32 %v3529, %v4014
    %v4016 = vpop.f32.mrf.mxu0
    %4017 = vdwg.mxu0
    %4018 = vmatpush.bf16.msra.mxu0 0
    %4019 = vmatpush.bf16.msra.mxu0 0
    %4020 = vmatpush.bf16.msra.mxu0 0
    %4021 = vmatpush.bf16.msra.mxu0 0
    %4022 = vmatpush.bf16.msra.mxu0 0
    %4023 = vmatpush.bf16.msra.mxu0 0
    %4024 = vmatpush.bf16.msra.mxu0 %v3850
    %4025 = vmatpush.bf16.msra.mxu0 %v3815
    %4026 = vmatmul.bf16.gmra.mxu0 %v3951
    %v4027 = vpop.f32.mrf.mxu0
    %v4028 = vadd.f32 %v3530, %v4027
    %v4029 = vpop.f32.mrf.mxu0
    %4030 = vdwg.mxu0
    %4031 = vmatpush.bf16.msra.mxu0 0
    %4032 = vmatpush.bf16.msra.mxu0 0
    %4033 = vmatpush.bf16.msra.mxu0 0
    %4034 = vmatpush.bf16.msra.mxu0 0
    %4035 = vmatpush.bf16.msra.mxu0 0
    %4036 = vmatpush.bf16.msra.mxu0 0
    %4037 = vmatpush.bf16.msra.mxu0 %v3851
    %4038 = vmatpush.bf16.msra.mxu0 %v3816
    %4039 = vmatmul.bf16.gmra.mxu0 %v3951
    %v4040 = vpop.f32.mrf.mxu0
    %v4041 = vadd.f32 %v3531, %v4040
    %v4042 = vpop.f32.mrf.mxu0
    %4043 = vdwg.mxu0
    %4044 = vmatpush.bf16.msra.mxu0 0
    %4045 = vmatpush.bf16.msra.mxu0 0
    %4046 = vmatpush.bf16.msra.mxu0 0
    %4047 = vmatpush.bf16.msra.mxu0 0
    %4048 = vmatpush.bf16.msra.mxu0 0
    %4049 = vmatpush.bf16.msra.mxu0 0
    %4050 = vmatpush.bf16.msra.mxu0 %v3852
    %4051 = vmatpush.bf16.msra.mxu0 %v3817
    %4052 = vmatmul.bf16.gmra.mxu0 %v3951
    %v4053 = vpop.f32.mrf.mxu0
    %v4054 = vadd.f32 %v3532, %v4053
    %v4055 = vpop.f32.mrf.mxu0
    %4056 = vdwg.mxu0
    %4057 = vmatpush.bf16.msra.mxu0 0
    %4058 = vmatpush.bf16.msra.mxu0 0
    %4059 = vmatpush.bf16.msra.mxu0 0
    %4060 = vmatpush.bf16.msra.mxu0 0
    %4061 = vmatpush.bf16.msra.mxu0 0
    %4062 = vmatpush.bf16.msra.mxu0 0
    %4063 = vmatpush.bf16.msra.mxu0 %v3853
    %4064 = vmatpush.bf16.msra.mxu0 %v3818
    %4065 = vmatmul.bf16.gmra.mxu0 %v3951
    %v4066 = vpop.f32.mrf.mxu0
    %v4067 = vadd.f32 %v3533, %v4066
    %v4068 = vpop.f32.mrf.mxu0
    %4069 = vdwg.mxu0
    %4070 = vmatpush.bf16.msra.mxu0 0
    %4071 = vmatpush.bf16.msra.mxu0 0
    %4072 = vmatpush.bf16.msra.mxu0 0
    %4073 = vmatpush.bf16.msra.mxu0 0
    %4074 = vmatpush.bf16.msra.mxu0 0
    %4075 = vmatpush.bf16.msra.mxu0 0
    %4076 = vmatpush.bf16.msra.mxu0 %v3854
    %4077 = vmatpush.bf16.msra.mxu0 %v3819
    %4078 = vmatmul.bf16.gmra.mxu0 %v3951
    %v4079 = vpop.f32.mrf.mxu0
    %v4080 = vadd.f32 %v3534, %v4079
    %v4081 = vpop.f32.mrf.mxu0
    %4082 = vdwg.mxu0
    %4083 = vmatpush.bf16.msra.mxu0 0
    %4084 = vmatpush.bf16.msra.mxu0 0
    %4085 = vmatpush.bf16.msra.mxu0 0
    %4086 = vmatpush.bf16.msra.mxu0 0
    %4087 = vmatpush.bf16.msra.mxu0 0
    %4088 = vmatpush.bf16.msra.mxu0 0
    %4089 = vmatpush.bf16.msra.mxu0 %v3855
    %4090 = vmatpush.bf16.msra.mxu0 %v3820
    %4091 = vmatmul.bf16.gmra.mxu0 %v3951
    %v4092 = vpop.f32.mrf.mxu0
    %v4093 = vadd.f32 %v3535, %v4092
    %v4094 = vpop.f32.mrf.mxu0
    %4095 = vdwg.mxu0
    %4096 = vmatpush.bf16.msra.mxu0 0
    %4097 = vmatpush.bf16.msra.mxu0 0
    %4098 = vmatpush.bf16.msra.mxu0 0
    %4099 = vmatpush.bf16.msra.mxu0 0
    %4100 = vmatpush.bf16.msra.mxu0 0
    %4101 = vmatpush.bf16.msra.mxu0 0
    %4102 = vmatpush.bf16.msra.mxu0 %v3856
    %4103 = vmatpush.bf16.msra.mxu0 %v3821
    %4104 = vmatmul.bf16.gmra.mxu0 %v3951
    %v4105 = vpop.f32.mrf.mxu0
    %v4106 = vadd.f32 %v3536, %v4105
    %v4107 = vpop.f32.mrf.mxu0
    %4108 = vdwg.mxu0
    %4109 = vmatpush.bf16.msra.mxu0 0
    %4110 = vmatpush.bf16.msra.mxu0 0
    %4111 = vmatpush.bf16.msra.mxu0 0
    %4112 = vmatpush.bf16.msra.mxu0 0
    %4113 = vmatpush.bf16.msra.mxu0 0
    %4114 = vmatpush.bf16.msra.mxu0 0
    %4115 = vmatpush.bf16.msra.mxu0 %v3857
    %4116 = vmatpush.bf16.msra.mxu0 %v3822
    %4117 = vmatmul.bf16.gmra.mxu0 %v3951
    %v4118 = vpop.f32.mrf.mxu0
    %v4119 = vadd.f32 %v3537, %v4118
    %v4120 = vpop.f32.mrf.mxu0
    %4121 = vdwg.mxu0
    %4122 = vmatpush.bf16.msra.mxu0 0
    %4123 = vmatpush.bf16.msra.mxu0 0
    %4124 = vmatpush.bf16.msra.mxu0 0
    %4125 = vmatpush.bf16.msra.mxu0 0
    %4126 = vmatpush.bf16.msra.mxu0 0
    %4127 = vmatpush.bf16.msra.mxu0 0
    %4128 = vmatpush.bf16.msra.mxu0 %v3858
    %4129 = vmatpush.bf16.msra.mxu0 %v3823
    %4130 = vmatmul.bf16.gmra.mxu0 %v3951
    %v4131 = vpop.f32.mrf.mxu0
    %v4132 = vadd.f32 %v3538, %v4131
    %v4133 = vpop.f32.mrf.mxu0
    %4134 = vdwg.mxu0
    %4135 = vmatpush.bf16.msra.mxu0 0
    %4136 = vmatpush.bf16.msra.mxu0 0
    %4137 = vmatpush.bf16.msra.mxu0 0
    %4138 = vmatpush.bf16.msra.mxu0 0
    %4139 = vmatpush.bf16.msra.mxu0 0
    %4140 = vmatpush.bf16.msra.mxu0 0
    %4141 = vmatpush.bf16.msra.mxu0 %v3859
    %4142 = vmatpush.bf16.msra.mxu0 %v3824
    %4143 = vmatmul.bf16.gmra.mxu0 %v3951
    %v4144 = vpop.f32.mrf.mxu0
    %v4145 = vadd.f32 %v3539, %v4144
    %v4146 = vpop.f32.mrf.mxu0
    %4147 = vdwg.mxu0
    %4148 = vmatpush.bf16.msra.mxu0 0
    %4149 = vmatpush.bf16.msra.mxu0 0
    %4150 = vmatpush.bf16.msra.mxu0 0
    %4151 = vmatpush.bf16.msra.mxu0 0
    %4152 = vmatpush.bf16.msra.mxu0 0
    %4153 = vmatpush.bf16.msra.mxu0 0
    %4154 = vmatpush.bf16.msra.mxu0 %v3860
    %4155 = vmatpush.bf16.msra.mxu0 %v3825
    %4156 = vmatmul.bf16.gmra.mxu0 %v3951
    %v4157 = vpop.f32.mrf.mxu0
    %v4158 = vadd.f32 %v3540, %v4157
    %v4159 = vpop.f32.mrf.mxu0
    %4160 = vdwg.mxu0
    %4161 = vmatpush.bf16.msra.mxu0 0
    %4162 = vmatpush.bf16.msra.mxu0 0
    %4163 = vmatpush.bf16.msra.mxu0 0
    %4164 = vmatpush.bf16.msra.mxu0 0
    %4165 = vmatpush.bf16.msra.mxu0 0
    %4166 = vmatpush.bf16.msra.mxu0 0
    %4167 = vmatpush.bf16.msra.mxu0 %v3861
    %4168 = vmatpush.bf16.msra.mxu0 %v3826
    %4169 = vmatmul.bf16.gmra.mxu0 %v3951
    %v4170 = vpop.f32.mrf.mxu0
    %v4171 = vadd.f32 %v3541, %v4170
    %v4172 = vpop.f32.mrf.mxu0
    %4173 = vdwg.mxu0
    %4174 = vmatpush.bf16.msra.mxu0 0
    %4175 = vmatpush.bf16.msra.mxu0 0
    %4176 = vmatpush.bf16.msra.mxu0 0
    %4177 = vmatpush.bf16.msra.mxu0 0
    %4178 = vmatpush.bf16.msra.mxu0 0
    %4179 = vmatpush.bf16.msra.mxu0 0
    %4180 = vmatpush.bf16.msra.mxu0 %v3862
    %4181 = vmatpush.bf16.msra.mxu0 %v3827
    %4182 = vmatmul.bf16.gmra.mxu0 %v3951
    %v4183 = vpop.f32.mrf.mxu0
    %v4184 = vadd.f32 %v3542, %v4183
    %v4185 = vpop.f32.mrf.mxu0
    %4186 = vdwg.mxu0
    %4187 = vmatpush.bf16.msra.mxu0 0
    %4188 = vmatpush.bf16.msra.mxu0 0
    %4189 = vmatpush.bf16.msra.mxu0 0
    %4190 = vmatpush.bf16.msra.mxu0 0
    %4191 = vmatpush.bf16.msra.mxu0 0
    %4192 = vmatpush.bf16.msra.mxu0 0
    %4193 = vmatpush.bf16.msra.mxu0 %v3863
    %4194 = vmatpush.bf16.msra.mxu0 %v3828
    %4195 = vmatmul.bf16.gmra.mxu0 %v3951
    %v4196 = vpop.f32.mrf.mxu0
    %v4197 = vadd.f32 %v3543, %v4196
    %v4198 = vpop.f32.mrf.mxu0
    %4199 = vdwg.mxu0
    %4200 = vmatpush.bf16.msra.mxu0 0
    %4201 = vmatpush.bf16.msra.mxu0 0
    %4202 = vmatpush.bf16.msra.mxu0 0
    %4203 = vmatpush.bf16.msra.mxu0 0
    %4204 = vmatpush.bf16.msra.mxu0 0
    %4205 = vmatpush.bf16.msra.mxu0 0
    %4206 = vmatpush.bf16.msra.mxu0 %v3864
    %4207 = vmatpush.bf16.msra.mxu0 %v3829
    %4208 = vmatmul.bf16.gmra.mxu0 %v3951
    %v4209 = vpop.f32.mrf.mxu0
    %v4210 = vadd.f32 %v3544, %v4209
    %v4211 = vpop.f32.mrf.mxu0
    %4212 = vdwg.mxu0
    %4213 = vmatpush.bf16.msra.mxu0 0
    %4214 = vmatpush.bf16.msra.mxu0 0
    %4215 = vmatpush.bf16.msra.mxu0 0
    %4216 = vmatpush.bf16.msra.mxu0 0
    %4217 = vmatpush.bf16.msra.mxu0 0
    %4218 = vmatpush.bf16.msra.mxu0 0
    %4219 = vmatpush.bf16.msra.mxu0 %v3865
    %4220 = vmatpush.bf16.msra.mxu0 %v3830
    %4221 = vmatmul.bf16.gmra.mxu0 %v3951
    %v4222 = vpop.f32.mrf.mxu0
    %v4223 = vadd.f32 %v3545, %v4222
    %v4224 = vpop.f32.mrf.mxu0
    %4225 = vdwg.mxu0
    %4226 = vmatpush.bf16.msra.mxu0 0
    %4227 = vmatpush.bf16.msra.mxu0 0
    %4228 = vmatpush.bf16.msra.mxu0 0
    %4229 = vmatpush.bf16.msra.mxu0 0
    %4230 = vmatpush.bf16.msra.mxu0 0
    %4231 = vmatpush.bf16.msra.mxu0 0
    %4232 = vmatpush.bf16.msra.mxu0 %v3866
    %4233 = vmatpush.bf16.msra.mxu0 %v3831
    %4234 = vmatmul.bf16.gmra.mxu0 %v3951
    %v4235 = vpop.f32.mrf.mxu0
    %v4236 = vadd.f32 %v3546, %v4235
    %v4237 = vpop.f32.mrf.mxu0
    %4238 = vdwg.mxu0
    %4239 = vmatpush.bf16.msra.mxu0 0
    %4240 = vmatpush.bf16.msra.mxu0 0
    %4241 = vmatpush.bf16.msra.mxu0 0
    %4242 = vmatpush.bf16.msra.mxu0 0
    %4243 = vmatpush.bf16.msra.mxu0 0
    %4244 = vmatpush.bf16.msra.mxu0 0
    %4245 = vmatpush.bf16.msra.mxu0 %v3867
    %4246 = vmatpush.bf16.msra.mxu0 %v3832
    %4247 = vmatmul.bf16.gmra.mxu0 %v3951
    %v4248 = vpop.f32.mrf.mxu0
    %v4249 = vadd.f32 %v3547, %v4248
    %v4250 = vpop.f32.mrf.mxu0
    %4251 = vdwg.mxu0
    %4252 = vmatpush.bf16.msra.mxu0 0
    %4253 = vmatpush.bf16.msra.mxu0 0
    %4254 = vmatpush.bf16.msra.mxu0 0
    %4255 = vmatpush.bf16.msra.mxu0 0
    %4256 = vmatpush.bf16.msra.mxu0 0
    %4257 = vmatpush.bf16.msra.mxu0 0
    %4258 = vmatpush.bf16.msra.mxu0 %v3868
    %4259 = vmatpush.bf16.msra.mxu0 %v3833
    %4260 = vmatmul.bf16.gmra.mxu0 %v3951
    %v4261 = vpop.f32.mrf.mxu0
    %v4262 = vadd.f32 %v3548, %v4261
    %v4263 = vpop.f32.mrf.mxu0
    %4264 = vdwg.mxu0
    %4265 = vmatpush.bf16.msra.mxu0 0
    %4266 = vmatpush.bf16.msra.mxu0 0
    %4267 = vmatpush.bf16.msra.mxu0 0
    %4268 = vmatpush.bf16.msra.mxu0 0
    %4269 = vmatpush.bf16.msra.mxu0 0
    %4270 = vmatpush.bf16.msra.mxu0 0
    %4271 = vmatpush.bf16.msra.mxu0 %v3869
    %4272 = vmatpush.bf16.msra.mxu0 %v3834
    %4273 = vmatmul.bf16.gmra.mxu0 %v3951
    %v4274 = vpop.f32.mrf.mxu0
    %v4275 = vadd.f32 %v3549, %v4274
    %v4276 = vpop.f32.mrf.mxu0
    %4277 = vdwg.mxu0
    %4278 = vmatpush.bf16.msra.mxu0 0
    %4279 = vmatpush.bf16.msra.mxu0 0
    %4280 = vmatpush.bf16.msra.mxu0 0
    %4281 = vmatpush.bf16.msra.mxu0 0
    %4282 = vmatpush.bf16.msra.mxu0 0
    %4283 = vmatpush.bf16.msra.mxu0 0
    %4284 = vmatpush.bf16.msra.mxu0 %v3870
    %4285 = vmatpush.bf16.msra.mxu0 %v3835
    %4286 = vmatmul.bf16.gmra.mxu0 %v3951
    %v4287 = vpop.f32.mrf.mxu0
    %v4288 = vadd.f32 %v3550, %v4287
    %v4289 = vpop.f32.mrf.mxu0
    %4290 = vdwg.mxu0
    %4291 = vmatpush.bf16.msra.mxu0 0
    %4292 = vmatpush.bf16.msra.mxu0 0
    %4293 = vmatpush.bf16.msra.mxu0 0
    %4294 = vmatpush.bf16.msra.mxu0 0
    %4295 = vmatpush.bf16.msra.mxu0 0
    %4296 = vmatpush.bf16.msra.mxu0 0
    %4297 = vmatpush.bf16.msra.mxu0 %v3871
    %4298 = vmatpush.bf16.msra.mxu0 %v3836
    %4299 = vmatmul.bf16.gmra.mxu0 %v3951
    %v4300 = vpop.f32.mrf.mxu0
    %v4301 = vadd.f32 %v3551, %v4300
    %v4302 = vpop.f32.mrf.mxu0
    %4303 = vdwg.mxu0
    %4304 = vmatpush.bf16.msra.mxu0 0
    %4305 = vmatpush.bf16.msra.mxu0 0
    %4306 = vmatpush.bf16.msra.mxu0 0
    %4307 = vmatpush.bf16.msra.mxu0 0
    %4308 = vmatpush.bf16.msra.mxu0 0
    %4309 = vmatpush.bf16.msra.mxu0 0
    %4310 = vmatpush.bf16.msra.mxu0 %v3872
    %4311 = vmatpush.bf16.msra.mxu0 %v3837
    %4312 = vmatmul.bf16.gmra.mxu0 %v3951
    %v4313 = vpop.f32.mrf.mxu0
    %v4314 = vadd.f32 %v3552, %v4313
    %v4315 = vpop.f32.mrf.mxu0
    %4316 = vdwg.mxu0
    %4317 = vmatpush.bf16.msra.mxu0 0
    %4318 = vmatpush.bf16.msra.mxu0 0
    %4319 = vmatpush.bf16.msra.mxu0 0
    %4320 = vmatpush.bf16.msra.mxu0 0
    %4321 = vmatpush.bf16.msra.mxu0 0
    %4322 = vmatpush.bf16.msra.mxu0 0
    %4323 = vmatpush.bf16.msra.mxu0 %v3873
    %4324 = vmatpush.bf16.msra.mxu0 %v3838
    %4325 = vmatmul.bf16.gmra.mxu0 %v3951
    %v4326 = vpop.f32.mrf.mxu0
    %v4327 = vadd.f32 %v3553, %v4326
    %v4328 = vpop.f32.mrf.mxu0
    %4329 = vdwg.mxu0
    %4330 = vmatpush.bf16.msra.mxu0 0
    %4331 = vmatpush.bf16.msra.mxu0 0
    %4332 = vmatpush.bf16.msra.mxu0 0
    %4333 = vmatpush.bf16.msra.mxu0 0
    %4334 = vmatpush.bf16.msra.mxu0 0
    %4335 = vmatpush.bf16.msra.mxu0 0
    %4336 = vmatpush.bf16.msra.mxu0 %v3874
    %4337 = vmatpush.bf16.msra.mxu0 %v3839
    %4338 = vmatmul.bf16.gmra.mxu0 %v3951
    %v4339 = vpop.f32.mrf.mxu0
    %v4340 = vadd.f32 %v3554, %v4339
    %v4341 = vpop.f32.mrf.mxu0
    %4342 = vdwg.mxu0
    %4343 = vmatpush.bf16.msra.mxu0 0
    %4344 = vmatpush.bf16.msra.mxu0 0
    %4345 = vmatpush.bf16.msra.mxu0 0
    %4346 = vmatpush.bf16.msra.mxu0 0
    %4347 = vmatpush.bf16.msra.mxu0 0
    %4348 = vmatpush.bf16.msra.mxu0 0
    %4349 = vmatpush.bf16.msra.mxu0 %v3875
    %4350 = vmatpush.bf16.msra.mxu0 %v3840
    %4351 = vmatmul.bf16.gmra.mxu0 %v3951
    %v4352 = vpop.f32.mrf.mxu0
    %v4353 = vadd.f32 %v3555, %v4352
    %v4354 = vpop.f32.mrf.mxu0
    %4355 = vdwg.mxu0
    %4356 = vmatpush.bf16.msra.mxu0 0
    %4357 = vmatpush.bf16.msra.mxu0 0
    %4358 = vmatpush.bf16.msra.mxu0 0
    %4359 = vmatpush.bf16.msra.mxu0 0
    %4360 = vmatpush.bf16.msra.mxu0 0
    %4361 = vmatpush.bf16.msra.mxu0 0
    %4362 = vmatpush.bf16.msra.mxu0 %v3876
    %4363 = vmatpush.bf16.msra.mxu0 %v3841
    %4364 = vmatmul.bf16.gmra.mxu0 %v3951
    %v4365 = vpop.f32.mrf.mxu0
    %v4366 = vadd.f32 %v3556, %v4365
    %v4367 = vpop.f32.mrf.mxu0
    %4368 = vdwg.mxu0
    %4369 = vmatpush.bf16.msra.mxu0 0
    %4370 = vmatpush.bf16.msra.mxu0 0
    %4371 = vmatpush.bf16.msra.mxu0 0
    %4372 = vmatpush.bf16.msra.mxu0 0
    %4373 = vmatpush.bf16.msra.mxu0 0
    %4374 = vmatpush.bf16.msra.mxu0 0
    %4375 = vmatpush.bf16.msra.mxu0 %v3877
    %4376 = vmatpush.bf16.msra.mxu0 %v3842
    %4377 = vmatmul.bf16.gmra.mxu0 %v3951
    %v4378 = vpop.f32.mrf.mxu0
    %v4379 = vadd.f32 %v3557, %v4378
    %v4380 = vpop.f32.mrf.mxu0
    %4381 = vdwg.mxu0
    %4382 = vmatpush.bf16.msra.mxu0 0
    %4383 = vmatpush.bf16.msra.mxu0 0
    %4384 = vmatpush.bf16.msra.mxu0 0
    %4385 = vmatpush.bf16.msra.mxu0 0
    %4386 = vmatpush.bf16.msra.mxu0 0
    %4387 = vmatpush.bf16.msra.mxu0 0
    %4388 = vmatpush.bf16.msra.mxu0 %v3878
    %4389 = vmatpush.bf16.msra.mxu0 %v3843
    %4390 = vmatmul.bf16.gmra.mxu0 %v3951
    %v4391 = vpop.f32.mrf.mxu0
    %v4392 = vadd.f32 %v3558, %v4391
    %v4393 = vpop.f32.mrf.mxu0
    %4394 = vdwg.mxu0
    %4395 = vmatpush.bf16.msra.mxu0 0
    %4396 = vmatpush.bf16.msra.mxu0 0
    %4397 = vmatpush.bf16.msra.mxu0 0
    %4398 = vmatpush.bf16.msra.mxu0 0
    %4399 = vmatpush.bf16.msra.mxu0 0
    %4400 = vmatpush.bf16.msra.mxu0 0
    %4401 = vmatpush.bf16.msra.mxu0 %v3879
    %4402 = vmatpush.bf16.msra.mxu0 %v3844
    %4403 = vmatmul.bf16.gmra.mxu0 %v3951
    %v4404 = vpop.f32.mrf.mxu0
    %v4405 = vadd.f32 %v3559, %v4404
    %v4406 = vpop.f32.mrf.mxu0
    %4407 = vdwg.mxu0
    %4408 = vst [vmem:[%s9] sm:$0xff] %v3963
    %4409 = vst [vmem:[%s9 + $0x8] sm:$0xff] %v3976
    %4410 = vst [vmem:[%s9 + $0x10] sm:$0xff] %v3989
    %4411 = vst [vmem:[%s9 + $0x18] sm:$0xff] %v4002
    %4412 = vst [vmem:[%s9 + $0x20] sm:$0xff] %v4015
    %4413 = vst [vmem:[%s9 + $0x28] sm:$0xff] %v4028
    %4414 = vst [vmem:[%s9 + $0x30] sm:$0xff] %v4041
    %4415 = vst [vmem:[%s9 + $0x38] sm:$0xff] %v4054
    %4416 = vst [vmem:[%s9 + $0x40] sm:$0xff] %v4067
    %4417 = vst [vmem:[%s9 + $0x48] sm:$0xff] %v4080
    %4418 = vst [vmem:[%s9 + $0x50] sm:$0xff] %v4093
    %4419 = vst [vmem:[%s9 + $0x58] sm:$0xff] %v4106
    %4420 = vst [vmem:[%s9 + $0x60] sm:$0xff] %v4119
    %4421 = vst [vmem:[%s9 + $0x68] sm:$0xff] %v4132
    %4422 = vst [vmem:[%s9 + $0x70] sm:$0xff] %v4145
    %4423 = vst [vmem:[%s9 + $0x78] sm:$0xff] %v4158
    %4424 = vst [vmem:[%s9 + $0x80] sm:$0xff] %v4171
    %4425 = vst [vmem:[%s9 + $0x88] sm:$0xff] %v4184
    %4426 = vst [vmem:[%s9 + $0x90] sm:$0xff] %v4197
    %4427 = vst [vmem:[%s9 + $0x98] sm:$0xff] %v4210
    %4428 = vst [vmem:[%s9 + $0xa0] sm:$0xff] %v4223
    %4429 = vst [vmem:[%s9 + $0xa8] sm:$0xff] %v4236
    %4430 = vst [vmem:[%s9 + $0xb0] sm:$0xff] %v4249
    %4431 = vst [vmem:[%s9 + $0xb8] sm:$0xff] %v4262
    %4432 = vst [vmem:[%s9 + $0xc0] sm:$0xff] %v4275
    %4433 = vst [vmem:[%s9 + $0xc8] sm:$0xff] %v4288
    %4434 = vst [vmem:[%s9 + $0xd0] sm:$0xff] %v4301
    %4435 = vst [vmem:[%s9 + $0xd8] sm:$0xff] %v4314
    %4436 = vst [vmem:[%s9 + $0xe0] sm:$0xff] %v4327
    %4437 = vst [vmem:[%s9 + $0xe8] sm:$0xff] %v4340
    %4438 = vst [vmem:[%s9 + $0xf0] sm:$0xff] %v4353
    %4439 = vst [vmem:[%s9 + $0xf8] sm:$0xff] %v4366
    %4440 = vst [vmem:[%s9 + $0x100] sm:$0xff] %v4379
    %4441 = vst [vmem:[%s9 + $0x108] sm:$0xff] %v4392
    %vm4442 = vcmask 31744
    %4443 = vst.msk [vmem:[%s9 + $0x110] sm:$0xff] %vm4442, %v4405
    %v4444 = vld [vmem:[#allocation7 + $0x30] sm:$0x3]
    %v4445 = vld [vmem:[#allocation6] sm:$0xff]
    %v4446 = vld [vmem:[#allocation6 + $0x14] sm:$0xff]
    %v4447 = vld [vmem:[#allocation6 + $0x28] sm:$0xff]
    %v4448 = vld [vmem:[#allocation6 + $0x3c] sm:$0xff]
    %v4449 = vld [vmem:[#allocation6 + $0x50] sm:$0xff]
    %v4450 = vld [vmem:[#allocation6 + $0x64] sm:$0xff]
    %v4451 = vld [vmem:[#allocation6 + $0x78] sm:$0xff]
    %v4452 = vld [vmem:[#allocation6 + $0x8c] sm:$0xff]
    %v4453 = vld [vmem:[#allocation7 + $0x32] sm:$0x3]
    %v4455 = vperm.slane %v4453, 0
    %v4456 = vperm.slane %v4453, 1
    %4459 = vrot.lane.b32.xlu0 %v3336, 64
    %v4460 = vpop.permute.xlu0 %4459
    %v4469 = vunpack.c.l.b16 %v4445
    %v4470 = vunpack.c.h.b16 %v4445
    %v4471 = vunpack.c.l.b16 %v4446
    %v4472 = vunpack.c.h.b16 %v4446
    %v4473 = vunpack.c.l.b16 %v4447
    %v4474 = vunpack.c.h.b16 %v4447
    %v4475 = vunpack.c.l.b16 %v4448
    %v4476 = vunpack.c.h.b16 %v4448
    %v4477 = vunpack.c.l.b16 %v4449
    %v4478 = vunpack.c.h.b16 %v4449
    %v4479 = vunpack.c.l.b16 %v4450
    %v4480 = vunpack.c.h.b16 %v4450
    %v4481 = vunpack.c.l.b16 %v4451
    %v4482 = vunpack.c.h.b16 %v4451
    %v4483 = vunpack.c.l.b16 %v4452
    %v4484 = vunpack.c.h.b16 %v4452
    %v4485 = vpack.c.b16 %v4471, %v4469
    %v4486 = vpack.c.b16 %v4472, %v4470
    %v4487 = vpack.c.b16 %v4475, %v4473
    %v4488 = vpack.c.b16 %v4476, %v4474
    %v4489 = vpack.c.b16 %v4479, %v4477
    %v4490 = vpack.c.b16 %v4480, %v4478
    %v4491 = vpack.c.b16 %v4483, %v4481
    %v4492 = vpack.c.b16 %v4484, %v4482
    %vm4501 = vcmask 523264
    %v4503 = vsel %vm4501, %v4460, 0
    %4505 = vmatpush.bf16.msra.mxu0 0
    %4506 = vmatpush.bf16.msra.mxu0 0
    %4507 = vmatpush.bf16.msra.mxu0 0
    %4508 = vmatpush.bf16.msra.mxu0 0
    %4509 = vmatpush.bf16.msra.mxu0 %v4491
    %4510 = vmatpush.bf16.msra.mxu0 %v4489
    %4511 = vmatpush.bf16.msra.mxu0 %v4487
    %4512 = vmatpush.bf16.msra.mxu0 %v4485
    %4513 = vmatmul.bf16.gmra.mxu0 %v4503
    %v4514 = vpop.f32.mrf.mxu0
    %v4515 = vadd.f32 %v4455, %v4514
    %v4516 = vpop.f32.mrf.mxu0
    %4517 = vdwg.mxu0
    %4518 = vmatpush.bf16.msra.mxu0 0
    %4519 = vmatpush.bf16.msra.mxu0 0
    %4520 = vmatpush.bf16.msra.mxu0 0
    %4521 = vmatpush.bf16.msra.mxu0 0
    %4522 = vmatpush.bf16.msra.mxu0 %v4492
    %4523 = vmatpush.bf16.msra.mxu0 %v4490
    %4524 = vmatpush.bf16.msra.mxu0 %v4488
    %4525 = vmatpush.bf16.msra.mxu0 %v4486
    %4526 = vmatmul.bf16.gmra.mxu0 %v4503
    %v4527 = vpop.f32.mrf.mxu0
    %v4528 = vadd.f32 %v4456, %v4527
    %v4529 = vpop.f32.mrf.mxu0
    %4530 = vdwg.mxu0
    %v4531 = vxor.u32 %v4515, 2147483648
    %v4532 = vxor.u32 %v4528, 2147483648
    %v4533 = vmul.f32 %v4531, 1.442695
    %v4534 = vpow.pop %v4533
    %v4535 = vmul.f32 %v4532, 1.442695
    %v4536 = vpow.pop %v4535
    %v4537 = vadd.f32 %v4534, 1.0
    %v4538 = vadd.f32 %v4536, 1.0
    %v4539 = vrcp.pop %v4537
    %v4540 = vmul.f32 %v4537, %v4539
    %v4541 = vsub.f32 1.0, %v4540
    %v4542 = vmul.f32 %v4539, %v4541
    %v4543 = vadd.f32 %v4539, %v4542
    %vm4544 = vweird.f32 %v4537
    %vm4545 = vweird.f32 %v4539
    %vm4546 = vmor %vm4544, %vm4545
    %v4547 = vsel %vm4546, %v4539, %v4543
    %v4548 = vand.u32 2147483647, %v4537
    %vm4549 = vcmp.eq.f32.partialorder %v4548, 8.507059e+37
    %v4550 = vand.u32 %v4537, 2147483648
    %v4551 = vor.u32 1.1754944e-38, %v4550
    %v4552 = vsel %vm4549, %v4551, %v4547
    %v4553 = vmul.f32 1.0, %v4552
    %v4554 = vrcp.pop %v4538
    %v4555 = vmul.f32 %v4538, %v4554
    %v4556 = vsub.f32 1.0, %v4555
    %v4557 = vmul.f32 %v4554, %v4556
    %v4558 = vadd.f32 %v4554, %v4557
    %vm4559 = vweird.f32 %v4538
    %vm4560 = vweird.f32 %v4554
    %vm4561 = vmor %vm4559, %vm4560
    %v4562 = vsel %vm4561, %v4554, %v4558
    %v4563 = vand.u32 2147483647, %v4538
    %vm4564 = vcmp.eq.f32.partialorder %v4563, 8.507059e+37
    %v4565 = vand.u32 %v4538, 2147483648
    %v4566 = vor.u32 1.1754944e-38, %v4565
    %v4567 = vsel %vm4564, %v4566, %v4562
    %v4568 = vmul.f32 1.0, %v4567
    %v4570 = vperm.slane %v4444, 0
    %v4571 = vperm.slane %v4444, 1
    %v4574 = vmul.f32 %v4570, %v4553
    %v4575 = vmul.f32 %v4571, %v4568
    %v4576 = vlaneseq
    %v4577 = vand.u32 %v4576, 127
    %vm4578 = vcmp.lt.s32.totalorder %v4577, 32
    %v4579 = vld [vmem:[#allocation6 + $0x8] sm:$0xf]
    %v4580 = vld [vmem:[#allocation6 + $0x1c] sm:$0xf]
    %v4581 = vld [vmem:[#allocation6 + $0x30] sm:$0xf]
    %v4582 = vld [vmem:[#allocation6 + $0x44] sm:$0xf]
    %v4583 = vld [vmem:[#allocation6 + $0x58] sm:$0xf]
    %v4584 = vld [vmem:[#allocation6 + $0x6c] sm:$0xf]
    %v4585 = vld [vmem:[#allocation6 + $0x80] sm:$0xf]
    %v4586 = vld [vmem:[#allocation6 + $0x94] sm:$0xf]
    %v4587 = vpack.c.bf16 %v3326, %v3326
    %v4588 = vld [vmem:[%s6] sm:$0xf]
    %v4589 = vld [vmem:[%s6 + $0x4] sm:$0xf]
    %v4590 = vld [vmem:[%s6 + $0x8] sm:$0xf]
    %v4591 = vld [vmem:[%s6 + $0xc] sm:$0xf]
    %v4592 = vld [vmem:[%s6 + $0x10] sm:$0xf]
    %v4593 = vld [vmem:[%s6 + $0x14] sm:$0xf]
    %v4594 = vld [vmem:[%s6 + $0x18] sm:$0xf]
    %v4595 = vld [vmem:[%s6 + $0x1c] sm:$0xf]
    %v4596 = vld [vmem:[%s6 + $0x20] sm:$0xf]
    %v4597 = vld [vmem:[%s6 + $0x24] sm:$0x1]
    %v4608 = vunpack.c.l.b16 %v4588
    %v4609 = vunpack.c.l.b16 %v4589
    %v4610 = vunpack.c.l.b16 %v4590
    %v4611 = vunpack.c.l.b16 %v4591
    %v4612 = vunpack.c.l.b16 %v4592
    %v4613 = vunpack.c.l.b16 %v4593
    %v4614 = vunpack.c.l.b16 %v4594
    %v4615 = vunpack.c.l.b16 %v4595
    %v4616 = vunpack.c.l.b16 %v4596
    %v4617 = vunpack.c.l.b16 %v4597
    %v4618 = vpack.c.b16 %v4609, %v4608
    %v4619 = vpack.c.b16 %v4611, %v4610
    %v4620 = vpack.c.b16 %v4613, %v4612
    %v4621 = vpack.c.b16 %v4615, %v4614
    %v4622 = vpack.c.b16 %v4617, %v4616
    %vm4627 = vcmask 596992
    %v4629 = vsel %vm4627, %v125, 0
    %vm4631 = vcmask 1044480
    %v4632 = vsel %vm2460, 4294967295, 65535
    %v4633 = vsel %vm4631, %v4632, 0
    %v4635 = vand.u32 %v4622, %v4633
    %4637 = vmatpush.bf16.msra.mxu0 0
    %4638 = vmatpush.bf16.msra.mxu0 0
    %4639 = vmatpush.bf16.msra.mxu0 0
    %4640 = vmatpush.bf16.msra.mxu0 %v4635
    %4641 = vmatpush.bf16.msra.mxu0 %v4621
    %4642 = vmatpush.bf16.msra.mxu0 %v4620
    %4643 = vmatpush.bf16.msra.mxu0 %v4619
    %4644 = vmatpush.bf16.msra.mxu0 %v4618
    %4645 = vmatmul.bf16.gmra.mxu0 %v4629
    %v4646 = vpop.f32.mrf.mxu0
    %v4647 = vadd.f32 0.0, %v4646
    %v4648 = vpop.f32.mrf.mxu0
    %4649 = vdwg.mxu0
    %v4658 = vunpack.c.l.b16 %v4579
    %v4659 = vunpack.c.l.b16 %v4580
    %v4660 = vunpack.c.l.b16 %v4581
    %v4661 = vunpack.c.l.b16 %v4582
    %v4662 = vunpack.c.l.b16 %v4583
    %v4663 = vunpack.c.l.b16 %v4584
    %v4664 = vunpack.c.l.b16 %v4585
    %v4665 = vunpack.c.l.b16 %v4586
    %v4666 = vpack.c.b16 %v4659, %v4658
    %v4667 = vpack.c.b16 %v4661, %v4660
    %v4668 = vpack.c.b16 %v4663, %v4662
    %v4669 = vpack.c.b16 %v4665, %v4664
    %v4675 = vsel %vm4501, %v4587, 0
    %4677 = vmatpush.bf16.msra.mxu0 0
    %4678 = vmatpush.bf16.msra.mxu0 0
    %4679 = vmatpush.bf16.msra.mxu0 0
    %4680 = vmatpush.bf16.msra.mxu0 0
    %4681 = vmatpush.bf16.msra.mxu0 %v4669
    %4682 = vmatpush.bf16.msra.mxu0 %v4668
    %4683 = vmatpush.bf16.msra.mxu0 %v4667
    %4684 = vmatpush.bf16.msra.mxu0 %v4666
    %4685 = vmatmul.bf16.gmra.mxu0 %v4675
    %v4686 = vpop.f32.mrf.mxu0
    %v4687 = vadd.f32 %v4647, %v4686
    %v4688 = vpop.f32.mrf.mxu0
    %4689 = vdwg.mxu0
    %v4690 = vld [vmem:[#allocation7 + $0x34] sm:$0x1]
    %v4692 = vperm.slane %v4690, 0
    %v4694 = vadd.f32 %v4687, %v4692
    %v4695 = vtanh.pop %v4694
    %vm4696 = vcmp.gt.f32.partialorder %v4694, 0.0
    %v4697 = vmul.f32 %v4694, 0.01
    %v4698 = vsel %vm4696, %v4694, %v4697
    %v4699 = vsel %vm4578, 1, 0
    %vm4700 = vcmp.eq.s32.totalorder %v4699, 1
    %v4701 = vsel %vm4700, %v4695, %v4698
    %v4702 = vld [vmem:[#allocation6 + $0xc] sm:$0xf]
    %v4703 = vld [vmem:[#allocation6 + $0x20] sm:$0xf]
    %v4704 = vld [vmem:[#allocation6 + $0x34] sm:$0xf]
    %v4705 = vld [vmem:[#allocation6 + $0x48] sm:$0xf]
    %v4706 = vld [vmem:[#allocation6 + $0x5c] sm:$0xf]
    %v4707 = vld [vmem:[#allocation6 + $0x70] sm:$0xf]
    %v4708 = vld [vmem:[#allocation6 + $0x84] sm:$0xf]
    %v4709 = vld [vmem:[#allocation6 + $0x98] sm:$0xf]
    %v4710 = vpack.c.bf16 %v4701, %v4701
    %v4711 = vld [vmem:[#allocation7 + $0x35] sm:$0x1]
    %v4713 = vperm.slane %v4711, 0
    %v4723 = vunpack.c.l.b16 %v4702
    %v4724 = vunpack.c.l.b16 %v4703
    %v4725 = vunpack.c.l.b16 %v4704
    %v4726 = vunpack.c.l.b16 %v4705
    %v4727 = vunpack.c.l.b16 %v4706
    %v4728 = vunpack.c.l.b16 %v4707
    %v4729 = vunpack.c.l.b16 %v4708
    %v4730 = vunpack.c.l.b16 %v4709
    %v4731 = vpack.c.b16 %v4724, %v4723
    %v4732 = vpack.c.b16 %v4726, %v4725
    %v4733 = vpack.c.b16 %v4728, %v4727
    %v4734 = vpack.c.b16 %v4730, %v4729
    %v4740 = vsel %vm4501, %v4710, 0
    %4742 = vmatpush.bf16.msra.mxu0 0
    %4743 = vmatpush.bf16.msra.mxu0 0
    %4744 = vmatpush.bf16.msra.mxu0 0
    %4745 = vmatpush.bf16.msra.mxu0 0
    %4746 = vmatpush.bf16.msra.mxu0 %v4734
    %4747 = vmatpush.bf16.msra.mxu0 %v4733
    %4748 = vmatpush.bf16.msra.mxu0 %v4732
    %4749 = vmatpush.bf16.msra.mxu0 %v4731
    %4750 = vmatmul.bf16.gmra.mxu0 %v4740
    %v4751 = vpop.f32.mrf.mxu0
    %v4752 = vadd.f32 %v4713, %v4751
    %v4753 = vpop.f32.mrf.mxu0
    %4754 = vdwg.mxu0
    %v4755 = vsel %vm2919, %v4752, 0.0
    %4756 = vadd.xlane.f32.xlu0 %v4755
    %v4757 = vpop.xlane.xlu0 %4756
    %v4758 = vmul.f32 %v4757, %v2929
    %4760 = vrot.lane.b32.xlu0 %v4752, 96
    %v4761 = vpop.permute.xlu0 %4760
    %v4763 = vsel %vm2919, %v4761, 0.0
    %4764 = vadd.xlane.f32.xlu0 %v4763
    %v4765 = vpop.xlane.xlu0 %4764
    %v4766 = vmul.f32 %v4765, %v2929
    %v4767 = vsel %vm4700, %v4758, %v4766
    %v4768 = vsub.f32 %v4752, %v4767
    %v4769 = vmul.f32 %v4768, %v4768
    %v4770 = vsel %vm2919, %v4769, 0.0
    %4771 = vadd.xlane.f32.xlu0 %v4770
    %v4772 = vpop.xlane.xlu0 %4771
    %v4773 = vmul.f32 %v4772, %v2929
    %4775 = vrot.lane.b32.xlu0 %v4769, 96
    %v4776 = vpop.permute.xlu0 %4775
    %v4778 = vsel %vm2919, %v4776, 0.0
    %4779 = vadd.xlane.f32.xlu0 %v4778
    %v4780 = vpop.xlane.xlu0 %4779
    %v4781 = vmul.f32 %v4780, %v2929
    %v4782 = vsel %vm4700, %v4773, %v4781
    %v4783 = vadd.f32 %v4782, 1e-05
    %v4784 = vrsqrt.pop %v4783
    %v4785 = vmul.f32 %v4784, %v4783
    %v4786 = vmul.f32 %v4785, %v4784
    %v4787 = vmul.f32 0.5, %v4786
    %v4788 = vsub.f32 1.5, %v4787
    %v4789 = vmul.f32 %v4784, %v4788
    %vm4790 = vweird.f32 %v4783
    %vm4791 = vweird.f32 %v4784
    %vm4792 = vmor %vm4790, %vm4791
    %v4793 = vsel %vm4792, %v4784, %v4789
    %v4794 = vmul.f32 %v4768, %v4793
    %v4796 = vperm.slane %v95, 0
    %v4798 = vmul.f32 %v4794, %v4796
    %v4800 = vperm.slane %v96, 0
    %v4802 = vadd.f32 %v4798, %v4800
    %v4803 = vtanh.pop %v4802
    %vm4804 = vcmp.gt.f32.partialorder %v4802, 0.0
    %v4805 = vmul.f32 %v4802, 0.01
    %v4806 = vsel %vm4804, %v4802, %v4805
    %v4807 = vsel %vm4700, %v4803, %v4806
    %v4808 = vld [vmem:[#allocation6 + $0x10] sm:$0xf]
    %v4809 = vld [vmem:[#allocation6 + $0x24] sm:$0xf]
    %v4810 = vld [vmem:[#allocation6 + $0x38] sm:$0xf]
    %v4811 = vld [vmem:[#allocation6 + $0x4c] sm:$0xf]
    %v4812 = vld [vmem:[#allocation6 + $0x60] sm:$0xf]
    %v4813 = vld [vmem:[#allocation6 + $0x74] sm:$0xf]
    %v4814 = vld [vmem:[#allocation6 + $0x88] sm:$0xf]
    %v4815 = vld [vmem:[#allocation6 + $0x9c] sm:$0xf]
    %v4816 = vpack.c.bf16 %v4807, %v4807
    %v4817 = vld [vmem:[#allocation7 + $0x38] sm:$0x1]
    %v4819 = vperm.slane %v4817, 0
    %v4829 = vunpack.c.l.b16 %v4808
    %v4830 = vunpack.c.l.b16 %v4809
    %v4831 = vunpack.c.l.b16 %v4810
    %v4832 = vunpack.c.l.b16 %v4811
    %v4833 = vunpack.c.l.b16 %v4812
    %v4834 = vunpack.c.l.b16 %v4813
    %v4835 = vunpack.c.l.b16 %v4814
    %v4836 = vunpack.c.l.b16 %v4815
    %v4837 = vpack.c.b16 %v4830, %v4829
    %v4838 = vpack.c.b16 %v4832, %v4831
    %v4839 = vpack.c.b16 %v4834, %v4833
    %v4840 = vpack.c.b16 %v4836, %v4835
    %v4846 = vsel %vm4501, %v4816, 0
    %4848 = vmatpush.bf16.msra.mxu0 0
    %4849 = vmatpush.bf16.msra.mxu0 0
    %4850 = vmatpush.bf16.msra.mxu0 0
    %4851 = vmatpush.bf16.msra.mxu0 0
    %4852 = vmatpush.bf16.msra.mxu0 %v4840
    %4853 = vmatpush.bf16.msra.mxu0 %v4839
    %4854 = vmatpush.bf16.msra.mxu0 %v4838
    %4855 = vmatpush.bf16.msra.mxu0 %v4837
    %4856 = vmatmul.bf16.gmra.mxu0 %v4846
    %v4857 = vpop.f32.mrf.mxu0
    %v4858 = vadd.f32 %v4819, %v4857
    %v4859 = vpop.f32.mrf.mxu0
    %4860 = vdwg.mxu0
    %vm4861 = vcmp.lt.s32.totalorder %v4577, 2
    %v4862 = vxor.u32 %v4858, 2147483648
    %v4863 = vmul.f32 %v4862, 1.442695
    %v4864 = vpow.pop %v4863
    %v4865 = vadd.f32 %v4864, 1.0
    %v4866 = vrcp.pop %v4865
    %v4867 = vmul.f32 %v4865, %v4866
    %v4868 = vsub.f32 1.0, %v4867
    %v4869 = vmul.f32 %v4866, %v4868
    %v4870 = vadd.f32 %v4866, %v4869
    %vm4871 = vweird.f32 %v4865
    %vm4872 = vweird.f32 %v4866
    %vm4873 = vmor %vm4871, %vm4872
    %v4874 = vsel %vm4873, %v4866, %v4870
    %v4875 = vand.u32 2147483647, %v4865
    %vm4876 = vcmp.eq.f32.partialorder %v4875, 8.507059e+37
    %v4877 = vand.u32 %v4865, 2147483648
    %v4878 = vor.u32 1.1754944e-38, %v4877
    %v4879 = vsel %vm4876, %v4878, %v4874
    %v4880 = vmul.f32 1.0, %v4879
    %v4881 = vsel %vm4861, 1, 0
    %vm4882 = vcmp.eq.s32.totalorder %v4881, 1
    %v4883 = vsel %vm4882, %v4880, %v4858
    %v4884 = vld [vmem:[#allocation4 + $0xb4] sm:$0xff]
    %v4885 = vld [vmem:[#allocation4 + $0xbc] sm:$0xf]
    %v4886 = vld [vmem:[#allocation4 + $0x174] sm:$0xff]
    %v4887 = vld [vmem:[#allocation4 + $0x17c] sm:$0xf]
    %v4888 = vld [vmem:[#allocation4 + $0x234] sm:$0xff]
    %v4889 = vld [vmem:[#allocation4 + $0x23c] sm:$0xf]
    %v4890 = vld [vmem:[#allocation4 + $0x2f4] sm:$0xff]
    %v4891 = vld [vmem:[#allocation4 + $0x2fc] sm:$0xf]
    %v4892 = vld [vmem:[#allocation7 + $0x39] sm:$0x7]
    %v4894 = vperm.slane %v4892, 0
    %v4895 = vperm.slane %v4892, 1
    %v4896 = vperm.slane %v4892, 2
    %4901 = vrot.lane.b32.xlu0 %v4587, 64
    %v4902 = vpop.permute.xlu0 %4901
    %v4911 = vunpack.c.l.b16 %v4884
    %v4912 = vunpack.c.h.b16 %v4884
    %v4913 = vunpack.c.l.b16 %v4885
    %v4914 = vunpack.c.l.b16 %v4886
    %v4915 = vunpack.c.h.b16 %v4886
    %v4916 = vunpack.c.l.b16 %v4887
    %v4917 = vunpack.c.l.b16 %v4888
    %v4918 = vunpack.c.h.b16 %v4888
    %v4919 = vunpack.c.l.b16 %v4889
    %v4920 = vunpack.c.l.b16 %v4890
    %v4921 = vunpack.c.h.b16 %v4890
    %v4922 = vunpack.c.l.b16 %v4891
    %v4923 = vpack.c.b16 %v4914, %v4911
    %v4924 = vpack.c.b16 %v4915, %v4912
    %v4925 = vpack.c.b16 %v4916, %v4913
    %v4926 = vpack.c.b16 %v4920, %v4917
    %v4927 = vpack.c.b16 %v4921, %v4918
    %v4928 = vpack.c.b16 %v4922, %v4919
    %v4936 = vsel %vm2919, %v4902, 0
    %4938 = vmatpush.bf16.msra.mxu0 0
    %4939 = vmatpush.bf16.msra.mxu0 0
    %4940 = vmatpush.bf16.msra.mxu0 0
    %4941 = vmatpush.bf16.msra.mxu0 0
    %4942 = vmatpush.bf16.msra.mxu0 0
    %4943 = vmatpush.bf16.msra.mxu0 0
    %4944 = vmatpush.bf16.msra.mxu0 %v4926
    %4945 = vmatpush.bf16.msra.mxu0 %v4923
    %4946 = vmatmul.bf16.gmra.mxu0 %v4936
    %v4947 = vpop.f32.mrf.mxu0
    %v4948 = vadd.f32 %v4894, %v4947
    %v4949 = vpop.f32.mrf.mxu0
    %4950 = vdwg.mxu0
    %4951 = vmatpush.bf16.msra.mxu0 0
    %4952 = vmatpush.bf16.msra.mxu0 0
    %4953 = vmatpush.bf16.msra.mxu0 0
    %4954 = vmatpush.bf16.msra.mxu0 0
    %4955 = vmatpush.bf16.msra.mxu0 0
    %4956 = vmatpush.bf16.msra.mxu0 0
    %4957 = vmatpush.bf16.msra.mxu0 %v4927
    %4958 = vmatpush.bf16.msra.mxu0 %v4924
    %4959 = vmatmul.bf16.gmra.mxu0 %v4936
    %v4960 = vpop.f32.mrf.mxu0
    %v4961 = vadd.f32 %v4895, %v4960
    %v4962 = vpop.f32.mrf.mxu0
    %4963 = vdwg.mxu0
    %4964 = vmatpush.bf16.msra.mxu0 0
    %4965 = vmatpush.bf16.msra.mxu0 0
    %4966 = vmatpush.bf16.msra.mxu0 0
    %4967 = vmatpush.bf16.msra.mxu0 0
    %4968 = vmatpush.bf16.msra.mxu0 0
    %4969 = vmatpush.bf16.msra.mxu0 0
    %4970 = vmatpush.bf16.msra.mxu0 %v4928
    %4971 = vmatpush.bf16.msra.mxu0 %v4925
    %4972 = vmatmul.bf16.gmra.mxu0 %v4936
    %v4973 = vpop.f32.mrf.mxu0
    %v4974 = vadd.f32 %v4896, %v4973
    %v4975 = vpop.f32.mrf.mxu0
    %4976 = vdwg.mxu0
    %4977 = vst [vmem:[%s8] sm:$0xff] %v3441
    %vm4978 = vcmask 130048
    %4979 = vst.msk [vmem:[%s8 + $0x8] sm:$0xff] %vm4978, %v3442
    %4980 = vst.msk [vmem:[%s8 + $0x10] sm:$0xff] %vm2919, %v3175
    %4981 = vst [vmem:[%s8 + $0x18] sm:$0xff] %v4574
    %4982 = vst.msk [vmem:[%s8 + $0x20] sm:$0xff] %vm4442, %v4575
    %vm4983 = vcmask 64512
    %4984 = vst.msk [vmem:[%s8 + $0x28] sm:$0xff] %vm4983, %v4883
    %4985 = vst [vmem:[%s8 + $0x30] sm:$0xff] %v4948
    %4986 = vst [vmem:[%s8 + $0x38] sm:$0xff] %v4961
    %vm4987 = vcmask 998400
    %4988 = vst.msk [vmem:[%s8 + $0x40] sm:$0xff] %vm4987, %v4974
    // Predicated region
    $region50: #{osdnet_forward.1} parent=1 // pred_check
      _
    $region51: #{osdnet_forward.1} parent=1 // pred_check_branch
      %4990 = sbr.rel (0) target = $region53
    $region52: #{osdnet_forward.1} parent=1 // pred_region
      _
    $region53: #{osdnet_forward.1} parent=1 // pred_fallthru
      _
    // Predicated region
    $region54: #{osdnet_forward.1} parent=1 // pred_check
      _
    $region55: #{osdnet_forward.1} parent=1 // pred_check_branch
      %4992 = sbr.rel (0) target = $region57
    $region56: #{osdnet_forward.1} parent=1 // pred_region
      _
    $region57: #{osdnet_forward.1} parent=1 // pred_fallthru
      _
    // Predicated region
    $region58: #{osdnet_forward.1} parent=1 // pred_check
      _
    $region59: #{osdnet_forward.1} parent=1 // pred_check_branch
      %4994 = sbr.rel (0) target = $region61
    $region60: #{osdnet_forward.1} parent=1 // pred_region
      _
    $region61: #{osdnet_forward.1} parent=1 // pred_fallthru
      _
    // Predicated region
    $region62: #{osdnet_forward.1} parent=1 // pred_check
      _
    $region63: #{osdnet_forward.1} parent=1 // pred_check_branch
      %4996 = sbr.rel (0) target = $region65
    $region64: #{osdnet_forward.1} parent=1 // pred_region
      _
    $region65: #{osdnet_forward.1} parent=1 // pred_fallthru
      _
    %4997 = vsyncpa [#allocation3], 1
    %4998 = vsyncpa [#allocation5], 1
    %4999 = vsyncpa [#allocation8], 1

</llo_original>
